<compile_context>
chip_gen: v5e
topology: v5e:2x2
jax: 0.10.0
libtpu: 0.0.40
codegen_flags: <defaults>
</compile_context>

<pallas_src>
import functools

import jax
import jax.numpy as jnp
from jax.experimental import pallas as pl
from jax.experimental.pallas import tpu as pltpu

LANE = 128     # TPU lane width (last-dim alignment target)
TK = 256       # neighbor (contraction) tile for the aggregation kernel


# ------------------------------- helpers ------------------------------------

def _round_up(x, m):
    return (x + m - 1) // m * m


def _pad2(x, rows, cols):
    pr, pc = rows - x.shape[0], cols - x.shape[1]
    if pr or pc:
        x = jnp.pad(x, ((0, pr), (0, pc)))
    return x


def _choose_row_tile(n_pad):
    """Largest row tile that still leaves >= 2 row tiles (v7x megacore)."""
    for tm in (1024, 512, 256):
        if n_pad % tm == 0 and n_pad // tm >= 2:
            return tm
    for tm in (1024, 512, 256):
        if n_pad % tm == 0:
            return tm
    return 256


def _choose_col_tile(f_p):
    """Column tile for W in the projection kernel (bounds VMEM for wide W)."""
    for tn in (512, 256, 128):
        if f_p % tn == 0:
            return tn
    return f_p


# ----------------------------- Pallas kernels -------------------------------

def _project_kernel(x_ref, w_ref, dsc_ref, o_ref):
    """P_tile = d_i^{-1/2} * (X_tile @ W_coltile), emitted as bf16."""
    xw = jnp.dot(x_ref[...], w_ref[...], preferred_element_type=jnp.float32)
    o_ref[...] = (xw * dsc_ref[...]).astype(o_ref.dtype)


def _aggregate_kernel(a_ref, p_ref, dsc_ref, b_ref, o_ref, acc_ref, *,
                      apply_relu):
    """One (row_tile i, neighbor_tile k) step of Y = D^-1/2 (A @ P) + b.

    A arrives as int8 {0,1} (half the HBM bytes of bf16); it is upcast to bf16
    in vregs (VPU) right before the MXU matmul.  acc is a resident f32 VMEM
    accumulator; the epilogue applies the exact d_i^{-1/2} row scaling, bias,
    and (optionally) a fused ReLU.
    """
    k = pl.program_id(1)

    @pl.when(k == 0)
    def _():
        acc_ref[...] = jnp.zeros_like(acc_ref)

    a_bf16 = a_ref[...].astype(jnp.bfloat16)          # exact for {0,1}
    acc_ref[...] += jnp.dot(a_bf16, p_ref[...],
                            preferred_element_type=jnp.float32)

    @pl.when(k == pl.num_programs(1) - 1)
    def _():
        out = acc_ref[...] * dsc_ref[...] + b_ref[...]   # f32 vregs
        if apply_relu:
            out = jnp.maximum(out, 0.0)                  # fused ReLU epilogue
        o_ref[...] = out.astype(o_ref.dtype)


def _relu_kernel(x_ref, o_ref):
    o_ref[...] = jnp.maximum(x_ref[...], 0).astype(o_ref.dtype)


# ------------------------------ layer ops ------------------------------------

def graph_conv_padded(a_int8, d_isqrt, x_pad, w, b, *, apply_relu, out_dtype):
    """Fused GraphConv on padded operands.

    a_int8 : (n_pad, n_pad) int8 {0,1} adjacency (self-loops included).
    d_isqrt: (n_pad, 1) f32, d^{-1/2} per node (0 on padded rows).
    x_pad  : (n_pad, f_in_p) bf16 features (padded, lane-dense).
    Returns (n_pad, f_out_p) array of dtype out_dtype (stays padded).
    """
    n_pad = a_int8.shape[0]
    f_in_p = x_pad.shape[1]
    f_out = w.shape[1]
    f_out_p = _round_up(f_out, LANE)

    tk = TK
    tm = _choose_row_tile(n_pad)
    grid_m, grid_k = n_pad // tm, n_pad // tk

    w_p = _pad2(w, f_in_p, f_out_p).astype(jnp.bfloat16)
    b_p = _pad2(jnp.reshape(b, (1, -1)), 1, f_out_p).astype(jnp.float32)

    # --- stage 1: P = D^{-1/2} (X @ W), computed ONCE (hoisted projection) ---
    tn = _choose_col_tile(f_out_p)
    grid_n = f_out_p // tn
    proj_flops = 2 * n_pad * f_in_p * f_out_p
    proj_bytes = (grid_n * n_pad * f_in_p * 2      # X re-streamed per col tile
                  + grid_m * f_in_p * f_out_p * 2  # W re-streamed per row tile
                  + n_pad * f_out_p * 2            # P written (bf16)
                  + n_pad * 4)
    p = pl.pallas_call(
        _project_kernel,
        out_shape=jax.ShapeDtypeStruct((n_pad, f_out_p), jnp.bfloat16),
        grid=(grid_m, grid_n),
        in_specs=[
            pl.BlockSpec((tm, f_in_p), lambda i, j: (i, 0)),   # X row tile
            pl.BlockSpec((f_in_p, tn), lambda i, j: (0, j)),   # W col tile
            pl.BlockSpec((tm, 1), lambda i, j: (i, 0)),        # d^{-1/2} rows
        ],
        out_specs=pl.BlockSpec((tm, tn), lambda i, j: (i, j)),
        compiler_params=pltpu.CompilerParams(
            dimension_semantics=("parallel", "parallel"),
            vmem_limit_bytes=32 * 1024 * 1024),
        cost_estimate=pl.CostEstimate(flops=int(proj_flops), transcendentals=0,
                                      bytes_accessed=int(proj_bytes)),
    )(x_pad, w_p, d_isqrt)

    # --- stage 2: Y = D^{-1/2} (A @ P) + b  (HBM-bound int8 A stream) --------
    agg_flops = 2 * n_pad * n_pad * f_out_p
    agg_bytes = (n_pad * n_pad * 1                              # int8 A
                 + grid_m * n_pad * f_out_p * 2                 # P re-stream
                 + n_pad * f_out_p * jnp.dtype(out_dtype).itemsize
                 + n_pad * 4 + f_out_p * 4)
    kernel = functools.partial(_aggregate_kernel, apply_relu=apply_relu)
    out = pl.pallas_call(
        kernel,
        out_shape=jax.ShapeDtypeStruct((n_pad, f_out_p), out_dtype),
        grid=(grid_m, grid_k),
        in_specs=[
            pl.BlockSpec((tm, tk), lambda i, k: (i, k)),        # A tile (int8)
            pl.BlockSpec((tk, f_out_p), lambda i, k: (k, 0)),   # P tile (bf16)
            pl.BlockSpec((tm, 1), lambda i, k: (i, 0)),         # d^{-1/2} rows
            pl.BlockSpec((1, f_out_p), lambda i, k: (0, 0)),    # bias
        ],
        out_specs=pl.BlockSpec((tm, f_out_p), lambda i, k: (i, 0)),
        scratch_shapes=[pltpu.VMEM((tm, f_out_p), jnp.float32)],
        compiler_params=pltpu.CompilerParams(
            dimension_semantics=("parallel", "arbitrary"),
            vmem_limit_bytes=32 * 1024 * 1024),
        cost_estimate=pl.CostEstimate(flops=int(agg_flops), transcendentals=0,
                                      bytes_accessed=int(agg_bytes)),
    )(a_int8, p, d_isqrt, b_p)
    return out


def relu_padded(x_pad):
    """Standalone ReLU (only used when not adjacent to a GraphConv)."""
    n_pad, f_p = x_pad.shape
    tr = 512 if n_pad % 512 == 0 else 256
    tr = min(tr, n_pad)
    return pl.pallas_call(
        _relu_kernel,
        out_shape=jax.ShapeDtypeStruct((n_pad, f_p), x_pad.dtype),
        grid=(n_pad // tr,),
        in_specs=[pl.BlockSpec((tr, f_p), lambda i: (i, 0))],
        out_specs=pl.BlockSpec((tr, f_p), lambda i: (i, 0)),
        compiler_params=pltpu.CompilerParams(
            dimension_semantics=("parallel",)),
    )(x_pad)


# --------------------------- layer "modules" ---------------------------------

class GraphConvParams:
    """Parameters of one GraphConv layer (the gcn_layer_types branch)."""

    def __init__(self, w, b):
        self.w = w
        self.b = b


class ReLULayer:
    """Feature-only layer (the `else` branch of GraphSequential.forward)."""
    pass


def prepare_graph(adj01):
    """adj01: (n, n) {0,1} adjacency with self-loops.
    Returns (padded int8 adjacency, padded (n_pad,1) f32 d^{-1/2})."""
    n = adj01.shape[0]
    n_pad = _round_up(n, TK)
    deg = adj01.astype(jnp.float32).sum(axis=1)
    d_isqrt = jax.lax.rsqrt(jnp.maximum(deg, 1.0))
    a_int8 = _pad2(adj01.astype(jnp.int8), n_pad, n_pad)
    d_pad = _pad2(d_isqrt.reshape(-1, 1), n_pad, 1).astype(jnp.float32)
    return a_int8, d_pad


def graph_sequential(layer_stack, a_int8, d_isqrt, features):
    """Mirrors GraphSequential.forward: graph layers get (graph, features),
    other layers get (features).  A ReLU directly following a GraphConv is
    fused into that GraphConv's aggregation kernel.  Activations stay padded
    bf16 across layers; un-padding happens once at the end."""
    gcn_layer_types = (GraphConvParams,)  # stands in for (GraphConv, SAGEConv, GATConv)
    n = features.shape[0]
    n_pad = a_int8.shape[0]
    f_cur = features.shape[1]
    f_in_p = _round_up(f_cur, LANE)

    x = _pad2(features, n_pad, f_in_p).astype(jnp.bfloat16)   # pad ONCE

    n_layers = len(layer_stack)
    i = 0
    while i < n_layers:
        layer = layer_stack[i]
        if isinstance(layer, gcn_layer_types):
            fuse_relu = (i + 1 < n_layers
                         and isinstance(layer_stack[i + 1], ReLULayer))
            consumed = 2 if fuse_relu else 1
            is_last = (i + consumed) >= n_layers
            out_dtype = jnp.float32 if is_last else jnp.bfloat16
            x = graph_conv_padded(a_int8, d_isqrt, x, layer.w, layer.b,
                                  apply_relu=fuse_relu, out_dtype=out_dtype)
            f_cur = layer.w.shape[1]
            i += consumed
        else:
            x = relu_padded(x)
            i += 1

    out = x[:n, :f_cur]                                       # un-pad ONCE
    if out.dtype != jnp.float32:
        out = out.astype(jnp.float32)
    return out
    # TODO(synk): SAGEConv / GATConv variants of the generic container are not
    # instantiated here; only the GraphConv branch is realized in Pallas.


# ------------------------------- main ----------------------------------------

def build_adjacency(key, n):
    """Deterministic undirected {0,1} graph with self-loops (no 0-degree)."""
    logits = jax.random.uniform(key, (n, n))
    adj = (logits > 0.9).astype(jnp.float32)
    adj = jnp.maximum(adj, adj.T)                            # undirected
    adj = jnp.maximum(adj, jnp.eye(n, dtype=jnp.float32))    # self-loops
    return adj


def _ref_forward(a_norm, x, w1, b1, w2, b2):
    hp = jax.lax.Precision.HIGHEST
    h = jnp.maximum(
        jnp.dot(a_norm, jnp.dot(x, w1, precision=hp), precision=hp)
        + b1[None, :], 0.0)
    return (jnp.dot(a_norm, jnp.dot(h, w2, precision=hp), precision=hp)
            + b2[None, :])


if __name__ == "__main__":
    # Small, lane-dense shapes: N multiple of 256, feature dims multiples of 128.
    N, F_IN, HIDDEN, F_OUT = 512, 128, 128, 128

    key = jax.random.PRNGKey(0)
    k_adj, k_x, k_w1, k_b1, k_w2, k_b2 = jax.random.split(key, 6)

    adj = build_adjacency(k_adj, N)
    a_int8, d_isqrt = prepare_graph(adj)
    features = jax.random.normal(k_x, (N, F_IN), dtype=jnp.float32)

    # Deterministic (Glorot-ish) parameter init for the two GraphConv layers.
    w1 = jax.random.normal(k_w1, (F_IN, HIDDEN), dtype=jnp.float32) / jnp.sqrt(F_IN)
    b1 = jax.random.normal(k_b1, (HIDDEN,), dtype=jnp.float32) * 0.01
    w2 = jax.random.normal(k_w2, (HIDDEN, F_OUT), dtype=jnp.float32) / jnp.sqrt(HIDDEN)
    b2 = jax.random.normal(k_b2, (F_OUT,), dtype=jnp.float32) * 0.01

    layer_stack = [GraphConvParams(w1, b1), ReLULayer(), GraphConvParams(w2, b2)]

    run = jax.jit(lambda a, d, x: graph_sequential(layer_stack, a, d, x))
    out = jax.block_until_ready(run(a_int8, d_isqrt, features))

    # Sanity check against a dense f32 reference (bf16 operands -> loose tol).
    deg = adj.sum(axis=1)
    dis = 1.0 / jnp.sqrt(deg)
    a_norm = adj * dis[:, None] * dis[None, :]
    ref = _ref_forward(a_norm, features, w1, b1, w2, b2)
    rel_err = float(jnp.max(jnp.abs(out - ref)) / (jnp.max(jnp.abs(ref)) + 1e-6))

    assert out.shape == (N, F_OUT) and out.dtype == jnp.float32
    assert rel_err < 0.15, f"relative error too large: {rel_err}"
    print("KERNEL_OK")
</pallas_src>

<mosaic_0001>
module attributes {stable_mosaic.version = 11 : i64} {
  func.func @_project_kernel(%arg0: i32, %arg1: i32, %arg2: memref<256x128xbf16, #tpu.memory_space<vmem>>, %arg3: memref<128x128xbf16, #tpu.memory_space<vmem>>, %arg4: memref<256x1xf32, #tpu.memory_space<vmem>>, %arg5: memref<256x128xbf16, #tpu.memory_space<vmem>>) attributes {dimension_semantics = [#tpu.dimension_semantics<parallel>, #tpu.dimension_semantics<parallel>], iteration_bounds = array<i64: 2, 1>, scalar_prefetch = 0 : i64, scratch_operands = 0 : i64, tpu.core_type = #tpu.core_type<tc>, window_params = [{transform_indices = @transform_0, window_bounds = array<i64: 256, 128>}, {transform_indices = @transform_1, window_bounds = array<i64: 128, 128>}, {transform_indices = @transform_2, window_bounds = array<i64: 256, 1>}, {transform_indices = @transform_3, window_bounds = array<i64: 256, 128>}]} {
    %c0 = arith.constant 0 : index
    %c0_0 = arith.constant 0 : index
    %0 = vector.load %arg2[%c0, %c0_0] : memref<256x128xbf16, #tpu.memory_space<vmem>>, vector<256x128xbf16>
    %c0_1 = arith.constant 0 : index
    %c0_2 = arith.constant 0 : index
    %1 = vector.load %arg3[%c0_1, %c0_2] : memref<128x128xbf16, #tpu.memory_space<vmem>>, vector<128x128xbf16>
    %cst = arith.constant dense<0.000000e+00> : vector<256x128xf32>
    %2 = tpu.matmul %0, %1, %cst {dimension_numbers = #tpu.dot_dimension_numbers<[1], [0], [0], [1], [0, 0, 1, 1], [], []>} : vector<256x128xbf16>, vector<128x128xbf16>, vector<256x128xf32> -> vector<256x128xf32>
    %c0_3 = arith.constant 0 : index
    %c0_4 = arith.constant 0 : index
    %3 = vector.load %arg4[%c0_3, %c0_4] : memref<256x1xf32, #tpu.memory_space<vmem>>, vector<256x1xf32>
    %4 = vector.broadcast %3 : vector<256x1xf32> to vector<256x128xf32>
    %5 = arith.mulf %2, %4 : vector<256x128xf32>
    %6 = arith.truncf %5 : vector<256x128xf32> to vector<256x128xbf16>
    %c0_5 = arith.constant 0 : index
    %c0_6 = arith.constant 0 : index
    %7 = vector.load %arg5[%c0_5, %c0_6] : memref<256x128xbf16, #tpu.memory_space<vmem>>, vector<256x128xbf16>
    tpu.vector_store %arg5[%c0_5, %c0_6], %6 {strides = array<i32>} : memref<256x128xbf16, #tpu.memory_space<vmem>>, vector<256x128xbf16>,
    return
  }
  func.func @transform_0(%arg0: i32, %arg1: i32) -> (i32, i32) {
    %c0_i32 = arith.constant 0 : i32
    %c0_i32_0 = arith.constant 0 : i32
    return %arg0, %c0_i32 : i32, i32
  }
  func.func @transform_1(%arg0: i32, %arg1: i32) -> (i32, i32) {
    %c0_i32 = arith.constant 0 : i32
    %c0_i32_0 = arith.constant 0 : i32
    return %c0_i32, %arg1 : i32, i32
  }
  func.func @transform_2(%arg0: i32, %arg1: i32) -> (i32, i32) {
    %c0_i32 = arith.constant 0 : i32
    %c0_i32_0 = arith.constant 0 : i32
    return %arg0, %c0_i32 : i32, i32
  }
  func.func @transform_3(%arg0: i32, %arg1: i32) -> (i32, i32) {
    %c0_i32 = arith.constant 0 : i32
    return %arg0, %arg1 : i32, i32
  }
}

module attributes {stable_mosaic.version = 11 : i64} {
  func.func @_aggregate_kernel(%arg0: i32, %arg1: i32, %arg2: memref<256x256xi8, #tpu.memory_space<vmem>>, %arg3: memref<256x128xbf16, #tpu.memory_space<vmem>>, %arg4: memref<256x1xf32, #tpu.memory_space<vmem>>, %arg5: memref<1x128xf32, #tpu.memory_space<vmem>>, %arg6: memref<256x128xf32, #tpu.memory_space<vmem>>, %arg7: memref<256x128xf32, #tpu.memory_space<vmem>>) attributes {dimension_semantics = [#tpu.dimension_semantics<parallel>, #tpu.dimension_semantics<arbitrary>], iteration_bounds = array<i64: 2, 2>, scalar_prefetch = 0 : i64, scratch_operands = 1 : i64, tpu.core_type = #tpu.core_type<tc>, window_params = [{transform_indices = @transform_0, window_bounds = array<i64: 256, 256>}, {transform_indices = @transform_1, window_bounds = array<i64: 256, 128>}, {transform_indices = @transform_2, window_bounds = array<i64: 256, 1>}, {pipeline_mode = #tpu.pipeline_mode<synchronous>, transform_indices = @transform_3, window_bounds = array<i64: 1, 128>}, {transform_indices = @transform_4, window_bounds = array<i64: 256, 128>}]} {
    %c0_i32 = arith.constant 0 : i32
    %0 = arith.cmpi eq, %arg1, %c0_i32 : i32
    %1 = arith.extui %0 : i1 to i32
    %c0_i32_0 = arith.constant 0 : i32
    %2 = arith.cmpi ne, %1, %c0_i32_0 : i32
    scf.if %2 {
      %cst_9 = arith.constant 0.000000e+00 : f32
      %13 = vector.broadcast %cst_9 : f32 to vector<256x128xf32>
      %c0_10 = arith.constant 0 : index
      %c0_11 = arith.constant 0 : index
      %14 = vector.load %arg7[%c0_10, %c0_11] : memref<256x128xf32, #tpu.memory_space<vmem>>, vector<256x128xf32>
      tpu.vector_store %arg7[%c0_10, %c0_11], %13 {strides = array<i32>} : memref<256x128xf32, #tpu.memory_space<vmem>>, vector<256x128xf32>,
    } else {
    }
    %c0 = arith.constant 0 : index
    %c0_1 = arith.constant 0 : index
    %3 = vector.load %arg2[%c0, %c0_1] : memref<256x256xi8, #tpu.memory_space<vmem>>, vector<256x256xi8>
    %4 = arith.sitofp %3 : vector<256x256xi8> to vector<256x256xbf16>
    %c0_2 = arith.constant 0 : index
    %c0_3 = arith.constant 0 : index
    %5 = vector.load %arg7[%c0_2, %c0_3] : memref<256x128xf32, #tpu.memory_space<vmem>>, vector<256x128xf32>
    %c0_4 = arith.constant 0 : index
    %c0_5 = arith.constant 0 : index
    %6 = vector.load %arg3[%c0_4, %c0_5] : memref<256x128xbf16, #tpu.memory_space<vmem>>, vector<256x128xbf16>
    %cst = arith.constant dense<0.000000e+00> : vector<256x128xf32>
    %7 = tpu.matmul %4, %6, %cst {dimension_numbers = #tpu.dot_dimension_numbers<[1], [0], [0], [1], [0, 0, 1, 1], [], []>} : vector<256x256xbf16>, vector<256x128xbf16>, vector<256x128xf32> -> vector<256x128xf32>
    %8 = arith.addf %5, %7 : vector<256x128xf32>
    %c0_6 = arith.constant 0 : index
    %c0_7 = arith.constant 0 : index
    %9 = vector.load %arg7[%c0_6, %c0_7] : memref<256x128xf32, #tpu.memory_space<vmem>>, vector<256x128xf32>
    tpu.vector_store %arg7[%c0_6, %c0_7], %8 {strides = array<i32>} : memref<256x128xf32, #tpu.memory_space<vmem>>, vector<256x128xf32>,
    %c1_i32 = arith.constant 1 : i32
    %10 = arith.cmpi eq, %arg1, %c1_i32 : i32
    %11 = arith.extui %10 : i1 to i32
    %c0_i32_8 = arith.constant 0 : i32
    %12 = arith.cmpi ne, %11, %c0_i32_8 : i32
    scf.if %12 {
      %c0_9 = arith.constant 0 : index
      %c0_10 = arith.constant 0 : index
      %13 = vector.load %arg7[%c0_9, %c0_10] : memref<256x128xf32, #tpu.memory_space<vmem>>, vector<256x128xf32>
      %c0_11 = arith.constant 0 : index
      %c0_12 = arith.constant 0 : index
      %14 = vector.load %arg4[%c0_11, %c0_12] : memref<256x1xf32, #tpu.memory_space<vmem>>, vector<256x1xf32>
      %15 = vector.broadcast %14 : vector<256x1xf32> to vector<256x128xf32>
      %16 = arith.mulf %13, %15 : vector<256x128xf32>
      %c0_13 = arith.constant 0 : index
      %c0_14 = arith.constant 0 : index
      %17 = vector.load %arg5[%c0_13, %c0_14] : memref<1x128xf32, #tpu.memory_space<vmem>>, vector<1x128xf32>
      %18 = vector.broadcast %17 : vector<1x128xf32> to vector<256x128xf32>
      %19 = arith.addf %16, %18 : vector<256x128xf32>
      %c0_15 = arith.constant 0 : index
      %c0_16 = arith.constant 0 : index
      %20 = vector.load %arg6[%c0_15, %c0_16] : memref<256x128xf32, #tpu.memory_space<vmem>>, vector<256x128xf32>
      tpu.vector_store %arg6[%c0_15, %c0_16], %19 {strides = array<i32>} : memref<256x128xf32, #tpu.memory_space<vmem>>, vector<256x128xf32>,
    } else {
    }
    return
  }
  func.func @transform_0(%arg0: i32, %arg1: i32) -> (i32, i32) {
    %c0_i32 = arith.constant 0 : i32
    return %arg0, %arg1 : i32, i32
  }
  func.func @transform_1(%arg0: i32, %arg1: i32) -> (i32, i32) {
    %c0_i32 = arith.constant 0 : i32
    %c0_i32_0 = arith.constant 0 : i32
    return %arg1, %c0_i32 : i32, i32
  }
  func.func @transform_2(%arg0: i32, %arg1: i32) -> (i32, i32) {
    %c0_i32 = arith.constant 0 : i32
    %c0_i32_0 = arith.constant 0 : i32
    return %arg0, %c0_i32 : i32, i32
  }
  func.func @transform_3(%arg0: i32, %arg1: i32) -> (i32, i32) {
    %c0_i32 = arith.constant 0 : i32
    %c0_i32_0 = arith.constant 0 : i32
    %c0_i32_1 = arith.constant 0 : i32
    return %c0_i32, %c0_i32_0 : i32, i32
  }
  func.func @transform_4(%arg0: i32, %arg1: i32) -> (i32, i32) {
    %c0_i32 = arith.constant 0 : i32
    %c0_i32_0 = arith.constant 0 : i32
    return %arg0, %c0_i32 : i32, i32
  }
}

module attributes {stable_mosaic.version = 11 : i64} {
  func.func @_aggregate_kernel(%arg0: i32, %arg1: i32, %arg2: memref<256x256xi8, #tpu.memory_space<vmem>>, %arg3: memref<256x128xbf16, #tpu.memory_space<vmem>>, %arg4: memref<256x1xf32, #tpu.memory_space<vmem>>, %arg5: memref<1x128xf32, #tpu.memory_space<vmem>>, %arg6: memref<256x128xbf16, #tpu.memory_space<vmem>>, %arg7: memref<256x128xf32, #tpu.memory_space<vmem>>) attributes {dimension_semantics = [#tpu.dimension_semantics<parallel>, #tpu.dimension_semantics<arbitrary>], iteration_bounds = array<i64: 2, 2>, scalar_prefetch = 0 : i64, scratch_operands = 1 : i64, tpu.core_type = #tpu.core_type<tc>, window_params = [{transform_indices = @transform_0, window_bounds = array<i64: 256, 256>}, {transform_indices = @transform_1, window_bounds = array<i64: 256, 128>}, {transform_indices = @transform_2, window_bounds = array<i64: 256, 1>}, {pipeline_mode = #tpu.pipeline_mode<synchronous>, transform_indices = @transform_3, window_bounds = array<i64: 1, 128>}, {transform_indices = @transform_4, window_bounds = array<i64: 256, 128>}]} {
    %c0_i32 = arith.constant 0 : i32
    %0 = arith.cmpi eq, %arg1, %c0_i32 : i32
    %1 = arith.extui %0 : i1 to i32
    %c0_i32_0 = arith.constant 0 : i32
    %2 = arith.cmpi ne, %1, %c0_i32_0 : i32
    scf.if %2 {
      %cst_9 = arith.constant 0.000000e+00 : f32
      %13 = vector.broadcast %cst_9 : f32 to vector<256x128xf32>
      %c0_10 = arith.constant 0 : index
      %c0_11 = arith.constant 0 : index
      %14 = vector.load %arg7[%c0_10, %c0_11] : memref<256x128xf32, #tpu.memory_space<vmem>>, vector<256x128xf32>
      tpu.vector_store %arg7[%c0_10, %c0_11], %13 {strides = array<i32>} : memref<256x128xf32, #tpu.memory_space<vmem>>, vector<256x128xf32>,
    } else {
    }
    %c0 = arith.constant 0 : index
    %c0_1 = arith.constant 0 : index
    %3 = vector.load %arg2[%c0, %c0_1] : memref<256x256xi8, #tpu.memory_space<vmem>>, vector<256x256xi8>
    %4 = arith.sitofp %3 : vector<256x256xi8> to vector<256x256xbf16>
    %c0_2 = arith.constant 0 : index
    %c0_3 = arith.constant 0 : index
    %5 = vector.load %arg7[%c0_2, %c0_3] : memref<256x128xf32, #tpu.memory_space<vmem>>, vector<256x128xf32>
    %c0_4 = arith.constant 0 : index
    %c0_5 = arith.constant 0 : index
    %6 = vector.load %arg3[%c0_4, %c0_5] : memref<256x128xbf16, #tpu.memory_space<vmem>>, vector<256x128xbf16>
    %cst = arith.constant dense<0.000000e+00> : vector<256x128xf32>
    %7 = tpu.matmul %4, %6, %cst {dimension_numbers = #tpu.dot_dimension_numbers<[1], [0], [0], [1], [0, 0, 1, 1], [], []>} : vector<256x256xbf16>, vector<256x128xbf16>, vector<256x128xf32> -> vector<256x128xf32>
    %8 = arith.addf %5, %7 : vector<256x128xf32>
    %c0_6 = arith.constant 0 : index
    %c0_7 = arith.constant 0 : index
    %9 = vector.load %arg7[%c0_6, %c0_7] : memref<256x128xf32, #tpu.memory_space<vmem>>, vector<256x128xf32>
    tpu.vector_store %arg7[%c0_6, %c0_7], %8 {strides = array<i32>} : memref<256x128xf32, #tpu.memory_space<vmem>>, vector<256x128xf32>,
    %c1_i32 = arith.constant 1 : i32
    %10 = arith.cmpi eq, %arg1, %c1_i32 : i32
    %11 = arith.extui %10 : i1 to i32
    %c0_i32_8 = arith.constant 0 : i32
    %12 = arith.cmpi ne, %11, %c0_i32_8 : i32
    scf.if %12 {
      %c0_9 = arith.constant 0 : index
      %c0_10 = arith.constant 0 : index
      %13 = vector.load %arg7[%c0_9, %c0_10] : memref<256x128xf32, #tpu.memory_space<vmem>>, vector<256x128xf32>
      %c0_11 = arith.constant 0 : index
      %c0_12 = arith.constant 0 : index
      %14 = vector.load %arg4[%c0_11, %c0_12] : memref<256x1xf32, #tpu.memory_space<vmem>>, vector<256x1xf32>
      %15 = vector.broadcast %14 : vector<256x1xf32> to vector<256x128xf32>
      %16 = arith.mulf %13, %15 : vector<256x128xf32>
      %c0_13 = arith.constant 0 : index
      %c0_14 = arith.constant 0 : index
      %17 = vector.load %arg5[%c0_13, %c0_14] : memref<1x128xf32, #tpu.memory_space<vmem>>, vector<1x128xf32>
      %18 = vector.broadcast %17 : vector<1x128xf32> to vector<256x128xf32>
      %19 = arith.addf %16, %18 : vector<256x128xf32>
      %cst_15 = arith.constant 0.000000e+00 : f32
      %20 = vector.broadcast %cst_15 : f32 to vector<256x128xf32>
      %21 = arith.maximumf %19, %20 : vector<256x128xf32>
      %22 = arith.truncf %21 : vector<256x128xf32> to vector<256x128xbf16>
      %c0_16 = arith.constant 0 : index
      %c0_17 = arith.constant 0 : index
      %23 = vector.load %arg6[%c0_16, %c0_17] : memref<256x128xbf16, #tpu.memory_space<vmem>>, vector<256x128xbf16>
      tpu.vector_store %arg6[%c0_16, %c0_17], %22 {strides = array<i32>} : memref<256x128xbf16, #tpu.memory_space<vmem>>, vector<256x128xbf16>,
    } else {
    }
    return
  }
  func.func @transform_0(%arg0: i32, %arg1: i32) -> (i32, i32) {
    %c0_i32 = arith.constant 0 : i32
    return %arg0, %arg1 : i32, i32
  }
  func.func @transform_1(%arg0: i32, %arg1: i32) -> (i32, i32) {
    %c0_i32 = arith.constant 0 : i32
    %c0_i32_0 = arith.constant 0 : i32
    return %arg1, %c0_i32 : i32, i32
  }
  func.func @transform_2(%arg0: i32, %arg1: i32) -> (i32, i32) {
    %c0_i32 = arith.constant 0 : i32
    %c0_i32_0 = arith.constant 0 : i32
    return %arg0, %c0_i32 : i32, i32
  }
  func.func @transform_3(%arg0: i32, %arg1: i32) -> (i32, i32) {
    %c0_i32 = arith.constant 0 : i32
    %c0_i32_0 = arith.constant 0 : i32
    %c0_i32_1 = arith.constant 0 : i32
    return %c0_i32, %c0_i32_0 : i32, i32
  }
  func.func @transform_4(%arg0: i32, %arg1: i32) -> (i32, i32) {
    %c0_i32 = arith.constant 0 : i32
    %c0_i32_0 = arith.constant 0 : i32
    return %arg0, %c0_i32 : i32, i32
  }
}

</mosaic_0001>

<llo_original>
// kernel: _lambda_.4
$region0: #{_lambda_.4}
  #allocation0 [shape = 'u32[]', space=smem, size = 0x4, offset = 0x4, fixed_abs, tag = 'smem constant byte address 0x4 - core index']
  #allocation1 [shape = 'u32[72,128]{1,0:T(1,128)}', space=vmem, size = 0x9000, scoped, tag = 'internal scratch']
  %s0 = inlined_call_operand.vmem [shape: bf16[512,128], index: 0, kind: input, shape index: {}]
  %s1 = inlined_call_operand.vmem [shape: bf16[128,128], index: 1, kind: input, shape index: {}]
  %s2 = inlined_call_operand.vmem [shape: f32[512,1], index: 2, kind: input, shape index: {}]
  %s3 = inlined_call_operand.vmem [shape: bf16[512,128], index: 3, kind: output, shape index: {}]
  %s4 = sld [smem:[#allocation0]]
  $region45: #{_lambda_.4} parent=0
    _
  %s6 = ssub.s32 1, %s4
  %s7 = scalar_select 0, %s6, %s4
  loop: start=0, step=1, limit=4
  $region2: #{_lambda_.4} parent=0 // loop_pre_header
    _
  $region3: #{_lambda_.4} parent=0 // loop_header
    %s9 = sphi 0, %s13
    %p10 = scmp.ge.s32.totalorder %s9, 4
    %s16 = sphi 0, %s28
    %s17 = sphi 0, %s24
    %s18 = sphi 0, %s16
    %s19 = sphi 0, %s17
    %s20 = sphi 0, %s18
    %s21 = sphi 0, %s19
    %s31 = sphi 0, %s33
    %s34 = sphi 0, %s31
    %s35 = sphi 0, %s34
    %s51 = sphi 0, %s35
    %s57 = sphi 0, %s59
    %s60 = sphi 0, %s57
    %s61 = sphi 0, %s60
    %s77 = sphi 0, %s61
    %s83 = sphi 0, %s85
    %s86 = sphi 0, %s83
    %s87 = sphi 0, %s86
    %s103 = sphi 0, %s87
    %s111 = sphi 0, %s113
    %s114 = sphi 0, %s111
    %s115 = sphi 0, %s114
    %s131 = sphi 0, %s115
  $region4: #{_lambda_.4} parent=0 // loop_header_branch
    %12 = sbr.rel (%p10) target = $region8
  $region5: #{_lambda_.4} parent=0 // loop_body
    %s14 = ssub.s32 %s9, 1
    %s15 = ssub.s32 %s9, 2
    %s22 = sadd.s32 1, %s17
    %p23 = scmp.ge.s32.totalorder %s22, 1
    %s24 = scalar_select %p23, 0, %s22
    %s25 = sadd.s32 1, %s16
    %s26 = scalar_select %p23, %s25, %s16
    %p27 = scmp.ge.s32.totalorder %s26, 2
    %s28 = scalar_select %p27, 0, %s26
    %s29 = ssub.s32 %s16, %s28
    %p30 = scmp.eq.s32.totalorder %s29, 0
    %s32 = sadd.s32 %s31, 1
    %s33 = scalar_select %p30, %s31, %s32
    %p36 = pneg %p30
    %p37 = scmp.eq.s32.totalorder %s9, 1
    %p38 = por %p36, %p37
    %p39 = scmp.ne.s32.totalorder %s31, %s34
    %p40 = scmp.eq.s32.totalorder %s9, 0
    %p41 = por %p39, %p40
    %p42 = scmp.ne.s32.totalorder %s31, %s34
    %p43 = scmp.eq.s32.totalorder %s14, 1
    %p44 = por %p42, %p43
    %p45 = scmp.ne.s32.totalorder %s34, %s35
    %p46 = scmp.eq.s32.totalorder %s14, 0
    %p47 = por %p45, %p46
    %p48 = scmp.ne.s32.totalorder %s34, %s35
    %p49 = scmp.eq.s32.totalorder %s15, 1
    %p50 = por %p48, %p49
    %p52 = scmp.ne.s32.totalorder %s35, %s51
    %p53 = scmp.eq.s32.totalorder %s15, 0
    %p54 = por %p52, %p53
    %s55 = ssub.s32 %s17, %s24
    %p56 = scmp.eq.s32.totalorder %s55, 0
    %s58 = sadd.s32 %s57, 1
    %s59 = scalar_select %p56, %s57, %s58
    %p62 = pneg %p56
    %p63 = scmp.eq.s32.totalorder %s9, 1
    %p64 = por %p62, %p63
    %p65 = scmp.ne.s32.totalorder %s57, %s60
    %p66 = scmp.eq.s32.totalorder %s9, 0
    %p67 = por %p65, %p66
    %p68 = scmp.ne.s32.totalorder %s57, %s60
    %p69 = scmp.eq.s32.totalorder %s14, 1
    %p70 = por %p68, %p69
    %p71 = scmp.ne.s32.totalorder %s60, %s61
    %p72 = scmp.eq.s32.totalorder %s14, 0
    %p73 = por %p71, %p72
    %p74 = scmp.ne.s32.totalorder %s60, %s61
    %p75 = scmp.eq.s32.totalorder %s15, 1
    %p76 = por %p74, %p75
    %p78 = scmp.ne.s32.totalorder %s61, %s77
    %p79 = scmp.eq.s32.totalorder %s15, 0
    %p80 = por %p78, %p79
    %s81 = ssub.s32 %s16, %s28
    %p82 = scmp.eq.s32.totalorder %s81, 0
    %s84 = sadd.s32 %s83, 1
    %s85 = scalar_select %p82, %s83, %s84
    %p88 = pneg %p82
    %p89 = scmp.eq.s32.totalorder %s9, 1
    %p90 = por %p88, %p89
    %p91 = scmp.ne.s32.totalorder %s83, %s86
    %p92 = scmp.eq.s32.totalorder %s9, 0
    %p93 = por %p91, %p92
    %p94 = scmp.ne.s32.totalorder %s83, %s86
    %p95 = scmp.eq.s32.totalorder %s14, 1
    %p96 = por %p94, %p95
    %p97 = scmp.ne.s32.totalorder %s86, %s87
    %p98 = scmp.eq.s32.totalorder %s14, 0
    %p99 = por %p97, %p98
    %p100 = scmp.ne.s32.totalorder %s86, %s87
    %p101 = scmp.eq.s32.totalorder %s15, 1
    %p102 = por %p100, %p101
    %p104 = scmp.ne.s32.totalorder %s87, %s103
    %p105 = scmp.eq.s32.totalorder %s15, 0
    %p106 = por %p104, %p105
    %s107 = ssub.s32 %s16, %s28
    %s108 = ssub.s32 %s17, %s24
    %s109 = sor.u32 %s107, %s108
    %p110 = scmp.eq.s32.totalorder %s109, 0
    %s112 = sadd.s32 %s111, 1
    %s113 = scalar_select %p110, %s111, %s112
    %p116 = pneg %p110
    %p117 = scmp.eq.s32.totalorder %s9, 1
    %p118 = por %p116, %p117
    %p119 = scmp.ne.s32.totalorder %s111, %s114
    %p120 = scmp.eq.s32.totalorder %s9, 0
    %p121 = por %p119, %p120
    %p122 = scmp.ne.s32.totalorder %s111, %s114
    %p123 = scmp.eq.s32.totalorder %s14, 1
    %p124 = por %p122, %p123
    %p125 = scmp.ne.s32.totalorder %s114, %s115
    %p126 = scmp.eq.s32.totalorder %s14, 0
    %p127 = por %p125, %p126
    %p128 = scmp.ne.s32.totalorder %s114, %s115
    %p129 = scmp.eq.s32.totalorder %s15, 1
    %p130 = por %p128, %p129
    %p132 = scmp.ne.s32.totalorder %s115, %s131
    %p133 = scmp.eq.s32.totalorder %s15, 0
    %p134 = por %p132, %p133
    %p135 = scmp.le.s32.totalorder 1, %s9
    %p136 = scmp.lt.s32.totalorder %s9, 3
    %p137 = pnand %p135, %p136
    %p138 = pneg %p137
    // Predicated region
    $region9: #{_lambda_.4} parent=5 // pred_check
      _
    $region10: #{_lambda_.4} parent=5 // pred_check_branch
      %140 = sbr.rel (%p137) target = $region12
    $region11: #{_lambda_.4} parent=5 // pred_region
      %s141 = ssub.s32 %s9, 1
      // Predicated region
      $region13: #{_lambda_.4} parent=11 // pred_check
        %p142 = pneg %p73
      $region14: #{_lambda_.4} parent=11 // pred_check_branch
        %144 = sbr.rel (%p142) target = $region16
      $region15: #{_lambda_.4} parent=11 // pred_region
        %p145 = scmp.lt.s32.totalorder %s19, 0
        %s146 = scalar_select %p145, %s19, 0
        %s147 = smul.addr %s146, 4
        %s148 = scalar_lea.vmem %s1, %s147
      $region16: #{_lambda_.4} parent=11 // pred_fallthru
        _
    $region12: #{_lambda_.4} parent=5 // pred_fallthru
      _
    %p149 = scmp.lt.s32.totalorder %s9, 2
    // Predicated region
    $region17: #{_lambda_.4} parent=5 // pred_check
      %p150 = pneg %p149
    $region18: #{_lambda_.4} parent=5 // pred_check_branch
      %152 = sbr.rel (%p150) target = $region20
    $region19: #{_lambda_.4} parent=5 // pred_region
      // Predicated region
      $region21: #{_lambda_.4} parent=19 // pred_check
        %p153 = pneg %p41
      $region22: #{_lambda_.4} parent=19 // pred_check_branch
        %155 = sbr.rel (%p153) target = $region24
      $region23: #{_lambda_.4} parent=19 // pred_region
        %s156 = smul.u32 32, %s16
        %p157 = scmp.lt.s32.totalorder %s156, 63
        %s158 = scalar_select %p157, %s156, 63
        %s159 = smul.addr %s158, 4
        %s160 = scalar_lea.vmem %s0, %s159
        %s161 = smul.u32 32, %s16
      $region24: #{_lambda_.4} parent=19 // pred_fallthru
        _
      // Predicated region
      $region25: #{_lambda_.4} parent=19 // pred_check
        %p162 = pneg %p93
      $region26: #{_lambda_.4} parent=19 // pred_check_branch
        %164 = sbr.rel (%p162) target = $region28
      $region27: #{_lambda_.4} parent=19 // pred_region
        %s165 = smul.u32 32, %s16
        %p166 = scmp.lt.s32.totalorder %s165, 63
        %s167 = scalar_select %p166, %s165, 63
        %s168 = smul.addr %s167, 8
        %s169 = scalar_lea.vmem %s2, %s168
        %s170 = smul.u32 32, %s16
      $region28: #{_lambda_.4} parent=19 // pred_fallthru
        _
    $region20: #{_lambda_.4} parent=5 // pred_fallthru
      _
    %p171 = scmp.le.s32.totalorder 1, %s9
    %p172 = scmp.lt.s32.totalorder %s9, 3
    %p173 = pnand %p171, %p172
    %p174 = pneg %p173
    // Predicated region
    $region29: #{_lambda_.4} parent=5 // pred_check
      _
    $region30: #{_lambda_.4} parent=5 // pred_check_branch
      %176 = sbr.rel (%p173) target = $region32
    $region31: #{_lambda_.4} parent=5 // pred_region
      %s177 = ssub.s32 %s9, 1
      %s178 = smul.u32 32, %s18
      %p179 = scmp.lt.s32.totalorder %s178, 63
      %s180 = scalar_select %p179, %s178, 63
      %s181 = smul.addr %s180, 4
      %s182 = scalar_lea.vmem %s0, %s181
      %p183 = pneg %p47
      %p184 = pneg %p44
      %p185 = scmp.lt.s32.totalorder %s19, 0
      %s186 = scalar_select %p185, %s19, 0
      %s187 = smul.addr %s186, 4
      %s188 = scalar_lea.vmem %s1, %s187
      %p189 = pneg %p73
      %p190 = pneg %p70
      %s191 = smul.u32 32, %s18
      %p192 = scmp.lt.s32.totalorder %s191, 63
      %s193 = scalar_select %p192, %s191, 63
      %s194 = smul.addr %s193, 8
      %s195 = scalar_lea.vmem %s2, %s194
      %p196 = pneg %p99
      %p197 = pneg %p96
      %p198 = pneg %p127
      %p199 = pneg %p124
      %s200 = smul.u32 32, %s18
      %p201 = scmp.lt.s32.totalorder %s200, 63
      %s202 = scalar_select %p201, %s200, 63
      %p203 = scmp.lt.s32.totalorder %s19, 0
      %s204 = scalar_select %p203, %s19, 0
      %s205 = sadd.s32 %s204, %s202
      %s206 = smul.addr %s205, 4
      %s207 = scalar_lea.vmem %s3, %s206
      %s208 = smul.u32 32, %s18
      %p209 = scmp.lt.s32.totalorder %s208, 63
      %s210 = scalar_select %p209, %s208, 63
      %s211 = smul.addr %s210, 4
      %s212 = scalar_lea.vmem %s0, %s211
      %s213 = smul.u32 32, %s18
      %p214 = scmp.lt.s32.totalorder %s19, 0
      %s215 = scalar_select %p214, %s19, 0
      %s216 = smul.addr %s215, 4
      %s217 = scalar_lea.vmem %s1, %s216
      %s218 = smul.u32 32, %s18
      %p219 = scmp.lt.s32.totalorder %s218, 63
      %s220 = scalar_select %p219, %s218, 63
      %s221 = smul.addr %s220, 8
      %s222 = scalar_lea.vmem %s2, %s221
      %s223 = smul.u32 32, %s18
      %s224 = smul.u32 32, %s18
      %p225 = scmp.lt.s32.totalorder %s224, 63
      %s226 = scalar_select %p225, %s224, 63
      %p227 = scmp.lt.s32.totalorder %s19, 0
      %s228 = scalar_select %p227, %s19, 0
      %s229 = sadd.s32 %s228, %s226
      %s230 = smul.addr %s229, 4
      %s231 = scalar_lea.vmem %s3, %s230
      %s232 = smul.u32 32, %s18
      %v233 = vld [vmem:[%s212] sm:$0xf]
      %v234 = vld [vmem:[%s212 + $0x4] sm:$0xf]
      %v235 = vld [vmem:[%s212 + $0x8] sm:$0xf]
      %v236 = vld [vmem:[%s212 + $0xc] sm:$0xf]
      %v237 = vld [vmem:[%s212 + $0x10] sm:$0xf]
      %v238 = vld [vmem:[%s212 + $0x14] sm:$0xf]
      %v239 = vld [vmem:[%s212 + $0x18] sm:$0xf]
      %v240 = vld [vmem:[%s212 + $0x1c] sm:$0xf]
      %v241 = vld [vmem:[%s212 + $0x20] sm:$0xf]
      %v242 = vld [vmem:[%s212 + $0x24] sm:$0xf]
      %v243 = vld [vmem:[%s212 + $0x28] sm:$0xf]
      %v244 = vld [vmem:[%s212 + $0x2c] sm:$0xf]
      %v245 = vld [vmem:[%s212 + $0x30] sm:$0xf]
      %v246 = vld [vmem:[%s212 + $0x34] sm:$0xf]
      %v247 = vld [vmem:[%s212 + $0x38] sm:$0xf]
      %v248 = vld [vmem:[%s212 + $0x3c] sm:$0xf]
      %v249 = vld [vmem:[%s212 + $0x40] sm:$0xf]
      %v250 = vld [vmem:[%s212 + $0x44] sm:$0xf]
      %v251 = vld [vmem:[%s212 + $0x48] sm:$0xf]
      %v252 = vld [vmem:[%s212 + $0x4c] sm:$0xf]
      %v253 = vld [vmem:[%s212 + $0x50] sm:$0xf]
      %v254 = vld [vmem:[%s212 + $0x54] sm:$0xf]
      %v255 = vld [vmem:[%s212 + $0x58] sm:$0xf]
      %v256 = vld [vmem:[%s212 + $0x5c] sm:$0xf]
      %v257 = vld [vmem:[%s212 + $0x60] sm:$0xf]
      %v258 = vld [vmem:[%s212 + $0x64] sm:$0xf]
      %v259 = vld [vmem:[%s212 + $0x68] sm:$0xf]
      %v260 = vld [vmem:[%s212 + $0x6c] sm:$0xf]
      %v261 = vld [vmem:[%s212 + $0x70] sm:$0xf]
      %v262 = vld [vmem:[%s212 + $0x74] sm:$0xf]
      %v263 = vld [vmem:[%s212 + $0x78] sm:$0xf]
      %v264 = vld [vmem:[%s212 + $0x7c] sm:$0xf]
      %v265 = vld [vmem:[%s217] sm:$0xf]
      %v266 = vld [vmem:[%s217 + $0x4] sm:$0xf]
      %v267 = vld [vmem:[%s217 + $0x8] sm:$0xf]
      %v268 = vld [vmem:[%s217 + $0xc] sm:$0xf]
      %v269 = vld [vmem:[%s217 + $0x10] sm:$0xf]
      %v270 = vld [vmem:[%s217 + $0x14] sm:$0xf]
      %v271 = vld [vmem:[%s217 + $0x18] sm:$0xf]
      %v272 = vld [vmem:[%s217 + $0x1c] sm:$0xf]
      %v273 = vld [vmem:[%s217 + $0x20] sm:$0xf]
      %v274 = vld [vmem:[%s217 + $0x24] sm:$0xf]
      %v275 = vld [vmem:[%s217 + $0x28] sm:$0xf]
      %v276 = vld [vmem:[%s217 + $0x2c] sm:$0xf]
      %v277 = vld [vmem:[%s217 + $0x30] sm:$0xf]
      %v278 = vld [vmem:[%s217 + $0x34] sm:$0xf]
      %v279 = vld [vmem:[%s217 + $0x38] sm:$0xf]
      %v280 = vld [vmem:[%s217 + $0x3c] sm:$0xf]
      %v313 = vunpack.c.l.b16 %v233
      %v314 = vunpack.c.l.b16 %v234
      %v315 = vunpack.c.l.b16 %v235
      %v316 = vunpack.c.l.b16 %v236
      %v317 = vunpack.c.l.b16 %v237
      %v318 = vunpack.c.l.b16 %v238
      %v319 = vunpack.c.l.b16 %v239
      %v320 = vunpack.c.l.b16 %v240
      %v321 = vunpack.c.l.b16 %v241
      %v322 = vunpack.c.l.b16 %v242
      %v323 = vunpack.c.l.b16 %v243
      %v324 = vunpack.c.l.b16 %v244
      %v325 = vunpack.c.l.b16 %v245
      %v326 = vunpack.c.l.b16 %v246
      %v327 = vunpack.c.l.b16 %v247
      %v328 = vunpack.c.l.b16 %v248
      %v329 = vunpack.c.l.b16 %v249
      %v330 = vunpack.c.l.b16 %v250
      %v331 = vunpack.c.l.b16 %v251
      %v332 = vunpack.c.l.b16 %v252
      %v333 = vunpack.c.l.b16 %v253
      %v334 = vunpack.c.l.b16 %v254
      %v335 = vunpack.c.l.b16 %v255
      %v336 = vunpack.c.l.b16 %v256
      %v337 = vunpack.c.l.b16 %v257
      %v338 = vunpack.c.l.b16 %v258
      %v339 = vunpack.c.l.b16 %v259
      %v340 = vunpack.c.l.b16 %v260
      %v341 = vunpack.c.l.b16 %v261
      %v342 = vunpack.c.l.b16 %v262
      %v343 = vunpack.c.l.b16 %v263
      %v344 = vunpack.c.l.b16 %v264
      %v345 = vpack.c.b16 %v314, %v313
      %v346 = vpack.c.b16 %v316, %v315
      %v347 = vpack.c.b16 %v318, %v317
      %v348 = vpack.c.b16 %v320, %v319
      %v349 = vpack.c.b16 %v322, %v321
      %v350 = vpack.c.b16 %v324, %v323
      %v351 = vpack.c.b16 %v326, %v325
      %v352 = vpack.c.b16 %v328, %v327
      %v353 = vpack.c.b16 %v330, %v329
      %v354 = vpack.c.b16 %v332, %v331
      %v355 = vpack.c.b16 %v334, %v333
      %v356 = vpack.c.b16 %v336, %v335
      %v357 = vpack.c.b16 %v338, %v337
      %v358 = vpack.c.b16 %v340, %v339
      %v359 = vpack.c.b16 %v342, %v341
      %v360 = vpack.c.b16 %v344, %v343
      %v393 = vunpack.c.l.b16 %v265
      %v394 = vunpack.c.l.b16 %v266
      %v395 = vunpack.c.l.b16 %v267
      %v396 = vunpack.c.l.b16 %v268
      %v397 = vunpack.c.l.b16 %v269
      %v398 = vunpack.c.l.b16 %v270
      %v399 = vunpack.c.l.b16 %v271
      %v400 = vunpack.c.l.b16 %v272
      %v401 = vunpack.c.l.b16 %v273
      %v402 = vunpack.c.l.b16 %v274
      %v403 = vunpack.c.l.b16 %v275
      %v404 = vunpack.c.l.b16 %v276
      %v405 = vunpack.c.l.b16 %v277
      %v406 = vunpack.c.l.b16 %v278
      %v407 = vunpack.c.l.b16 %v279
      %v408 = vunpack.c.l.b16 %v280
      %v409 = vpack.c.b16 %v394, %v393
      %v410 = vpack.c.b16 %v396, %v395
      %v411 = vpack.c.b16 %v398, %v397
      %v412 = vpack.c.b16 %v400, %v399
      %v413 = vpack.c.b16 %v402, %v401
      %v414 = vpack.c.b16 %v404, %v403
      %v415 = vpack.c.b16 %v406, %v405
      %v416 = vpack.c.b16 %v408, %v407
      %425 = vmatpush.bf16.msra.mxu0 %v416
      %426 = vmatpush.bf16.msra.mxu0 %v415
      %427 = vmatpush.bf16.msra.mxu0 %v414
      %428 = vmatpush.bf16.msra.mxu0 %v413
      %429 = vmatpush.bf16.msra.mxu0 %v412
      %430 = vmatpush.bf16.msra.mxu0 %v411
      %431 = vmatpush.bf16.msra.mxu0 %v410
      %432 = vmatpush.bf16.msra.mxu0 %v409
      %433 = vmatmul.bf16.gmra.mxu0 %v345
      %v434 = vpop.f32.mrf.mxu0
      %v435 = vadd.f32 0.0, %v434
      %v436 = vpop.f32.mrf.mxu0
      %v437 = vadd.f32 0.0, %v436
      %438 = vmatmul.bf16.gmra.mxu0 %v346
      %v439 = vpop.f32.mrf.mxu0
      %v440 = vadd.f32 0.0, %v439
      %v441 = vpop.f32.mrf.mxu0
      %v442 = vadd.f32 0.0, %v441
      %443 = vmatmul.bf16.gmra.mxu0 %v347
      %v444 = vpop.f32.mrf.mxu0
      %v445 = vadd.f32 0.0, %v444
      %v446 = vpop.f32.mrf.mxu0
      %v447 = vadd.f32 0.0, %v446
      %448 = vmatmul.bf16.gmra.mxu0 %v348
      %v449 = vpop.f32.mrf.mxu0
      %v450 = vadd.f32 0.0, %v449
      %v451 = vpop.f32.mrf.mxu0
      %v452 = vadd.f32 0.0, %v451
      %453 = vmatmul.bf16.gmra.mxu0 %v349
      %v454 = vpop.f32.mrf.mxu0
      %v455 = vadd.f32 0.0, %v454
      %v456 = vpop.f32.mrf.mxu0
      %v457 = vadd.f32 0.0, %v456
      %458 = vmatmul.bf16.gmra.mxu0 %v350
      %v459 = vpop.f32.mrf.mxu0
      %v460 = vadd.f32 0.0, %v459
      %v461 = vpop.f32.mrf.mxu0
      %v462 = vadd.f32 0.0, %v461
      %463 = vmatmul.bf16.gmra.mxu0 %v351
      %v464 = vpop.f32.mrf.mxu0
      %v465 = vadd.f32 0.0, %v464
      %v466 = vpop.f32.mrf.mxu0
      %v467 = vadd.f32 0.0, %v466
      %468 = vmatmul.bf16.gmra.mxu0 %v352
      %v469 = vpop.f32.mrf.mxu0
      %v470 = vadd.f32 0.0, %v469
      %v471 = vpop.f32.mrf.mxu0
      %v472 = vadd.f32 0.0, %v471
      %473 = vmatmul.bf16.gmra.mxu0 %v353
      %v474 = vpop.f32.mrf.mxu0
      %v475 = vadd.f32 0.0, %v474
      %v476 = vpop.f32.mrf.mxu0
      %v477 = vadd.f32 0.0, %v476
      %478 = vmatmul.bf16.gmra.mxu0 %v354
      %v479 = vpop.f32.mrf.mxu0
      %v480 = vadd.f32 0.0, %v479
      %v481 = vpop.f32.mrf.mxu0
      %v482 = vadd.f32 0.0, %v481
      %483 = vmatmul.bf16.gmra.mxu0 %v355
      %v484 = vpop.f32.mrf.mxu0
      %v485 = vadd.f32 0.0, %v484
      %v486 = vpop.f32.mrf.mxu0
      %v487 = vadd.f32 0.0, %v486
      %488 = vmatmul.bf16.gmra.mxu0 %v356
      %v489 = vpop.f32.mrf.mxu0
      %v490 = vadd.f32 0.0, %v489
      %v491 = vpop.f32.mrf.mxu0
      %v492 = vadd.f32 0.0, %v491
      %493 = vmatmul.bf16.gmra.mxu0 %v357
      %v494 = vpop.f32.mrf.mxu0
      %v495 = vadd.f32 0.0, %v494
      %v496 = vpop.f32.mrf.mxu0
      %v497 = vadd.f32 0.0, %v496
      %498 = vmatmul.bf16.gmra.mxu0 %v358
      %v499 = vpop.f32.mrf.mxu0
      %v500 = vadd.f32 0.0, %v499
      %v501 = vpop.f32.mrf.mxu0
      %v502 = vadd.f32 0.0, %v501
      %503 = vmatmul.bf16.gmra.mxu0 %v359
      %v504 = vpop.f32.mrf.mxu0
      %v505 = vadd.f32 0.0, %v504
      %v506 = vpop.f32.mrf.mxu0
      %v507 = vadd.f32 0.0, %v506
      %508 = vmatmul.bf16.gmra.mxu0 %v360
      %v509 = vpop.f32.mrf.mxu0
      %v510 = vadd.f32 0.0, %v509
      %v511 = vpop.f32.mrf.mxu0
      %v512 = vadd.f32 0.0, %v511
      %513 = vdwg.mxu0
      %v514 = vld [vmem:[%s222] sm:$0xff]
      %v515 = vld [vmem:[%s222 + $0x8] sm:$0xff]
      %v516 = vld [vmem:[%s222 + $0x10] sm:$0xff]
      %v517 = vld [vmem:[%s222 + $0x18] sm:$0xff]
      %v518 = vld [vmem:[%s222 + $0x20] sm:$0xff]
      %v519 = vld [vmem:[%s222 + $0x28] sm:$0xff]
      %v520 = vld [vmem:[%s222 + $0x30] sm:$0xff]
      %v521 = vld [vmem:[%s222 + $0x38] sm:$0xff]
      %v522 = vld [vmem:[%s222 + $0x40] sm:$0xff]
      %v523 = vld [vmem:[%s222 + $0x48] sm:$0xff]
      %v524 = vld [vmem:[%s222 + $0x50] sm:$0xff]
      %v525 = vld [vmem:[%s222 + $0x58] sm:$0xff]
      %v526 = vld [vmem:[%s222 + $0x60] sm:$0xff]
      %v527 = vld [vmem:[%s222 + $0x68] sm:$0xff]
      %v528 = vld [vmem:[%s222 + $0x70] sm:$0xff]
      %v529 = vld [vmem:[%s222 + $0x78] sm:$0xff]
      %v530 = vld [vmem:[%s222 + $0x80] sm:$0xff]
      %v531 = vld [vmem:[%s222 + $0x88] sm:$0xff]
      %v532 = vld [vmem:[%s222 + $0x90] sm:$0xff]
      %v533 = vld [vmem:[%s222 + $0x98] sm:$0xff]
      %v534 = vld [vmem:[%s222 + $0xa0] sm:$0xff]
      %v535 = vld [vmem:[%s222 + $0xa8] sm:$0xff]
      %v536 = vld [vmem:[%s222 + $0xb0] sm:$0xff]
      %v537 = vld [vmem:[%s222 + $0xb8] sm:$0xff]
      %v538 = vld [vmem:[%s222 + $0xc0] sm:$0xff]
      %v539 = vld [vmem:[%s222 + $0xc8] sm:$0xff]
      %v540 = vld [vmem:[%s222 + $0xd0] sm:$0xff]
      %v541 = vld [vmem:[%s222 + $0xd8] sm:$0xff]
      %v542 = vld [vmem:[%s222 + $0xe0] sm:$0xff]
      %v543 = vld [vmem:[%s222 + $0xe8] sm:$0xff]
      %v544 = vld [vmem:[%s222 + $0xf0] sm:$0xff]
      %v545 = vld [vmem:[%s222 + $0xf8] sm:$0xff]
      %547 = vset.pattern.permute.xlu0 0
      %548 = vperm.xlu0 %547, %v514
      %v549 = vpop.permute.xlu0 %548
      %552 = vset.pattern.permute.xlu0 0
      %553 = vperm.xlu0 %552, %v515
      %v554 = vpop.permute.xlu0 %553
      %557 = vset.pattern.permute.xlu0 0
      %558 = vperm.xlu0 %557, %v516
      %v559 = vpop.permute.xlu0 %558
      %562 = vset.pattern.permute.xlu0 0
      %563 = vperm.xlu0 %562, %v517
      %v564 = vpop.permute.xlu0 %563
      %567 = vset.pattern.permute.xlu0 0
      %568 = vperm.xlu0 %567, %v518
      %v569 = vpop.permute.xlu0 %568
      %572 = vset.pattern.permute.xlu0 0
      %573 = vperm.xlu0 %572, %v519
      %v574 = vpop.permute.xlu0 %573
      %577 = vset.pattern.permute.xlu0 0
      %578 = vperm.xlu0 %577, %v520
      %v579 = vpop.permute.xlu0 %578
      %582 = vset.pattern.permute.xlu0 0
      %583 = vperm.xlu0 %582, %v521
      %v584 = vpop.permute.xlu0 %583
      %587 = vset.pattern.permute.xlu0 0
      %588 = vperm.xlu0 %587, %v522
      %v589 = vpop.permute.xlu0 %588
      %592 = vset.pattern.permute.xlu0 0
      %593 = vperm.xlu0 %592, %v523
      %v594 = vpop.permute.xlu0 %593
      %597 = vset.pattern.permute.xlu0 0
      %598 = vperm.xlu0 %597, %v524
      %v599 = vpop.permute.xlu0 %598
      %602 = vset.pattern.permute.xlu0 0
      %603 = vperm.xlu0 %602, %v525
      %v604 = vpop.permute.xlu0 %603
      %607 = vset.pattern.permute.xlu0 0
      %608 = vperm.xlu0 %607, %v526
      %v609 = vpop.permute.xlu0 %608
      %612 = vset.pattern.permute.xlu0 0
      %613 = vperm.xlu0 %612, %v527
      %v614 = vpop.permute.xlu0 %613
      %617 = vset.pattern.permute.xlu0 0
      %618 = vperm.xlu0 %617, %v528
      %v619 = vpop.permute.xlu0 %618
      %622 = vset.pattern.permute.xlu0 0
      %623 = vperm.xlu0 %622, %v529
      %v624 = vpop.permute.xlu0 %623
      %627 = vset.pattern.permute.xlu0 0
      %628 = vperm.xlu0 %627, %v530
      %v629 = vpop.permute.xlu0 %628
      %632 = vset.pattern.permute.xlu0 0
      %633 = vperm.xlu0 %632, %v531
      %v634 = vpop.permute.xlu0 %633
      %637 = vset.pattern.permute.xlu0 0
      %638 = vperm.xlu0 %637, %v532
      %v639 = vpop.permute.xlu0 %638
      %642 = vset.pattern.permute.xlu0 0
      %643 = vperm.xlu0 %642, %v533
      %v644 = vpop.permute.xlu0 %643
      %647 = vset.pattern.permute.xlu0 0
      %648 = vperm.xlu0 %647, %v534
      %v649 = vpop.permute.xlu0 %648
      %652 = vset.pattern.permute.xlu0 0
      %653 = vperm.xlu0 %652, %v535
      %v654 = vpop.permute.xlu0 %653
      %657 = vset.pattern.permute.xlu0 0
      %658 = vperm.xlu0 %657, %v536
      %v659 = vpop.permute.xlu0 %658
      %662 = vset.pattern.permute.xlu0 0
      %663 = vperm.xlu0 %662, %v537
      %v664 = vpop.permute.xlu0 %663
      %667 = vset.pattern.permute.xlu0 0
      %668 = vperm.xlu0 %667, %v538
      %v669 = vpop.permute.xlu0 %668
      %672 = vset.pattern.permute.xlu0 0
      %673 = vperm.xlu0 %672, %v539
      %v674 = vpop.permute.xlu0 %673
      %677 = vset.pattern.permute.xlu0 0
      %678 = vperm.xlu0 %677, %v540
      %v679 = vpop.permute.xlu0 %678
      %682 = vset.pattern.permute.xlu0 0
      %683 = vperm.xlu0 %682, %v541
      %v684 = vpop.permute.xlu0 %683
      %687 = vset.pattern.permute.xlu0 0
      %688 = vperm.xlu0 %687, %v542
      %v689 = vpop.permute.xlu0 %688
      %692 = vset.pattern.permute.xlu0 0
      %693 = vperm.xlu0 %692, %v543
      %v694 = vpop.permute.xlu0 %693
      %697 = vset.pattern.permute.xlu0 0
      %698 = vperm.xlu0 %697, %v544
      %v699 = vpop.permute.xlu0 %698
      %702 = vset.pattern.permute.xlu0 0
      %703 = vperm.xlu0 %702, %v545
      %v704 = vpop.permute.xlu0 %703
      %v706 = vmul.f32 %v435, %v549
      %v707 = vmul.f32 %v437, %v554
      %v708 = vmul.f32 %v440, %v559
      %v709 = vmul.f32 %v442, %v564
      %v710 = vmul.f32 %v445, %v569
      %v711 = vmul.f32 %v447, %v574
      %v712 = vmul.f32 %v450, %v579
      %v713 = vmul.f32 %v452, %v584
      %v714 = vmul.f32 %v455, %v589
      %v715 = vmul.f32 %v457, %v594
      %v716 = vmul.f32 %v460, %v599
      %v717 = vmul.f32 %v462, %v604
      %v718 = vmul.f32 %v465, %v609
      %v719 = vmul.f32 %v467, %v614
      %v720 = vmul.f32 %v470, %v619
      %v721 = vmul.f32 %v472, %v624
      %v722 = vmul.f32 %v475, %v629
      %v723 = vmul.f32 %v477, %v634
      %v724 = vmul.f32 %v480, %v639
      %v725 = vmul.f32 %v482, %v644
      %v726 = vmul.f32 %v485, %v649
      %v727 = vmul.f32 %v487, %v654
      %v728 = vmul.f32 %v490, %v659
      %v729 = vmul.f32 %v492, %v664
      %v730 = vmul.f32 %v495, %v669
      %v731 = vmul.f32 %v497, %v674
      %v732 = vmul.f32 %v500, %v679
      %v733 = vmul.f32 %v502, %v684
      %v734 = vmul.f32 %v505, %v689
      %v735 = vmul.f32 %v507, %v694
      %v736 = vmul.f32 %v510, %v699
      %v737 = vmul.f32 %v512, %v704
      %v738 = vpack.c.bf16 %v706, %v706
      %v739 = vpack.c.bf16 %v707, %v707
      %v740 = vpack.c.bf16 %v708, %v708
      %v741 = vpack.c.bf16 %v709, %v709
      %v742 = vpack.c.bf16 %v710, %v710
      %v743 = vpack.c.bf16 %v711, %v711
      %v744 = vpack.c.bf16 %v712, %v712
      %v745 = vpack.c.bf16 %v713, %v713
      %v746 = vpack.c.bf16 %v714, %v714
      %v747 = vpack.c.bf16 %v715, %v715
      %v748 = vpack.c.bf16 %v716, %v716
      %v749 = vpack.c.bf16 %v717, %v717
      %v750 = vpack.c.bf16 %v718, %v718
      %v751 = vpack.c.bf16 %v719, %v719
      %v752 = vpack.c.bf16 %v720, %v720
      %v753 = vpack.c.bf16 %v721, %v721
      %v754 = vpack.c.bf16 %v722, %v722
      %v755 = vpack.c.bf16 %v723, %v723
      %v756 = vpack.c.bf16 %v724, %v724
      %v757 = vpack.c.bf16 %v725, %v725
      %v758 = vpack.c.bf16 %v726, %v726
      %v759 = vpack.c.bf16 %v727, %v727
      %v760 = vpack.c.bf16 %v728, %v728
      %v761 = vpack.c.bf16 %v729, %v729
      %v762 = vpack.c.bf16 %v730, %v730
      %v763 = vpack.c.bf16 %v731, %v731
      %v764 = vpack.c.bf16 %v732, %v732
      %v765 = vpack.c.bf16 %v733, %v733
      %v766 = vpack.c.bf16 %v734, %v734
      %v767 = vpack.c.bf16 %v735, %v735
      %v768 = vpack.c.bf16 %v736, %v736
      %v769 = vpack.c.bf16 %v737, %v737
      %770 = vst [vmem:[%s231] sm:$0xf] %v738
      %771 = vst [vmem:[%s231 + $0x4] sm:$0xf] %v739
      %772 = vst [vmem:[%s231 + $0x8] sm:$0xf] %v740
      %773 = vst [vmem:[%s231 + $0xc] sm:$0xf] %v741
      %774 = vst [vmem:[%s231 + $0x10] sm:$0xf] %v742
      %775 = vst [vmem:[%s231 + $0x14] sm:$0xf] %v743
      %776 = vst [vmem:[%s231 + $0x18] sm:$0xf] %v744
      %777 = vst [vmem:[%s231 + $0x1c] sm:$0xf] %v745
      %778 = vst [vmem:[%s231 + $0x20] sm:$0xf] %v746
      %779 = vst [vmem:[%s231 + $0x24] sm:$0xf] %v747
      %780 = vst [vmem:[%s231 + $0x28] sm:$0xf] %v748
      %781 = vst [vmem:[%s231 + $0x2c] sm:$0xf] %v749
      %782 = vst [vmem:[%s231 + $0x30] sm:$0xf] %v750
      %783 = vst [vmem:[%s231 + $0x34] sm:$0xf] %v751
      %784 = vst [vmem:[%s231 + $0x38] sm:$0xf] %v752
      %785 = vst [vmem:[%s231 + $0x3c] sm:$0xf] %v753
      %786 = vst [vmem:[%s231 + $0x40] sm:$0xf] %v754
      %787 = vst [vmem:[%s231 + $0x44] sm:$0xf] %v755
      %788 = vst [vmem:[%s231 + $0x48] sm:$0xf] %v756
      %789 = vst [vmem:[%s231 + $0x4c] sm:$0xf] %v757
      %790 = vst [vmem:[%s231 + $0x50] sm:$0xf] %v758
      %791 = vst [vmem:[%s231 + $0x54] sm:$0xf] %v759
      %792 = vst [vmem:[%s231 + $0x58] sm:$0xf] %v760
      %793 = vst [vmem:[%s231 + $0x5c] sm:$0xf] %v761
      %794 = vst [vmem:[%s231 + $0x60] sm:$0xf] %v762
      %795 = vst [vmem:[%s231 + $0x64] sm:$0xf] %v763
      %796 = vst [vmem:[%s231 + $0x68] sm:$0xf] %v764
      %797 = vst [vmem:[%s231 + $0x6c] sm:$0xf] %v765
      %798 = vst [vmem:[%s231 + $0x70] sm:$0xf] %v766
      %799 = vst [vmem:[%s231 + $0x74] sm:$0xf] %v767
      %800 = vst [vmem:[%s231 + $0x78] sm:$0xf] %v768
      %801 = vst [vmem:[%s231 + $0x7c] sm:$0xf] %v769
      %s802 = smul.u32 32, %s18
      %p803 = scmp.lt.s32.totalorder %s802, 63
      %s804 = scalar_select %p803, %s802, 63
      %p805 = scmp.lt.s32.totalorder %s19, 0
      %s806 = scalar_select %p805, %s19, 0
      %s807 = sadd.s32 %s806, %s804
      %s808 = smul.addr %s807, 4
      %s809 = scalar_lea.vmem %s3, %s808
      // Predicated region
      $region33: #{_lambda_.4} parent=31 // pred_check
        %p810 = pneg %p124
      $region34: #{_lambda_.4} parent=31 // pred_check_branch
        %812 = sbr.rel (%p810) target = $region36
      $region35: #{_lambda_.4} parent=31 // pred_region
        %s813 = smul.u32 32, %s18
      $region36: #{_lambda_.4} parent=31 // pred_fallthru
        _
    $region32: #{_lambda_.4} parent=5 // pred_fallthru
      _
    %p814 = scmp.le.s32.totalorder 2, %s9
    // Predicated region
    $region37: #{_lambda_.4} parent=5 // pred_check
      %p815 = pneg %p814
    $region38: #{_lambda_.4} parent=5 // pred_check_branch
      %817 = sbr.rel (%p815) target = $region40
    $region39: #{_lambda_.4} parent=5 // pred_region
      %s818 = ssub.s32 %s9, 2
      // Predicated region
      $region41: #{_lambda_.4} parent=39 // pred_check
        %p819 = pneg %p130
      $region42: #{_lambda_.4} parent=39 // pred_check_branch
        %821 = sbr.rel (%p819) target = $region44
      $region43: #{_lambda_.4} parent=39 // pred_region
        %s822 = smul.u32 32, %s20
        %p823 = scmp.lt.s32.totalorder %s822, 63
        %s824 = scalar_select %p823, %s822, 63
        %p825 = scmp.lt.s32.totalorder %s21, 0
        %s826 = scalar_select %p825, %s21, 0
        %s827 = sadd.s32 %s826, %s824
        %s828 = smul.addr %s827, 4
        %s829 = scalar_lea.vmem %s3, %s828
      $region44: #{_lambda_.4} parent=39 // pred_fallthru
        _
    $region40: #{_lambda_.4} parent=5 // pred_fallthru
      _
  $region6: #{_lambda_.4} parent=0 // loop_footer
    %s13 = sadd.s32 1, %s9
  $region7: #{_lambda_.4} parent=0 // loop_footer_branch
    %8 = sbr.rel target = $region3
  $region8: #{_lambda_.4} parent=0 // loop_exit
    _

// kernel: _lambda_.7
$region0: #{_lambda_.7}
  #allocation0 [shape = 'u32[]', space=smem, size = 0x4, offset = 0x4, fixed_abs, tag = 'smem constant byte address 0x4 - core index']
  #allocation1 [shape = 'u32[72,128]{1,0:T(1,128)}', space=vmem, size = 0x9000, scoped, tag = 'internal scratch']
  #allocation2 [shape = 'f32[256,128]{1,0:T(8,128)}', space=vmem, size = 0x20000, scoped, tag = 'scratch operand']
  %s0 = inlined_call_operand.vmem [shape: s8[512,512], index: 0, kind: input, shape index: {}]
  %s1 = inlined_call_operand.vmem [shape: bf16[512,128], index: 1, kind: input, shape index: {}]
  %s2 = inlined_call_operand.vmem [shape: f32[512,1], index: 2, kind: input, shape index: {}]
  %s3 = inlined_call_operand.vmem [shape: f32[1,128], index: 3, kind: input, shape index: {}]
  %s4 = inlined_call_operand.hbm [shape: f32[512,128], index: 4, kind: output, shape index: {}]
  %s5 = sld [smem:[#allocation0]]
  $region80: #{_lambda_.7} parent=0
    _
  %s7 = ssub.s32 1, %s5
  %s8 = scalar_select 0, %s7, %s5
  $region1: #{_lambda_.7} parent=0
    #allocation3 [shape = 'u8[131072]{0}', space=vmem, size = 0x20000, scoped, tag = 'input window, operand 0']
    #allocation4 [shape = 'u8[262144]{0}', space=vmem, size = 0x40000, scoped, tag = 'output window, operand 0']
    #allocation5 [shape = 's32[2]{0}', space=sflag, size = 0x8, scoped, tag = 'scoped memory for _lambda_.7']
    %9 = vsyncpa [#allocation5], 0
    %s10 = scalar_lea.sflag [#allocation5], 1
    %11 = vsyncpa %s10, 0
    loop: start=0, step=1, limit=6
    $region2: #{_lambda_.7} parent=1 // loop_pre_header
      _
    $region3: #{_lambda_.7} parent=1 // loop_header
      %s13 = sphi 0, %s17
      %p14 = scmp.ge.s32.totalorder %s13, 6
      %s20 = sphi 0, %s32
      %s21 = sphi 0, %s28
      %s22 = sphi 0, %s20
      %s23 = sphi 0, %s21
      %s24 = sphi 0, %s22
      %s25 = sphi 0, %s23
      %s37 = sphi 0, %s39
      %s40 = sphi 0, %s37
      %s41 = sphi 0, %s40
      %s57 = sphi 0, %s41
      %s63 = sphi 0, %s65
      %s66 = sphi 0, %s63
      %s67 = sphi 0, %s66
      %s83 = sphi 0, %s67
      %s89 = sphi 0, %s91
      %s92 = sphi 0, %s89
      %s93 = sphi 0, %s92
      %s109 = sphi 0, %s93
      %s113 = sphi 0, %s113
      %s115 = sphi 0, %s113
      %s116 = sphi 0, %s115
      %s130 = sphi 0, %s116
      %s136 = sphi 0, %s138
      %s139 = sphi 0, %s136
      %s140 = sphi 0, %s139
      %s156 = sphi 0, %s140
    $region4: #{_lambda_.7} parent=1 // loop_header_branch
      %16 = sbr.rel (%p14) target = $region8
    $region5: #{_lambda_.7} parent=1 // loop_body
      %s18 = ssub.s32 %s13, 1
      %s19 = ssub.s32 %s13, 2
      %s26 = sadd.s32 1, %s21
      %p27 = scmp.ge.s32.totalorder %s26, 2
      %s28 = scalar_select %p27, 0, %s26
      %s29 = sadd.s32 1, %s20
      %s30 = scalar_select %p27, %s29, %s20
      %p31 = scmp.ge.s32.totalorder %s30, 2
      %s32 = scalar_select %p31, 0, %s30
      %s33 = ssub.s32 %s20, %s32
      %s34 = ssub.s32 %s21, %s28
      %s35 = sor.u32 %s33, %s34
      %p36 = scmp.eq.s32.totalorder %s35, 0
      %s38 = sadd.s32 %s37, 1
      %s39 = scalar_select %p36, %s37, %s38
      %p42 = pneg %p36
      %p43 = scmp.eq.s32.totalorder %s13, 3
      %p44 = por %p42, %p43
      %p45 = scmp.ne.s32.totalorder %s37, %s40
      %p46 = scmp.eq.s32.totalorder %s13, 0
      %p47 = por %p45, %p46
      %p48 = scmp.ne.s32.totalorder %s37, %s40
      %p49 = scmp.eq.s32.totalorder %s18, 3
      %p50 = por %p48, %p49
      %p51 = scmp.ne.s32.totalorder %s40, %s41
      %p52 = scmp.eq.s32.totalorder %s18, 0
      %p53 = por %p51, %p52
      %p54 = scmp.ne.s32.totalorder %s40, %s41
      %p55 = scmp.eq.s32.totalorder %s19, 3
      %p56 = por %p54, %p55
      %p58 = scmp.ne.s32.totalorder %s41, %s57
      %p59 = scmp.eq.s32.totalorder %s19, 0
      %p60 = por %p58, %p59
      %s61 = ssub.s32 %s21, %s28
      %p62 = scmp.eq.s32.totalorder %s61, 0
      %s64 = sadd.s32 %s63, 1
      %s65 = scalar_select %p62, %s63, %s64
      %p68 = pneg %p62
      %p69 = scmp.eq.s32.totalorder %s13, 3
      %p70 = por %p68, %p69
      %p71 = scmp.ne.s32.totalorder %s63, %s66
      %p72 = scmp.eq.s32.totalorder %s13, 0
      %p73 = por %p71, %p72
      %p74 = scmp.ne.s32.totalorder %s63, %s66
      %p75 = scmp.eq.s32.totalorder %s18, 3
      %p76 = por %p74, %p75
      %p77 = scmp.ne.s32.totalorder %s66, %s67
      %p78 = scmp.eq.s32.totalorder %s18, 0
      %p79 = por %p77, %p78
      %p80 = scmp.ne.s32.totalorder %s66, %s67
      %p81 = scmp.eq.s32.totalorder %s19, 3
      %p82 = por %p80, %p81
      %p84 = scmp.ne.s32.totalorder %s67, %s83
      %p85 = scmp.eq.s32.totalorder %s19, 0
      %p86 = por %p84, %p85
      %s87 = ssub.s32 %s20, %s32
      %p88 = scmp.eq.s32.totalorder %s87, 0
      %s90 = sadd.s32 %s89, 1
      %s91 = scalar_select %p88, %s89, %s90
      %p94 = pneg %p88
      %p95 = scmp.eq.s32.totalorder %s13, 3
      %p96 = por %p94, %p95
      %p97 = scmp.ne.s32.totalorder %s89, %s92
      %p98 = scmp.eq.s32.totalorder %s13, 0
      %p99 = por %p97, %p98
      %p100 = scmp.ne.s32.totalorder %s89, %s92
      %p101 = scmp.eq.s32.totalorder %s18, 3
      %p102 = por %p100, %p101
      %p103 = scmp.ne.s32.totalorder %s92, %s93
      %p104 = scmp.eq.s32.totalorder %s18, 0
      %p105 = por %p103, %p104
      %p106 = scmp.ne.s32.totalorder %s92, %s93
      %p107 = scmp.eq.s32.totalorder %s19, 3
      %p108 = por %p106, %p107
      %p110 = scmp.ne.s32.totalorder %s93, %s109
      %p111 = scmp.eq.s32.totalorder %s19, 0
      %p112 = por %p110, %p111
      %s114 = sadd.s32 %s113, 1
      %p117 = scmp.eq.s32.totalorder %s13, 3
      %p118 = scmp.ne.s32.totalorder %s113, %s115
      %p119 = scmp.eq.s32.totalorder %s13, 0
      %p120 = por %p118, %p119
      %p121 = scmp.ne.s32.totalorder %s113, %s115
      %p122 = scmp.eq.s32.totalorder %s18, 3
      %p123 = por %p121, %p122
      %p124 = scmp.ne.s32.totalorder %s115, %s116
      %p125 = scmp.eq.s32.totalorder %s18, 0
      %p126 = por %p124, %p125
      %p127 = scmp.ne.s32.totalorder %s115, %s116
      %p128 = scmp.eq.s32.totalorder %s19, 3
      %p129 = por %p127, %p128
      %p131 = scmp.ne.s32.totalorder %s116, %s130
      %p132 = scmp.eq.s32.totalorder %s19, 0
      %p133 = por %p131, %p132
      %s134 = ssub.s32 %s20, %s32
      %p135 = scmp.eq.s32.totalorder %s134, 0
      %s137 = sadd.s32 %s136, 1
      %s138 = scalar_select %p135, %s136, %s137
      %p141 = pneg %p135
      %p142 = scmp.eq.s32.totalorder %s13, 3
      %p143 = por %p141, %p142
      %p144 = scmp.ne.s32.totalorder %s136, %s139
      %p145 = scmp.eq.s32.totalorder %s13, 0
      %p146 = por %p144, %p145
      %p147 = scmp.ne.s32.totalorder %s136, %s139
      %p148 = scmp.eq.s32.totalorder %s18, 3
      %p149 = por %p147, %p148
      %p150 = scmp.ne.s32.totalorder %s139, %s140
      %p151 = scmp.eq.s32.totalorder %s18, 0
      %p152 = por %p150, %p151
      %p153 = scmp.ne.s32.totalorder %s139, %s140
      %p154 = scmp.eq.s32.totalorder %s19, 3
      %p155 = por %p153, %p154
      %p157 = scmp.ne.s32.totalorder %s140, %s156
      %p158 = scmp.eq.s32.totalorder %s19, 0
      %p159 = por %p157, %p158
      %p160 = scmp.le.s32.totalorder 1, %s13
      %p161 = scmp.lt.s32.totalorder %s13, 5
      %p162 = pnand %p160, %p161
      %p163 = pneg %p162
      // Predicated region
      $region9: #{_lambda_.7} parent=5 // pred_check
        _
      $region10: #{_lambda_.7} parent=5 // pred_check_branch
        %165 = sbr.rel (%p162) target = $region12
      $region11: #{_lambda_.7} parent=5 // pred_region
        %s166 = ssub.s32 %s13, 1
        // Predicated region
        $region13: #{_lambda_.7} parent=11 // pred_check
          %p167 = pneg %p126
        $region14: #{_lambda_.7} parent=11 // pred_check_branch
          %169 = sbr.rel (%p167) target = $region16
        $region15: #{_lambda_.7} parent=11 // pred_region
          _
        $region16: #{_lambda_.7} parent=11 // pred_fallthru
          _
      $region12: #{_lambda_.7} parent=5 // pred_fallthru
        _
      %p170 = scmp.lt.s32.totalorder %s13, 4
      // Predicated region
      $region17: #{_lambda_.7} parent=5 // pred_check
        %p171 = pneg %p170
      $region18: #{_lambda_.7} parent=5 // pred_check_branch
        %173 = sbr.rel (%p171) target = $region20
      $region19: #{_lambda_.7} parent=5 // pred_region
        // Predicated region
        $region21: #{_lambda_.7} parent=19 // pred_check
          %p174 = pneg %p47
        $region22: #{_lambda_.7} parent=19 // pred_check_branch
          %176 = sbr.rel (%p174) target = $region24
        $region23: #{_lambda_.7} parent=19 // pred_region
          %s177 = sand.u32 %s37, 1
          %s178 = sand.u32 %s37, 1
          %s179 = smul.addr %s178, 128
          %s180 = scalar_lea.vmem [#allocation3], %s179
          %s181 = smul.u32 8, %s20
          %s182 = smul.u32 2, %s21
          %s183 = smul.addr %s181, 4
          %s184 = sadd.s32 %s182, %s183
          %s185 = smul.addr %s184, 8
          %s186 = scalar_lea.vmem %s0, %s185
          // Predicated region
          $region25: #{_lambda_.7} parent=23 // pred_check
            _
          $region26: #{_lambda_.7} parent=23 // pred_check_branch
            %188 = sbr.rel (0) target = $region28
          $region27: #{_lambda_.7} parent=23 // pred_region
            // Predicated region
            $region29: #{_lambda_.7} parent=27 // pred_check
              _
            $region30: #{_lambda_.7} parent=27 // pred_check_branch
              %190 = sbr.rel (0) target = $region32
            $region31: #{_lambda_.7} parent=27 // pred_region
              loop: start=0, step=1, limit=1
              $region33: #{_lambda_.7} parent=31 // loop_pre_header
                _
              $region34: #{_lambda_.7} parent=31 // loop_header
                %s192 = sphi 0, %s196
                %p193 = scmp.ge.s32.totalorder %s192, 1
                %s197 = sphi %s186, %s186
                %s198 = sphi %s180, %s180
              $region35: #{_lambda_.7} parent=31 // loop_header_branch
                %195 = sbr.rel (%p193) target = $region39
              $region36: #{_lambda_.7} parent=31 // loop_body
                %v199 = vld [vmem:[%s197] sm:$0xff]
                %200 = vst [vmem:[%s198] sm:$0xff] %v199
                %v201 = vld [vmem:[%s197 + $0x8] sm:$0xff]
                %202 = vst [vmem:[%s198 + $0x8] sm:$0xff] %v201
                %v203 = vld [vmem:[%s197 + $0x20] sm:$0xff]
                %204 = vst [vmem:[%s198 + $0x10] sm:$0xff] %v203
                %v205 = vld [vmem:[%s197 + $0x28] sm:$0xff]
                %206 = vst [vmem:[%s198 + $0x18] sm:$0xff] %v205
                %v207 = vld [vmem:[%s197 + $0x40] sm:$0xff]
                %208 = vst [vmem:[%s198 + $0x20] sm:$0xff] %v207
                %v209 = vld [vmem:[%s197 + $0x48] sm:$0xff]
                %210 = vst [vmem:[%s198 + $0x28] sm:$0xff] %v209
                %v211 = vld [vmem:[%s197 + $0x60] sm:$0xff]
                %212 = vst [vmem:[%s198 + $0x30] sm:$0xff] %v211
                %v213 = vld [vmem:[%s197 + $0x68] sm:$0xff]
                %214 = vst [vmem:[%s198 + $0x38] sm:$0xff] %v213
                %v215 = vld [vmem:[%s197 + $0x80] sm:$0xff]
                %216 = vst [vmem:[%s198 + $0x40] sm:$0xff] %v215
                %v217 = vld [vmem:[%s197 + $0x88] sm:$0xff]
                %218 = vst [vmem:[%s198 + $0x48] sm:$0xff] %v217
                %v219 = vld [vmem:[%s197 + $0xa0] sm:$0xff]
                %220 = vst [vmem:[%s198 + $0x50] sm:$0xff] %v219
                %v221 = vld [vmem:[%s197 + $0xa8] sm:$0xff]
                %222 = vst [vmem:[%s198 + $0x58] sm:$0xff] %v221
                %v223 = vld [vmem:[%s197 + $0xc0] sm:$0xff]
                %224 = vst [vmem:[%s198 + $0x60] sm:$0xff] %v223
                %v225 = vld [vmem:[%s197 + $0xc8] sm:$0xff]
                %226 = vst [vmem:[%s198 + $0x68] sm:$0xff] %v225
                %v227 = vld [vmem:[%s197 + $0xe0] sm:$0xff]
                %228 = vst [vmem:[%s198 + $0x70] sm:$0xff] %v227
                %v229 = vld [vmem:[%s197 + $0xe8] sm:$0xff]
                %230 = vst [vmem:[%s198 + $0x78] sm:$0xff] %v229
              $region37: #{_lambda_.7} parent=31 // loop_footer
                %s196 = sadd.s32 1, %s192
              $region38: #{_lambda_.7} parent=31 // loop_footer_branch
                %191 = sbr.rel target = $region34
              $region39: #{_lambda_.7} parent=31 // loop_exit
                _
            $region32: #{_lambda_.7} parent=27 // pred_fallthru
              _
            // Predicated region
            $region40: #{_lambda_.7} parent=27 // pred_check
              _
            $region41: #{_lambda_.7} parent=27 // pred_check_branch
              %232 = sbr.rel target = $region43
            $region42: #{_lambda_.7} parent=27 // pred_region
              _
            $region43: #{_lambda_.7} parent=27 // pred_fallthru
              _
          $region28: #{_lambda_.7} parent=23 // pred_fallthru
            _
          %233 = vnop
        $region24: #{_lambda_.7} parent=19 // pred_fallthru
          _
        // Predicated region
        $region44: #{_lambda_.7} parent=19 // pred_check
          %p234 = pneg %p73
        $region45: #{_lambda_.7} parent=19 // pred_check_branch
          %236 = sbr.rel (%p234) target = $region47
        $region46: #{_lambda_.7} parent=19 // pred_region
          %s237 = smul.u32 32, %s21
          %p238 = scmp.lt.s32.totalorder %s237, 63
          %s239 = scalar_select %p238, %s237, 63
          %s240 = smul.addr %s239, 4
          %s241 = scalar_lea.vmem %s1, %s240
          %s242 = smul.u32 32, %s21
        $region47: #{_lambda_.7} parent=19 // pred_fallthru
          _
        // Predicated region
        $region48: #{_lambda_.7} parent=19 // pred_check
          %p243 = pneg %p99
        $region49: #{_lambda_.7} parent=19 // pred_check_branch
          %245 = sbr.rel (%p243) target = $region51
        $region50: #{_lambda_.7} parent=19 // pred_region
          %s246 = smul.u32 32, %s20
          %p247 = scmp.lt.s32.totalorder %s246, 63
          %s248 = scalar_select %p247, %s246, 63
          %s249 = smul.addr %s248, 8
          %s250 = scalar_lea.vmem %s2, %s249
          %s251 = smul.u32 32, %s20
        $region51: #{_lambda_.7} parent=19 // pred_fallthru
          _
      $region20: #{_lambda_.7} parent=5 // pred_fallthru
        _
      %p252 = scmp.le.s32.totalorder 1, %s13
      %p253 = scmp.lt.s32.totalorder %s13, 5
      %p254 = pnand %p252, %p253
      %p255 = pneg %p254
      // Predicated region
      $region52: #{_lambda_.7} parent=5 // pred_check
        _
      $region53: #{_lambda_.7} parent=5 // pred_check_branch
        %257 = sbr.rel (%p254) target = $region55
      $region54: #{_lambda_.7} parent=5 // pred_region
        %s258 = ssub.s32 %s13, 1
        %s259 = sand.u32 %s40, 1
        %s260 = sand.u32 %s40, 1
        %s261 = smul.addr %s260, 128
        %s262 = scalar_lea.vmem [#allocation3], %s261
        // Predicated region
        $region56: #{_lambda_.7} parent=54 // pred_check
          %p263 = pneg %p53
        $region57: #{_lambda_.7} parent=54 // pred_check_branch
          %265 = sbr.rel (%p263) target = $region59
        $region58: #{_lambda_.7} parent=54 // pred_region
          _
        $region59: #{_lambda_.7} parent=54 // pred_fallthru
          _
        %s266 = sand.u32 %s40, 1
        %s267 = sand.u32 %s40, 1
        %s268 = smul.addr %s267, 128
        %s269 = scalar_lea.vmem [#allocation3], %s268
        %p270 = pneg %p53
        %p271 = pneg %p50
        %s272 = smul.u32 32, %s23
        %p273 = scmp.lt.s32.totalorder %s272, 63
        %s274 = scalar_select %p273, %s272, 63
        %s275 = smul.addr %s274, 4
        %s276 = scalar_lea.vmem %s1, %s275
        %p277 = pneg %p79
        %p278 = pneg %p76
        %s279 = smul.u32 32, %s22
        %p280 = scmp.lt.s32.totalorder %s279, 63
        %s281 = scalar_select %p280, %s279, 63
        %s282 = smul.addr %s281, 8
        %s283 = scalar_lea.vmem %s2, %s282
        %p284 = pneg %p105
        %p285 = pneg %p102
        %p286 = pneg %p126
        %p287 = pneg %p123
        %p288 = pneg %p152
        %p289 = pneg %p149
        %s290 = sand.u32 %s139, 1
        %s291 = scalar_lea.sflag [#allocation5], %s290
        %s292 = sand.u32 %s139, 1
        %s293 = smul.addr %s292, 256
        %s294 = scalar_lea.vmem [#allocation4], %s293
        %s295 = smul.u32 8, %s22
        %s296 = smul.u32 2, %s23
        %s297 = smul.u32 32, %s23
        %p298 = scmp.lt.s32.totalorder %s297, 63
        %s299 = scalar_select %p298, %s297, 63
        %s300 = smul.addr %s299, 4
        %s301 = scalar_lea.vmem %s1, %s300
        %s302 = smul.u32 32, %s23
        %s303 = smul.u32 32, %s22
        %p304 = scmp.lt.s32.totalorder %s303, 63
        %s305 = scalar_select %p304, %s303, 63
        %s306 = smul.addr %s305, 8
        %s307 = scalar_lea.vmem %s2, %s306
        %s308 = smul.u32 32, %s22
        %s309 = smul.u32 32, %s22
        %p310 = scmp.eq.s32.totalorder %s23, 0
        // Predicated region
        $region60: #{_lambda_.7} parent=54 // pred_check
          %p311 = pneg %p310
        $region61: #{_lambda_.7} parent=54 // pred_check_branch
          %313 = sbr.rel (%p311) target = $region63
        $region62: #{_lambda_.7} parent=54 // pred_region
          %314 = vst [vmem:[#allocation2] sm:$0xff] 0.0
          %315 = vst [vmem:[#allocation2 + $0x8] sm:$0xff] 0.0
          %316 = vst [vmem:[#allocation2 + $0x10] sm:$0xff] 0.0
          %317 = vst [vmem:[#allocation2 + $0x18] sm:$0xff] 0.0
          %318 = vst [vmem:[#allocation2 + $0x20] sm:$0xff] 0.0
          %319 = vst [vmem:[#allocation2 + $0x28] sm:$0xff] 0.0
          %320 = vst [vmem:[#allocation2 + $0x30] sm:$0xff] 0.0
          %321 = vst [vmem:[#allocation2 + $0x38] sm:$0xff] 0.0
          %322 = vst [vmem:[#allocation2 + $0x40] sm:$0xff] 0.0
          %323 = vst [vmem:[#allocation2 + $0x48] sm:$0xff] 0.0
          %324 = vst [vmem:[#allocation2 + $0x50] sm:$0xff] 0.0
          %325 = vst [vmem:[#allocation2 + $0x58] sm:$0xff] 0.0
          %326 = vst [vmem:[#allocation2 + $0x60] sm:$0xff] 0.0
          %327 = vst [vmem:[#allocation2 + $0x68] sm:$0xff] 0.0
          %328 = vst [vmem:[#allocation2 + $0x70] sm:$0xff] 0.0
          %329 = vst [vmem:[#allocation2 + $0x78] sm:$0xff] 0.0
          %330 = vst [vmem:[#allocation2 + $0x80] sm:$0xff] 0.0
          %331 = vst [vmem:[#allocation2 + $0x88] sm:$0xff] 0.0
          %332 = vst [vmem:[#allocation2 + $0x90] sm:$0xff] 0.0
          %333 = vst [vmem:[#allocation2 + $0x98] sm:$0xff] 0.0
          %334 = vst [vmem:[#allocation2 + $0xa0] sm:$0xff] 0.0
          %335 = vst [vmem:[#allocation2 + $0xa8] sm:$0xff] 0.0
          %336 = vst [vmem:[#allocation2 + $0xb0] sm:$0xff] 0.0
          %337 = vst [vmem:[#allocation2 + $0xb8] sm:$0xff] 0.0
          %338 = vst [vmem:[#allocation2 + $0xc0] sm:$0xff] 0.0
          %339 = vst [vmem:[#allocation2 + $0xc8] sm:$0xff] 0.0
          %340 = vst [vmem:[#allocation2 + $0xd0] sm:$0xff] 0.0
          %341 = vst [vmem:[#allocation2 + $0xd8] sm:$0xff] 0.0
          %342 = vst [vmem:[#allocation2 + $0xe0] sm:$0xff] 0.0
          %343 = vst [vmem:[#allocation2 + $0xe8] sm:$0xff] 0.0
          %344 = vst [vmem:[#allocation2 + $0xf0] sm:$0xff] 0.0
          %345 = vst [vmem:[#allocation2 + $0xf8] sm:$0xff] 0.0
        $region63: #{_lambda_.7} parent=54 // pred_fallthru
          _
        %v346 = vld [vmem:[%s262] sm:$0xff]
        %v347 = vld [vmem:[%s262 + $0x8] sm:$0xff]
        %v348 = vld [vmem:[%s262 + $0x10] sm:$0xff]
        %v349 = vld [vmem:[%s262 + $0x18] sm:$0xff]
        %v350 = vld [vmem:[%s262 + $0x20] sm:$0xff]
        %v351 = vld [vmem:[%s262 + $0x28] sm:$0xff]
        %v352 = vld [vmem:[%s262 + $0x30] sm:$0xff]
        %v353 = vld [vmem:[%s262 + $0x38] sm:$0xff]
        %v354 = vld [vmem:[%s262 + $0x40] sm:$0xff]
        %v355 = vld [vmem:[%s262 + $0x48] sm:$0xff]
        %v356 = vld [vmem:[%s262 + $0x50] sm:$0xff]
        %v357 = vld [vmem:[%s262 + $0x58] sm:$0xff]
        %v358 = vld [vmem:[%s262 + $0x60] sm:$0xff]
        %v359 = vld [vmem:[%s262 + $0x68] sm:$0xff]
        %v360 = vld [vmem:[%s262 + $0x70] sm:$0xff]
        %v361 = vld [vmem:[%s262 + $0x78] sm:$0xff]
        %v362 = vunpack.c.0.s8 %v346
        %v363 = vunpack.c.0.s8 %v347
        %v364 = vunpack.c.1.s8 %v346
        %v365 = vunpack.c.1.s8 %v347
        %v366 = vunpack.c.2.s8 %v346
        %v367 = vunpack.c.2.s8 %v347
        %v368 = vunpack.c.3.s8 %v346
        %v369 = vunpack.c.3.s8 %v347
        %v370 = vunpack.c.0.s8 %v348
        %v371 = vunpack.c.0.s8 %v349
        %v372 = vunpack.c.1.s8 %v348
        %v373 = vunpack.c.1.s8 %v349
        %v374 = vunpack.c.2.s8 %v348
        %v375 = vunpack.c.2.s8 %v349
        %v376 = vunpack.c.3.s8 %v348
        %v377 = vunpack.c.3.s8 %v349
        %v378 = vunpack.c.0.s8 %v350
        %v379 = vunpack.c.0.s8 %v351
        %v380 = vunpack.c.1.s8 %v350
        %v381 = vunpack.c.1.s8 %v351
        %v382 = vunpack.c.2.s8 %v350
        %v383 = vunpack.c.2.s8 %v351
        %v384 = vunpack.c.3.s8 %v350
        %v385 = vunpack.c.3.s8 %v351
        %v386 = vunpack.c.0.s8 %v352
        %v387 = vunpack.c.0.s8 %v353
        %v388 = vunpack.c.1.s8 %v352
        %v389 = vunpack.c.1.s8 %v353
        %v390 = vunpack.c.2.s8 %v352
        %v391 = vunpack.c.2.s8 %v353
        %v392 = vunpack.c.3.s8 %v352
        %v393 = vunpack.c.3.s8 %v353
        %v394 = vunpack.c.0.s8 %v354
        %v395 = vunpack.c.0.s8 %v355
        %v396 = vunpack.c.1.s8 %v354
        %v397 = vunpack.c.1.s8 %v355
        %v398 = vunpack.c.2.s8 %v354
        %v399 = vunpack.c.2.s8 %v355
        %v400 = vunpack.c.3.s8 %v354
        %v401 = vunpack.c.3.s8 %v355
        %v402 = vunpack.c.0.s8 %v356
        %v403 = vunpack.c.0.s8 %v357
        %v404 = vunpack.c.1.s8 %v356
        %v405 = vunpack.c.1.s8 %v357
        %v406 = vunpack.c.2.s8 %v356
        %v407 = vunpack.c.2.s8 %v357
        %v408 = vunpack.c.3.s8 %v356
        %v409 = vunpack.c.3.s8 %v357
        %v410 = vunpack.c.0.s8 %v358
        %v411 = vunpack.c.0.s8 %v359
        %v412 = vunpack.c.1.s8 %v358
        %v413 = vunpack.c.1.s8 %v359
        %v414 = vunpack.c.2.s8 %v358
        %v415 = vunpack.c.2.s8 %v359
        %v416 = vunpack.c.3.s8 %v358
        %v417 = vunpack.c.3.s8 %v359
        %v418 = vunpack.c.0.s8 %v360
        %v419 = vunpack.c.0.s8 %v361
        %v420 = vunpack.c.1.s8 %v360
        %v421 = vunpack.c.1.s8 %v361
        %v422 = vunpack.c.2.s8 %v360
        %v423 = vunpack.c.2.s8 %v361
        %v424 = vunpack.c.3.s8 %v360
        %v425 = vunpack.c.3.s8 %v361
        %v426 = vcvt.s32.f32 %v362
        %v427 = vcvt.s32.f32 %v363
        %v428 = vcvt.s32.f32 %v364
        %v429 = vcvt.s32.f32 %v365
        %v430 = vcvt.s32.f32 %v366
        %v431 = vcvt.s32.f32 %v367
        %v432 = vcvt.s32.f32 %v368
        %v433 = vcvt.s32.f32 %v369
        %v434 = vcvt.s32.f32 %v370
        %v435 = vcvt.s32.f32 %v371
        %v436 = vcvt.s32.f32 %v372
        %v437 = vcvt.s32.f32 %v373
        %v438 = vcvt.s32.f32 %v374
        %v439 = vcvt.s32.f32 %v375
        %v440 = vcvt.s32.f32 %v376
        %v441 = vcvt.s32.f32 %v377
        %v442 = vcvt.s32.f32 %v378
        %v443 = vcvt.s32.f32 %v379
        %v444 = vcvt.s32.f32 %v380
        %v445 = vcvt.s32.f32 %v381
        %v446 = vcvt.s32.f32 %v382
        %v447 = vcvt.s32.f32 %v383
        %v448 = vcvt.s32.f32 %v384
        %v449 = vcvt.s32.f32 %v385
        %v450 = vcvt.s32.f32 %v386
        %v451 = vcvt.s32.f32 %v387
        %v452 = vcvt.s32.f32 %v388
        %v453 = vcvt.s32.f32 %v389
        %v454 = vcvt.s32.f32 %v390
        %v455 = vcvt.s32.f32 %v391
        %v456 = vcvt.s32.f32 %v392
        %v457 = vcvt.s32.f32 %v393
        %v458 = vcvt.s32.f32 %v394
        %v459 = vcvt.s32.f32 %v395
        %v460 = vcvt.s32.f32 %v396
        %v461 = vcvt.s32.f32 %v397
        %v462 = vcvt.s32.f32 %v398
        %v463 = vcvt.s32.f32 %v399
        %v464 = vcvt.s32.f32 %v400
        %v465 = vcvt.s32.f32 %v401
        %v466 = vcvt.s32.f32 %v402
        %v467 = vcvt.s32.f32 %v403
        %v468 = vcvt.s32.f32 %v404
        %v469 = vcvt.s32.f32 %v405
        %v470 = vcvt.s32.f32 %v406
        %v471 = vcvt.s32.f32 %v407
        %v472 = vcvt.s32.f32 %v408
        %v473 = vcvt.s32.f32 %v409
        %v474 = vcvt.s32.f32 %v410
        %v475 = vcvt.s32.f32 %v411
        %v476 = vcvt.s32.f32 %v412
        %v477 = vcvt.s32.f32 %v413
        %v478 = vcvt.s32.f32 %v414
        %v479 = vcvt.s32.f32 %v415
        %v480 = vcvt.s32.f32 %v416
        %v481 = vcvt.s32.f32 %v417
        %v482 = vcvt.s32.f32 %v418
        %v483 = vcvt.s32.f32 %v419
        %v484 = vcvt.s32.f32 %v420
        %v485 = vcvt.s32.f32 %v421
        %v486 = vcvt.s32.f32 %v422
        %v487 = vcvt.s32.f32 %v423
        %v488 = vcvt.s32.f32 %v424
        %v489 = vcvt.s32.f32 %v425
        %v490 = vpack.c.bf16 %v428, %v426
        %v491 = vpack.c.bf16 %v429, %v427
        %v492 = vpack.c.bf16 %v432, %v430
        %v493 = vpack.c.bf16 %v433, %v431
        %v494 = vpack.c.bf16 %v436, %v434
        %v495 = vpack.c.bf16 %v437, %v435
        %v496 = vpack.c.bf16 %v440, %v438
        %v497 = vpack.c.bf16 %v441, %v439
        %v498 = vpack.c.bf16 %v444, %v442
        %v499 = vpack.c.bf16 %v445, %v443
        %v500 = vpack.c.bf16 %v448, %v446
        %v501 = vpack.c.bf16 %v449, %v447
        %v502 = vpack.c.bf16 %v452, %v450
        %v503 = vpack.c.bf16 %v453, %v451
        %v504 = vpack.c.bf16 %v456, %v454
        %v505 = vpack.c.bf16 %v457, %v455
        %v506 = vpack.c.bf16 %v460, %v458
        %v507 = vpack.c.bf16 %v461, %v459
        %v508 = vpack.c.bf16 %v464, %v462
        %v509 = vpack.c.bf16 %v465, %v463
        %v510 = vpack.c.bf16 %v468, %v466
        %v511 = vpack.c.bf16 %v469, %v467
        %v512 = vpack.c.bf16 %v472, %v470
        %v513 = vpack.c.bf16 %v473, %v471
        %v514 = vpack.c.bf16 %v476, %v474
        %v515 = vpack.c.bf16 %v477, %v475
        %v516 = vpack.c.bf16 %v480, %v478
        %v517 = vpack.c.bf16 %v481, %v479
        %v518 = vpack.c.bf16 %v484, %v482
        %v519 = vpack.c.bf16 %v485, %v483
        %v520 = vpack.c.bf16 %v488, %v486
        %v521 = vpack.c.bf16 %v489, %v487
        %v522 = vld [vmem:[#allocation2] sm:$0xff]
        %v523 = vld [vmem:[#allocation2 + $0x8] sm:$0xff]
        %v524 = vld [vmem:[#allocation2 + $0x10] sm:$0xff]
        %v525 = vld [vmem:[#allocation2 + $0x18] sm:$0xff]
        %v526 = vld [vmem:[#allocation2 + $0x20] sm:$0xff]
        %v527 = vld [vmem:[#allocation2 + $0x28] sm:$0xff]
        %v528 = vld [vmem:[#allocation2 + $0x30] sm:$0xff]
        %v529 = vld [vmem:[#allocation2 + $0x38] sm:$0xff]
        %v530 = vld [vmem:[#allocation2 + $0x40] sm:$0xff]
        %v531 = vld [vmem:[#allocation2 + $0x48] sm:$0xff]
        %v532 = vld [vmem:[#allocation2 + $0x50] sm:$0xff]
        %v533 = vld [vmem:[#allocation2 + $0x58] sm:$0xff]
        %v534 = vld [vmem:[#allocation2 + $0x60] sm:$0xff]
        %v535 = vld [vmem:[#allocation2 + $0x68] sm:$0xff]
        %v536 = vld [vmem:[#allocation2 + $0x70] sm:$0xff]
        %v537 = vld [vmem:[#allocation2 + $0x78] sm:$0xff]
        %v538 = vld [vmem:[#allocation2 + $0x80] sm:$0xff]
        %v539 = vld [vmem:[#allocation2 + $0x88] sm:$0xff]
        %v540 = vld [vmem:[#allocation2 + $0x90] sm:$0xff]
        %v541 = vld [vmem:[#allocation2 + $0x98] sm:$0xff]
        %v542 = vld [vmem:[#allocation2 + $0xa0] sm:$0xff]
        %v543 = vld [vmem:[#allocation2 + $0xa8] sm:$0xff]
        %v544 = vld [vmem:[#allocation2 + $0xb0] sm:$0xff]
        %v545 = vld [vmem:[#allocation2 + $0xb8] sm:$0xff]
        %v546 = vld [vmem:[#allocation2 + $0xc0] sm:$0xff]
        %v547 = vld [vmem:[#allocation2 + $0xc8] sm:$0xff]
        %v548 = vld [vmem:[#allocation2 + $0xd0] sm:$0xff]
        %v549 = vld [vmem:[#allocation2 + $0xd8] sm:$0xff]
        %v550 = vld [vmem:[#allocation2 + $0xe0] sm:$0xff]
        %v551 = vld [vmem:[#allocation2 + $0xe8] sm:$0xff]
        %v552 = vld [vmem:[#allocation2 + $0xf0] sm:$0xff]
        %v553 = vld [vmem:[#allocation2 + $0xf8] sm:$0xff]
        %v554 = vld [vmem:[%s301] sm:$0xf]
        %v555 = vld [vmem:[%s301 + $0x4] sm:$0xf]
        %v556 = vld [vmem:[%s301 + $0x8] sm:$0xf]
        %v557 = vld [vmem:[%s301 + $0xc] sm:$0xf]
        %v558 = vld [vmem:[%s301 + $0x10] sm:$0xf]
        %v559 = vld [vmem:[%s301 + $0x14] sm:$0xf]
        %v560 = vld [vmem:[%s301 + $0x18] sm:$0xf]
        %v561 = vld [vmem:[%s301 + $0x1c] sm:$0xf]
        %v562 = vld [vmem:[%s301 + $0x20] sm:$0xf]
        %v563 = vld [vmem:[%s301 + $0x24] sm:$0xf]
        %v564 = vld [vmem:[%s301 + $0x28] sm:$0xf]
        %v565 = vld [vmem:[%s301 + $0x2c] sm:$0xf]
        %v566 = vld [vmem:[%s301 + $0x30] sm:$0xf]
        %v567 = vld [vmem:[%s301 + $0x34] sm:$0xf]
        %v568 = vld [vmem:[%s301 + $0x38] sm:$0xf]
        %v569 = vld [vmem:[%s301 + $0x3c] sm:$0xf]
        %v570 = vld [vmem:[%s301 + $0x40] sm:$0xf]
        %v571 = vld [vmem:[%s301 + $0x44] sm:$0xf]
        %v572 = vld [vmem:[%s301 + $0x48] sm:$0xf]
        %v573 = vld [vmem:[%s301 + $0x4c] sm:$0xf]
        %v574 = vld [vmem:[%s301 + $0x50] sm:$0xf]
        %v575 = vld [vmem:[%s301 + $0x54] sm:$0xf]
        %v576 = vld [vmem:[%s301 + $0x58] sm:$0xf]
        %v577 = vld [vmem:[%s301 + $0x5c] sm:$0xf]
        %v578 = vld [vmem:[%s301 + $0x60] sm:$0xf]
        %v579 = vld [vmem:[%s301 + $0x64] sm:$0xf]
        %v580 = vld [vmem:[%s301 + $0x68] sm:$0xf]
        %v581 = vld [vmem:[%s301 + $0x6c] sm:$0xf]
        %v582 = vld [vmem:[%s301 + $0x70] sm:$0xf]
        %v583 = vld [vmem:[%s301 + $0x74] sm:$0xf]
        %v584 = vld [vmem:[%s301 + $0x78] sm:$0xf]
        %v585 = vld [vmem:[%s301 + $0x7c] sm:$0xf]
        %v618 = vunpack.c.l.b16 %v554
        %v619 = vunpack.c.l.b16 %v555
        %v620 = vunpack.c.l.b16 %v556
        %v621 = vunpack.c.l.b16 %v557
        %v622 = vunpack.c.l.b16 %v558
        %v623 = vunpack.c.l.b16 %v559
        %v624 = vunpack.c.l.b16 %v560
        %v625 = vunpack.c.l.b16 %v561
        %v626 = vunpack.c.l.b16 %v562
        %v627 = vunpack.c.l.b16 %v563
        %v628 = vunpack.c.l.b16 %v564
        %v629 = vunpack.c.l.b16 %v565
        %v630 = vunpack.c.l.b16 %v566
        %v631 = vunpack.c.l.b16 %v567
        %v632 = vunpack.c.l.b16 %v568
        %v633 = vunpack.c.l.b16 %v569
        %v634 = vunpack.c.l.b16 %v570
        %v635 = vunpack.c.l.b16 %v571
        %v636 = vunpack.c.l.b16 %v572
        %v637 = vunpack.c.l.b16 %v573
        %v638 = vunpack.c.l.b16 %v574
        %v639 = vunpack.c.l.b16 %v575
        %v640 = vunpack.c.l.b16 %v576
        %v641 = vunpack.c.l.b16 %v577
        %v642 = vunpack.c.l.b16 %v578
        %v643 = vunpack.c.l.b16 %v579
        %v644 = vunpack.c.l.b16 %v580
        %v645 = vunpack.c.l.b16 %v581
        %v646 = vunpack.c.l.b16 %v582
        %v647 = vunpack.c.l.b16 %v583
        %v648 = vunpack.c.l.b16 %v584
        %v649 = vunpack.c.l.b16 %v585
        %v650 = vpack.c.b16 %v619, %v618
        %v651 = vpack.c.b16 %v621, %v620
        %v652 = vpack.c.b16 %v623, %v622
        %v653 = vpack.c.b16 %v625, %v624
        %v654 = vpack.c.b16 %v627, %v626
        %v655 = vpack.c.b16 %v629, %v628
        %v656 = vpack.c.b16 %v631, %v630
        %v657 = vpack.c.b16 %v633, %v632
        %v658 = vpack.c.b16 %v635, %v634
        %v659 = vpack.c.b16 %v637, %v636
        %v660 = vpack.c.b16 %v639, %v638
        %v661 = vpack.c.b16 %v641, %v640
        %v662 = vpack.c.b16 %v643, %v642
        %v663 = vpack.c.b16 %v645, %v644
        %v664 = vpack.c.b16 %v647, %v646
        %v665 = vpack.c.b16 %v649, %v648
        %682 = vmatpush.bf16.msra.mxu0 %v657
        %683 = vmatpush.bf16.msra.mxu0 %v656
        %684 = vmatpush.bf16.msra.mxu0 %v655
        %685 = vmatpush.bf16.msra.mxu0 %v654
        %686 = vmatpush.bf16.msra.mxu0 %v653
        %687 = vmatpush.bf16.msra.mxu0 %v652
        %688 = vmatpush.bf16.msra.mxu0 %v651
        %689 = vmatpush.bf16.msra.mxu0 %v650
        %690 = vmatmul.bf16.gmra.mxu0 %v490
        %v691 = vpop.f32.mrf.mxu0
        %v692 = vadd.f32 0.0, %v691
        %v693 = vpop.f32.mrf.mxu0
        %v694 = vadd.f32 0.0, %v693
        %695 = vmatmul.bf16.gmra.mxu0 %v492
        %v696 = vpop.f32.mrf.mxu0
        %v697 = vadd.f32 0.0, %v696
        %v698 = vpop.f32.mrf.mxu0
        %v699 = vadd.f32 0.0, %v698
        %700 = vmatmul.bf16.gmra.mxu0 %v494
        %v701 = vpop.f32.mrf.mxu0
        %v702 = vadd.f32 0.0, %v701
        %v703 = vpop.f32.mrf.mxu0
        %v704 = vadd.f32 0.0, %v703
        %705 = vmatmul.bf16.gmra.mxu0 %v496
        %v706 = vpop.f32.mrf.mxu0
        %v707 = vadd.f32 0.0, %v706
        %v708 = vpop.f32.mrf.mxu0
        %v709 = vadd.f32 0.0, %v708
        %710 = vmatmul.bf16.gmra.mxu0 %v498
        %v711 = vpop.f32.mrf.mxu0
        %v712 = vadd.f32 0.0, %v711
        %v713 = vpop.f32.mrf.mxu0
        %v714 = vadd.f32 0.0, %v713
        %715 = vmatmul.bf16.gmra.mxu0 %v500
        %v716 = vpop.f32.mrf.mxu0
        %v717 = vadd.f32 0.0, %v716
        %v718 = vpop.f32.mrf.mxu0
        %v719 = vadd.f32 0.0, %v718
        %720 = vmatmul.bf16.gmra.mxu0 %v502
        %v721 = vpop.f32.mrf.mxu0
        %v722 = vadd.f32 0.0, %v721
        %v723 = vpop.f32.mrf.mxu0
        %v724 = vadd.f32 0.0, %v723
        %725 = vmatmul.bf16.gmra.mxu0 %v504
        %v726 = vpop.f32.mrf.mxu0
        %v727 = vadd.f32 0.0, %v726
        %v728 = vpop.f32.mrf.mxu0
        %v729 = vadd.f32 0.0, %v728
        %730 = vmatmul.bf16.gmra.mxu0 %v506
        %v731 = vpop.f32.mrf.mxu0
        %v732 = vadd.f32 0.0, %v731
        %v733 = vpop.f32.mrf.mxu0
        %v734 = vadd.f32 0.0, %v733
        %735 = vmatmul.bf16.gmra.mxu0 %v508
        %v736 = vpop.f32.mrf.mxu0
        %v737 = vadd.f32 0.0, %v736
        %v738 = vpop.f32.mrf.mxu0
        %v739 = vadd.f32 0.0, %v738
        %740 = vmatmul.bf16.gmra.mxu0 %v510
        %v741 = vpop.f32.mrf.mxu0
        %v742 = vadd.f32 0.0, %v741
        %v743 = vpop.f32.mrf.mxu0
        %v744 = vadd.f32 0.0, %v743
        %745 = vmatmul.bf16.gmra.mxu0 %v512
        %v746 = vpop.f32.mrf.mxu0
        %v747 = vadd.f32 0.0, %v746
        %v748 = vpop.f32.mrf.mxu0
        %v749 = vadd.f32 0.0, %v748
        %750 = vmatmul.bf16.gmra.mxu0 %v514
        %v751 = vpop.f32.mrf.mxu0
        %v752 = vadd.f32 0.0, %v751
        %v753 = vpop.f32.mrf.mxu0
        %v754 = vadd.f32 0.0, %v753
        %755 = vmatmul.bf16.gmra.mxu0 %v516
        %v756 = vpop.f32.mrf.mxu0
        %v757 = vadd.f32 0.0, %v756
        %v758 = vpop.f32.mrf.mxu0
        %v759 = vadd.f32 0.0, %v758
        %760 = vmatmul.bf16.gmra.mxu0 %v518
        %v761 = vpop.f32.mrf.mxu0
        %v762 = vadd.f32 0.0, %v761
        %v763 = vpop.f32.mrf.mxu0
        %v764 = vadd.f32 0.0, %v763
        %765 = vmatmul.bf16.gmra.mxu0 %v520
        %v766 = vpop.f32.mrf.mxu0
        %v767 = vadd.f32 0.0, %v766
        %v768 = vpop.f32.mrf.mxu0
        %v769 = vadd.f32 0.0, %v768
        %770 = vdwg.mxu0
        %771 = vmatpush.bf16.msra.mxu0 %v665
        %772 = vmatpush.bf16.msra.mxu0 %v664
        %773 = vmatpush.bf16.msra.mxu0 %v663
        %774 = vmatpush.bf16.msra.mxu0 %v662
        %775 = vmatpush.bf16.msra.mxu0 %v661
        %776 = vmatpush.bf16.msra.mxu0 %v660
        %777 = vmatpush.bf16.msra.mxu0 %v659
        %778 = vmatpush.bf16.msra.mxu0 %v658
        %779 = vmatmul.bf16.gmra.mxu0 %v491
        %v780 = vpop.f32.mrf.mxu0
        %v781 = vadd.f32 %v692, %v780
        %v782 = vpop.f32.mrf.mxu0
        %v783 = vadd.f32 %v694, %v782
        %784 = vmatmul.bf16.gmra.mxu0 %v493
        %v785 = vpop.f32.mrf.mxu0
        %v786 = vadd.f32 %v697, %v785
        %v787 = vpop.f32.mrf.mxu0
        %v788 = vadd.f32 %v699, %v787
        %789 = vmatmul.bf16.gmra.mxu0 %v495
        %v790 = vpop.f32.mrf.mxu0
        %v791 = vadd.f32 %v702, %v790
        %v792 = vpop.f32.mrf.mxu0
        %v793 = vadd.f32 %v704, %v792
        %794 = vmatmul.bf16.gmra.mxu0 %v497
        %v795 = vpop.f32.mrf.mxu0
        %v796 = vadd.f32 %v707, %v795
        %v797 = vpop.f32.mrf.mxu0
        %v798 = vadd.f32 %v709, %v797
        %799 = vmatmul.bf16.gmra.mxu0 %v499
        %v800 = vpop.f32.mrf.mxu0
        %v801 = vadd.f32 %v712, %v800
        %v802 = vpop.f32.mrf.mxu0
        %v803 = vadd.f32 %v714, %v802
        %804 = vmatmul.bf16.gmra.mxu0 %v501
        %v805 = vpop.f32.mrf.mxu0
        %v806 = vadd.f32 %v717, %v805
        %v807 = vpop.f32.mrf.mxu0
        %v808 = vadd.f32 %v719, %v807
        %809 = vmatmul.bf16.gmra.mxu0 %v503
        %v810 = vpop.f32.mrf.mxu0
        %v811 = vadd.f32 %v722, %v810
        %v812 = vpop.f32.mrf.mxu0
        %v813 = vadd.f32 %v724, %v812
        %814 = vmatmul.bf16.gmra.mxu0 %v505
        %v815 = vpop.f32.mrf.mxu0
        %v816 = vadd.f32 %v727, %v815
        %v817 = vpop.f32.mrf.mxu0
        %v818 = vadd.f32 %v729, %v817
        %819 = vmatmul.bf16.gmra.mxu0 %v507
        %v820 = vpop.f32.mrf.mxu0
        %v821 = vadd.f32 %v732, %v820
        %v822 = vpop.f32.mrf.mxu0
        %v823 = vadd.f32 %v734, %v822
        %824 = vmatmul.bf16.gmra.mxu0 %v509
        %v825 = vpop.f32.mrf.mxu0
        %v826 = vadd.f32 %v737, %v825
        %v827 = vpop.f32.mrf.mxu0
        %v828 = vadd.f32 %v739, %v827
        %829 = vmatmul.bf16.gmra.mxu0 %v511
        %v830 = vpop.f32.mrf.mxu0
        %v831 = vadd.f32 %v742, %v830
        %v832 = vpop.f32.mrf.mxu0
        %v833 = vadd.f32 %v744, %v832
        %834 = vmatmul.bf16.gmra.mxu0 %v513
        %v835 = vpop.f32.mrf.mxu0
        %v836 = vadd.f32 %v747, %v835
        %v837 = vpop.f32.mrf.mxu0
        %v838 = vadd.f32 %v749, %v837
        %839 = vmatmul.bf16.gmra.mxu0 %v515
        %v840 = vpop.f32.mrf.mxu0
        %v841 = vadd.f32 %v752, %v840
        %v842 = vpop.f32.mrf.mxu0
        %v843 = vadd.f32 %v754, %v842
        %844 = vmatmul.bf16.gmra.mxu0 %v517
        %v845 = vpop.f32.mrf.mxu0
        %v846 = vadd.f32 %v757, %v845
        %v847 = vpop.f32.mrf.mxu0
        %v848 = vadd.f32 %v759, %v847
        %849 = vmatmul.bf16.gmra.mxu0 %v519
        %v850 = vpop.f32.mrf.mxu0
        %v851 = vadd.f32 %v762, %v850
        %v852 = vpop.f32.mrf.mxu0
        %v853 = vadd.f32 %v764, %v852
        %854 = vmatmul.bf16.gmra.mxu0 %v521
        %v855 = vpop.f32.mrf.mxu0
        %v856 = vadd.f32 %v767, %v855
        %v857 = vpop.f32.mrf.mxu0
        %v858 = vadd.f32 %v769, %v857
        %859 = vdwg.mxu0
        %v860 = vadd.f32 %v522, %v781
        %v861 = vadd.f32 %v523, %v783
        %v862 = vadd.f32 %v524, %v786
        %v863 = vadd.f32 %v525, %v788
        %v864 = vadd.f32 %v526, %v791
        %v865 = vadd.f32 %v527, %v793
        %v866 = vadd.f32 %v528, %v796
        %v867 = vadd.f32 %v529, %v798
        %v868 = vadd.f32 %v530, %v801
        %v869 = vadd.f32 %v531, %v803
        %v870 = vadd.f32 %v532, %v806
        %v871 = vadd.f32 %v533, %v808
        %v872 = vadd.f32 %v534, %v811
        %v873 = vadd.f32 %v535, %v813
        %v874 = vadd.f32 %v536, %v816
        %v875 = vadd.f32 %v537, %v818
        %v876 = vadd.f32 %v538, %v821
        %v877 = vadd.f32 %v539, %v823
        %v878 = vadd.f32 %v540, %v826
        %v879 = vadd.f32 %v541, %v828
        %v880 = vadd.f32 %v542, %v831
        %v881 = vadd.f32 %v543, %v833
        %v882 = vadd.f32 %v544, %v836
        %v883 = vadd.f32 %v545, %v838
        %v884 = vadd.f32 %v546, %v841
        %v885 = vadd.f32 %v547, %v843
        %v886 = vadd.f32 %v548, %v846
        %v887 = vadd.f32 %v549, %v848
        %v888 = vadd.f32 %v550, %v851
        %v889 = vadd.f32 %v551, %v853
        %v890 = vadd.f32 %v552, %v856
        %v891 = vadd.f32 %v553, %v858
        %892 = vst [vmem:[#allocation2] sm:$0xff] %v860
        %893 = vst [vmem:[#allocation2 + $0x8] sm:$0xff] %v861
        %894 = vst [vmem:[#allocation2 + $0x10] sm:$0xff] %v862
        %895 = vst [vmem:[#allocation2 + $0x18] sm:$0xff] %v863
        %896 = vst [vmem:[#allocation2 + $0x20] sm:$0xff] %v864
        %897 = vst [vmem:[#allocation2 + $0x28] sm:$0xff] %v865
        %898 = vst [vmem:[#allocation2 + $0x30] sm:$0xff] %v866
        %899 = vst [vmem:[#allocation2 + $0x38] sm:$0xff] %v867
        %900 = vst [vmem:[#allocation2 + $0x40] sm:$0xff] %v868
        %901 = vst [vmem:[#allocation2 + $0x48] sm:$0xff] %v869
        %902 = vst [vmem:[#allocation2 + $0x50] sm:$0xff] %v870
        %903 = vst [vmem:[#allocation2 + $0x58] sm:$0xff] %v871
        %904 = vst [vmem:[#allocation2 + $0x60] sm:$0xff] %v872
        %905 = vst [vmem:[#allocation2 + $0x68] sm:$0xff] %v873
        %906 = vst [vmem:[#allocation2 + $0x70] sm:$0xff] %v874
        %907 = vst [vmem:[#allocation2 + $0x78] sm:$0xff] %v875
        %908 = vst [vmem:[#allocation2 + $0x80] sm:$0xff] %v876
        %909 = vst [vmem:[#allocation2 + $0x88] sm:$0xff] %v877
        %910 = vst [vmem:[#allocation2 + $0x90] sm:$0xff] %v878
        %911 = vst [vmem:[#allocation2 + $0x98] sm:$0xff] %v879
        %912 = vst [vmem:[#allocation2 + $0xa0] sm:$0xff] %v880
        %913 = vst [vmem:[#allocation2 + $0xa8] sm:$0xff] %v881
        %914 = vst [vmem:[#allocation2 + $0xb0] sm:$0xff] %v882
        %915 = vst [vmem:[#allocation2 + $0xb8] sm:$0xff] %v883
        %916 = vst [vmem:[#allocation2 + $0xc0] sm:$0xff] %v884
        %917 = vst [vmem:[#allocation2 + $0xc8] sm:$0xff] %v885
        %918 = vst [vmem:[#allocation2 + $0xd0] sm:$0xff] %v886
        %919 = vst [vmem:[#allocation2 + $0xd8] sm:$0xff] %v887
        %920 = vst [vmem:[#allocation2 + $0xe0] sm:$0xff] %v888
        %921 = vst [vmem:[#allocation2 + $0xe8] sm:$0xff] %v889
        %922 = vst [vmem:[#allocation2 + $0xf0] sm:$0xff] %v890
        %923 = vst [vmem:[#allocation2 + $0xf8] sm:$0xff] %v891
        %p924 = scmp.eq.s32.totalorder %s23, 1
        // Predicated region
        $region64: #{_lambda_.7} parent=54 // pred_check
          %p925 = pneg %p924
        $region65: #{_lambda_.7} parent=54 // pred_check_branch
          %927 = sbr.rel (%p925) target = $region67
        $region66: #{_lambda_.7} parent=54 // pred_region
          %v928 = vld [vmem:[#allocation2] sm:$0xff]
          %v929 = vld [vmem:[#allocation2 + $0x8] sm:$0xff]
          %v930 = vld [vmem:[#allocation2 + $0x10] sm:$0xff]
          %v931 = vld [vmem:[#allocation2 + $0x18] sm:$0xff]
          %v932 = vld [vmem:[#allocation2 + $0x20] sm:$0xff]
          %v933 = vld [vmem:[#allocation2 + $0x28] sm:$0xff]
          %v934 = vld [vmem:[#allocation2 + $0x30] sm:$0xff]
          %v935 = vld [vmem:[#allocation2 + $0x38] sm:$0xff]
          %v936 = vld [vmem:[#allocation2 + $0x40] sm:$0xff]
          %v937 = vld [vmem:[#allocation2 + $0x48] sm:$0xff]
          %v938 = vld [vmem:[#allocation2 + $0x50] sm:$0xff]
          %v939 = vld [vmem:[#allocation2 + $0x58] sm:$0xff]
          %v940 = vld [vmem:[#allocation2 + $0x60] sm:$0xff]
          %v941 = vld [vmem:[#allocation2 + $0x68] sm:$0xff]
          %v942 = vld [vmem:[#allocation2 + $0x70] sm:$0xff]
          %v943 = vld [vmem:[#allocation2 + $0x78] sm:$0xff]
          %v944 = vld [vmem:[#allocation2 + $0x80] sm:$0xff]
          %v945 = vld [vmem:[#allocation2 + $0x88] sm:$0xff]
          %v946 = vld [vmem:[#allocation2 + $0x90] sm:$0xff]
          %v947 = vld [vmem:[#allocation2 + $0x98] sm:$0xff]
          %v948 = vld [vmem:[#allocation2 + $0xa0] sm:$0xff]
          %v949 = vld [vmem:[#allocation2 + $0xa8] sm:$0xff]
          %v950 = vld [vmem:[#allocation2 + $0xb0] sm:$0xff]
          %v951 = vld [vmem:[#allocation2 + $0xb8] sm:$0xff]
          %v952 = vld [vmem:[#allocation2 + $0xc0] sm:$0xff]
          %v953 = vld [vmem:[#allocation2 + $0xc8] sm:$0xff]
          %v954 = vld [vmem:[#allocation2 + $0xd0] sm:$0xff]
          %v955 = vld [vmem:[#allocation2 + $0xd8] sm:$0xff]
          %v956 = vld [vmem:[#allocation2 + $0xe0] sm:$0xff]
          %v957 = vld [vmem:[#allocation2 + $0xe8] sm:$0xff]
          %v958 = vld [vmem:[#allocation2 + $0xf0] sm:$0xff]
          %v959 = vld [vmem:[#allocation2 + $0xf8] sm:$0xff]
          %v960 = vld [vmem:[%s307] sm:$0xff]
          %v961 = vld [vmem:[%s307 + $0x8] sm:$0xff]
          %v962 = vld [vmem:[%s307 + $0x10] sm:$0xff]
          %v963 = vld [vmem:[%s307 + $0x18] sm:$0xff]
          %v964 = vld [vmem:[%s307 + $0x20] sm:$0xff]
          %v965 = vld [vmem:[%s307 + $0x28] sm:$0xff]
          %v966 = vld [vmem:[%s307 + $0x30] sm:$0xff]
          %v967 = vld [vmem:[%s307 + $0x38] sm:$0xff]
          %v968 = vld [vmem:[%s307 + $0x40] sm:$0xff]
          %v969 = vld [vmem:[%s307 + $0x48] sm:$0xff]
          %v970 = vld [vmem:[%s307 + $0x50] sm:$0xff]
          %v971 = vld [vmem:[%s307 + $0x58] sm:$0xff]
          %v972 = vld [vmem:[%s307 + $0x60] sm:$0xff]
          %v973 = vld [vmem:[%s307 + $0x68] sm:$0xff]
          %v974 = vld [vmem:[%s307 + $0x70] sm:$0xff]
          %v975 = vld [vmem:[%s307 + $0x78] sm:$0xff]
          %v976 = vld [vmem:[%s307 + $0x80] sm:$0xff]
          %v977 = vld [vmem:[%s307 + $0x88] sm:$0xff]
          %v978 = vld [vmem:[%s307 + $0x90] sm:$0xff]
          %v979 = vld [vmem:[%s307 + $0x98] sm:$0xff]
          %v980 = vld [vmem:[%s307 + $0xa0] sm:$0xff]
          %v981 = vld [vmem:[%s307 + $0xa8] sm:$0xff]
          %v982 = vld [vmem:[%s307 + $0xb0] sm:$0xff]
          %v983 = vld [vmem:[%s307 + $0xb8] sm:$0xff]
          %v984 = vld [vmem:[%s307 + $0xc0] sm:$0xff]
          %v985 = vld [vmem:[%s307 + $0xc8] sm:$0xff]
          %v986 = vld [vmem:[%s307 + $0xd0] sm:$0xff]
          %v987 = vld [vmem:[%s307 + $0xd8] sm:$0xff]
          %v988 = vld [vmem:[%s307 + $0xe0] sm:$0xff]
          %v989 = vld [vmem:[%s307 + $0xe8] sm:$0xff]
          %v990 = vld [vmem:[%s307 + $0xf0] sm:$0xff]
          %v991 = vld [vmem:[%s307 + $0xf8] sm:$0xff]
          %993 = vset.pattern.permute.xlu0 0
          %994 = vperm.xlu0 %993, %v960
          %v995 = vpop.permute.xlu0 %994
          %998 = vset.pattern.permute.xlu0 0
          %999 = vperm.xlu0 %998, %v961
          %v1000 = vpop.permute.xlu0 %999
          %1003 = vset.pattern.permute.xlu0 0
          %1004 = vperm.xlu0 %1003, %v962
          %v1005 = vpop.permute.xlu0 %1004
          %1008 = vset.pattern.permute.xlu0 0
          %1009 = vperm.xlu0 %1008, %v963
          %v1010 = vpop.permute.xlu0 %1009
          %1013 = vset.pattern.permute.xlu0 0
          %1014 = vperm.xlu0 %1013, %v964
          %v1015 = vpop.permute.xlu0 %1014
          %1018 = vset.pattern.permute.xlu0 0
          %1019 = vperm.xlu0 %1018, %v965
          %v1020 = vpop.permute.xlu0 %1019
          %1023 = vset.pattern.permute.xlu0 0
          %1024 = vperm.xlu0 %1023, %v966
          %v1025 = vpop.permute.xlu0 %1024
          %1028 = vset.pattern.permute.xlu0 0
          %1029 = vperm.xlu0 %1028, %v967
          %v1030 = vpop.permute.xlu0 %1029
          %1033 = vset.pattern.permute.xlu0 0
          %1034 = vperm.xlu0 %1033, %v968
          %v1035 = vpop.permute.xlu0 %1034
          %1038 = vset.pattern.permute.xlu0 0
          %1039 = vperm.xlu0 %1038, %v969
          %v1040 = vpop.permute.xlu0 %1039
          %1043 = vset.pattern.permute.xlu0 0
          %1044 = vperm.xlu0 %1043, %v970
          %v1045 = vpop.permute.xlu0 %1044
          %1048 = vset.pattern.permute.xlu0 0
          %1049 = vperm.xlu0 %1048, %v971
          %v1050 = vpop.permute.xlu0 %1049
          %1053 = vset.pattern.permute.xlu0 0
          %1054 = vperm.xlu0 %1053, %v972
          %v1055 = vpop.permute.xlu0 %1054
          %1058 = vset.pattern.permute.xlu0 0
          %1059 = vperm.xlu0 %1058, %v973
          %v1060 = vpop.permute.xlu0 %1059
          %1063 = vset.pattern.permute.xlu0 0
          %1064 = vperm.xlu0 %1063, %v974
          %v1065 = vpop.permute.xlu0 %1064
          %1068 = vset.pattern.permute.xlu0 0
          %1069 = vperm.xlu0 %1068, %v975
          %v1070 = vpop.permute.xlu0 %1069
          %1073 = vset.pattern.permute.xlu0 0
          %1074 = vperm.xlu0 %1073, %v976
          %v1075 = vpop.permute.xlu0 %1074
          %1078 = vset.pattern.permute.xlu0 0
          %1079 = vperm.xlu0 %1078, %v977
          %v1080 = vpop.permute.xlu0 %1079
          %1083 = vset.pattern.permute.xlu0 0
          %1084 = vperm.xlu0 %1083, %v978
          %v1085 = vpop.permute.xlu0 %1084
          %1088 = vset.pattern.permute.xlu0 0
          %1089 = vperm.xlu0 %1088, %v979
          %v1090 = vpop.permute.xlu0 %1089
          %1093 = vset.pattern.permute.xlu0 0
          %1094 = vperm.xlu0 %1093, %v980
          %v1095 = vpop.permute.xlu0 %1094
          %1098 = vset.pattern.permute.xlu0 0
          %1099 = vperm.xlu0 %1098, %v981
          %v1100 = vpop.permute.xlu0 %1099
          %1103 = vset.pattern.permute.xlu0 0
          %1104 = vperm.xlu0 %1103, %v982
          %v1105 = vpop.permute.xlu0 %1104
          %1108 = vset.pattern.permute.xlu0 0
          %1109 = vperm.xlu0 %1108, %v983
          %v1110 = vpop.permute.xlu0 %1109
          %1113 = vset.pattern.permute.xlu0 0
          %1114 = vperm.xlu0 %1113, %v984
          %v1115 = vpop.permute.xlu0 %1114
          %1118 = vset.pattern.permute.xlu0 0
          %1119 = vperm.xlu0 %1118, %v985
          %v1120 = vpop.permute.xlu0 %1119
          %1123 = vset.pattern.permute.xlu0 0
          %1124 = vperm.xlu0 %1123, %v986
          %v1125 = vpop.permute.xlu0 %1124
          %1128 = vset.pattern.permute.xlu0 0
          %1129 = vperm.xlu0 %1128, %v987
          %v1130 = vpop.permute.xlu0 %1129
          %1133 = vset.pattern.permute.xlu0 0
          %1134 = vperm.xlu0 %1133, %v988
          %v1135 = vpop.permute.xlu0 %1134
          %1138 = vset.pattern.permute.xlu0 0
          %1139 = vperm.xlu0 %1138, %v989
          %v1140 = vpop.permute.xlu0 %1139
          %1143 = vset.pattern.permute.xlu0 0
          %1144 = vperm.xlu0 %1143, %v990
          %v1145 = vpop.permute.xlu0 %1144
          %1148 = vset.pattern.permute.xlu0 0
          %1149 = vperm.xlu0 %1148, %v991
          %v1150 = vpop.permute.xlu0 %1149
          %v1152 = vmul.f32 %v928, %v995
          %v1153 = vmul.f32 %v929, %v1000
          %v1154 = vmul.f32 %v930, %v1005
          %v1155 = vmul.f32 %v931, %v1010
          %v1156 = vmul.f32 %v932, %v1015
          %v1157 = vmul.f32 %v933, %v1020
          %v1158 = vmul.f32 %v934, %v1025
          %v1159 = vmul.f32 %v935, %v1030
          %v1160 = vmul.f32 %v936, %v1035
          %v1161 = vmul.f32 %v937, %v1040
          %v1162 = vmul.f32 %v938, %v1045
          %v1163 = vmul.f32 %v939, %v1050
          %v1164 = vmul.f32 %v940, %v1055
          %v1165 = vmul.f32 %v941, %v1060
          %v1166 = vmul.f32 %v942, %v1065
          %v1167 = vmul.f32 %v943, %v1070
          %v1168 = vmul.f32 %v944, %v1075
          %v1169 = vmul.f32 %v945, %v1080
          %v1170 = vmul.f32 %v946, %v1085
          %v1171 = vmul.f32 %v947, %v1090
          %v1172 = vmul.f32 %v948, %v1095
          %v1173 = vmul.f32 %v949, %v1100
          %v1174 = vmul.f32 %v950, %v1105
          %v1175 = vmul.f32 %v951, %v1110
          %v1176 = vmul.f32 %v952, %v1115
          %v1177 = vmul.f32 %v953, %v1120
          %v1178 = vmul.f32 %v954, %v1125
          %v1179 = vmul.f32 %v955, %v1130
          %v1180 = vmul.f32 %v956, %v1135
          %v1181 = vmul.f32 %v957, %v1140
          %v1182 = vmul.f32 %v958, %v1145
          %v1183 = vmul.f32 %v959, %v1150
          %v1184 = vld [vmem:[%s3] sm:$0x1]
          %v1186 = vperm.slane %v1184, 0
          %v1188 = vadd.f32 %v1152, %v1186
          %v1189 = vadd.f32 %v1153, %v1186
          %v1190 = vadd.f32 %v1154, %v1186
          %v1191 = vadd.f32 %v1155, %v1186
          %v1192 = vadd.f32 %v1156, %v1186
          %v1193 = vadd.f32 %v1157, %v1186
          %v1194 = vadd.f32 %v1158, %v1186
          %v1195 = vadd.f32 %v1159, %v1186
          %v1196 = vadd.f32 %v1160, %v1186
          %v1197 = vadd.f32 %v1161, %v1186
          %v1198 = vadd.f32 %v1162, %v1186
          %v1199 = vadd.f32 %v1163, %v1186
          %v1200 = vadd.f32 %v1164, %v1186
          %v1201 = vadd.f32 %v1165, %v1186
          %v1202 = vadd.f32 %v1166, %v1186
          %v1203 = vadd.f32 %v1167, %v1186
          %v1204 = vadd.f32 %v1168, %v1186
          %v1205 = vadd.f32 %v1169, %v1186
          %v1206 = vadd.f32 %v1170, %v1186
          %v1207 = vadd.f32 %v1171, %v1186
          %v1208 = vadd.f32 %v1172, %v1186
          %v1209 = vadd.f32 %v1173, %v1186
          %v1210 = vadd.f32 %v1174, %v1186
          %v1211 = vadd.f32 %v1175, %v1186
          %v1212 = vadd.f32 %v1176, %v1186
          %v1213 = vadd.f32 %v1177, %v1186
          %v1214 = vadd.f32 %v1178, %v1186
          %v1215 = vadd.f32 %v1179, %v1186
          %v1216 = vadd.f32 %v1180, %v1186
          %v1217 = vadd.f32 %v1181, %v1186
          %v1218 = vadd.f32 %v1182, %v1186
          %v1219 = vadd.f32 %v1183, %v1186
          %1220 = vst [vmem:[%s294] sm:$0xff] %v1188
          %1221 = vst [vmem:[%s294 + $0x8] sm:$0xff] %v1189
          %1222 = vst [vmem:[%s294 + $0x10] sm:$0xff] %v1190
          %1223 = vst [vmem:[%s294 + $0x18] sm:$0xff] %v1191
          %1224 = vst [vmem:[%s294 + $0x20] sm:$0xff] %v1192
          %1225 = vst [vmem:[%s294 + $0x28] sm:$0xff] %v1193
          %1226 = vst [vmem:[%s294 + $0x30] sm:$0xff] %v1194
          %1227 = vst [vmem:[%s294 + $0x38] sm:$0xff] %v1195
          %1228 = vst [vmem:[%s294 + $0x40] sm:$0xff] %v1196
          %1229 = vst [vmem:[%s294 + $0x48] sm:$0xff] %v1197
          %1230 = vst [vmem:[%s294 + $0x50] sm:$0xff] %v1198
          %1231 = vst [vmem:[%s294 + $0x58] sm:$0xff] %v1199
          %1232 = vst [vmem:[%s294 + $0x60] sm:$0xff] %v1200
          %1233 = vst [vmem:[%s294 + $0x68] sm:$0xff] %v1201
          %1234 = vst [vmem:[%s294 + $0x70] sm:$0xff] %v1202
          %1235 = vst [vmem:[%s294 + $0x78] sm:$0xff] %v1203
          %1236 = vst [vmem:[%s294 + $0x80] sm:$0xff] %v1204
          %1237 = vst [vmem:[%s294 + $0x88] sm:$0xff] %v1205
          %1238 = vst [vmem:[%s294 + $0x90] sm:$0xff] %v1206
          %1239 = vst [vmem:[%s294 + $0x98] sm:$0xff] %v1207
          %1240 = vst [vmem:[%s294 + $0xa0] sm:$0xff] %v1208
          %1241 = vst [vmem:[%s294 + $0xa8] sm:$0xff] %v1209
          %1242 = vst [vmem:[%s294 + $0xb0] sm:$0xff] %v1210
          %1243 = vst [vmem:[%s294 + $0xb8] sm:$0xff] %v1211
          %1244 = vst [vmem:[%s294 + $0xc0] sm:$0xff] %v1212
          %1245 = vst [vmem:[%s294 + $0xc8] sm:$0xff] %v1213
          %1246 = vst [vmem:[%s294 + $0xd0] sm:$0xff] %v1214
          %1247 = vst [vmem:[%s294 + $0xd8] sm:$0xff] %v1215
          %1248 = vst [vmem:[%s294 + $0xe0] sm:$0xff] %v1216
          %1249 = vst [vmem:[%s294 + $0xe8] sm:$0xff] %v1217
          %1250 = vst [vmem:[%s294 + $0xf0] sm:$0xff] %v1218
          %1251 = vst [vmem:[%s294 + $0xf8] sm:$0xff] %v1219
        $region67: #{_lambda_.7} parent=54 // pred_fallthru
          _
        %s1252 = sand.u32 %s139, 1
        %s1253 = scalar_lea.sflag [#allocation5], %s1252
        %s1254 = sand.u32 %s139, 1
        %s1255 = smul.addr %s1254, 256
        %s1256 = scalar_lea.vmem [#allocation4], %s1255
        // Predicated region
        $region68: #{_lambda_.7} parent=54 // pred_check
          %p1257 = pneg %p149
        $region69: #{_lambda_.7} parent=54 // pred_check_branch
          %1259 = sbr.rel (%p1257) target = $region71
        $region70: #{_lambda_.7} parent=54 // pred_region
          %s1260 = smul.u32 32, %s22
          %1262 = vsyncadd %s1253, 0
          %s1263 = smul.addr %s1260, 8
          %s1264 = scalar_lea.hbm %s4, %s1263
          %s1265 = sshll.u32 %s1256, 4
          %s1266 = int_to_ptr.vmem [resolvable:$true] %s1265
          %s1267 = sshll.u32 %s1264, 4
          %s1268 = int_to_ptr.hbm [resolvable:$true] %s1267
          %1273 = dma.vmem_to_hbm [thread:$0]  %s1266, 4096, %s1268, %s1253, 128, 128, 8
        $region71: #{_lambda_.7} parent=54 // pred_fallthru
          _
      $region55: #{_lambda_.7} parent=5 // pred_fallthru
        _
      %p1274 = scmp.le.s32.totalorder 2, %s13
      // Predicated region
      $region72: #{_lambda_.7} parent=5 // pred_check
        %p1275 = pneg %p1274
      $region73: #{_lambda_.7} parent=5 // pred_check_branch
        %1277 = sbr.rel (%p1275) target = $region75
      $region74: #{_lambda_.7} parent=5 // pred_region
        %s1278 = ssub.s32 %s13, 2
        // Predicated region
        $region76: #{_lambda_.7} parent=74 // pred_check
          %p1279 = pneg %p155
        $region77: #{_lambda_.7} parent=74 // pred_check_branch
          %1281 = sbr.rel (%p1279) target = $region79
        $region78: #{_lambda_.7} parent=74 // pred_region
          %s1282 = sand.u32 %s140, 1
          %s1283 = scalar_lea.sflag [#allocation5], %s1282
          %s1284 = sand.u32 %s140, 1
          %s1285 = smul.addr %s1284, 256
          %s1286 = scalar_lea.vmem [#allocation4], %s1285
          %1288 = dma.done %s1283, 4096
        $region79: #{_lambda_.7} parent=74 // pred_fallthru
          _
      $region75: #{_lambda_.7} parent=5 // pred_fallthru
        _
    $region6: #{_lambda_.7} parent=1 // loop_footer
      %s17 = sadd.s32 1, %s13
    $region7: #{_lambda_.7} parent=1 // loop_footer_branch
      %12 = sbr.rel target = $region3
    $region8: #{_lambda_.7} parent=1 // loop_exit
      _
    %1289 = vsyncpa [#allocation5], 1
    %s1290 = scalar_lea.sflag [#allocation5], 1
    %1291 = vsyncpa %s1290, 1

// kernel: _lambda_.5
$region0: #{_lambda_.5}
  #allocation0 [shape = 'u32[]', space=smem, size = 0x4, offset = 0x4, fixed_abs, tag = 'smem constant byte address 0x4 - core index']
  #allocation1 [shape = 'u32[72,128]{1,0:T(1,128)}', space=vmem, size = 0x9000, scoped, tag = 'internal scratch']
  #allocation2 [shape = 'f32[256,128]{1,0:T(8,128)}', space=vmem, size = 0x20000, scoped, tag = 'scratch operand']
  %s0 = inlined_call_operand.vmem [shape: s8[512,512], index: 0, kind: input, shape index: {}]
  %s1 = inlined_call_operand.vmem [shape: bf16[512,128], index: 1, kind: input, shape index: {}]
  %s2 = inlined_call_operand.vmem [shape: f32[512,1], index: 2, kind: input, shape index: {}]
  %s3 = inlined_call_operand.vmem [shape: f32[1,128], index: 3, kind: input, shape index: {}]
  %s4 = inlined_call_operand.vmem [shape: bf16[512,128], index: 4, kind: output, shape index: {}]
  %s5 = sld [smem:[#allocation0]]
  $region80: #{_lambda_.5} parent=0
    _
  %s7 = ssub.s32 1, %s5
  %s8 = scalar_select 0, %s7, %s5
  $region1: #{_lambda_.5} parent=0
    #allocation3 [shape = 'u8[131072]{0}', space=vmem, size = 0x20000, scoped, tag = 'input window, operand 0']
    loop: start=0, step=1, limit=6
    $region2: #{_lambda_.5} parent=1 // loop_pre_header
      _
    $region3: #{_lambda_.5} parent=1 // loop_header
      %s10 = sphi 0, %s14
      %p11 = scmp.ge.s32.totalorder %s10, 6
      %s17 = sphi 0, %s29
      %s18 = sphi 0, %s25
      %s19 = sphi 0, %s17
      %s20 = sphi 0, %s18
      %s21 = sphi 0, %s19
      %s22 = sphi 0, %s20
      %s34 = sphi 0, %s36
      %s37 = sphi 0, %s34
      %s38 = sphi 0, %s37
      %s54 = sphi 0, %s38
      %s60 = sphi 0, %s62
      %s63 = sphi 0, %s60
      %s64 = sphi 0, %s63
      %s80 = sphi 0, %s64
      %s86 = sphi 0, %s88
      %s89 = sphi 0, %s86
      %s90 = sphi 0, %s89
      %s106 = sphi 0, %s90
      %s110 = sphi 0, %s110
      %s112 = sphi 0, %s110
      %s113 = sphi 0, %s112
      %s127 = sphi 0, %s113
      %s133 = sphi 0, %s135
      %s136 = sphi 0, %s133
      %s137 = sphi 0, %s136
      %s153 = sphi 0, %s137
    $region4: #{_lambda_.5} parent=1 // loop_header_branch
      %13 = sbr.rel (%p11) target = $region8
    $region5: #{_lambda_.5} parent=1 // loop_body
      %s15 = ssub.s32 %s10, 1
      %s16 = ssub.s32 %s10, 2
      %s23 = sadd.s32 1, %s18
      %p24 = scmp.ge.s32.totalorder %s23, 2
      %s25 = scalar_select %p24, 0, %s23
      %s26 = sadd.s32 1, %s17
      %s27 = scalar_select %p24, %s26, %s17
      %p28 = scmp.ge.s32.totalorder %s27, 2
      %s29 = scalar_select %p28, 0, %s27
      %s30 = ssub.s32 %s17, %s29
      %s31 = ssub.s32 %s18, %s25
      %s32 = sor.u32 %s30, %s31
      %p33 = scmp.eq.s32.totalorder %s32, 0
      %s35 = sadd.s32 %s34, 1
      %s36 = scalar_select %p33, %s34, %s35
      %p39 = pneg %p33
      %p40 = scmp.eq.s32.totalorder %s10, 3
      %p41 = por %p39, %p40
      %p42 = scmp.ne.s32.totalorder %s34, %s37
      %p43 = scmp.eq.s32.totalorder %s10, 0
      %p44 = por %p42, %p43
      %p45 = scmp.ne.s32.totalorder %s34, %s37
      %p46 = scmp.eq.s32.totalorder %s15, 3
      %p47 = por %p45, %p46
      %p48 = scmp.ne.s32.totalorder %s37, %s38
      %p49 = scmp.eq.s32.totalorder %s15, 0
      %p50 = por %p48, %p49
      %p51 = scmp.ne.s32.totalorder %s37, %s38
      %p52 = scmp.eq.s32.totalorder %s16, 3
      %p53 = por %p51, %p52
      %p55 = scmp.ne.s32.totalorder %s38, %s54
      %p56 = scmp.eq.s32.totalorder %s16, 0
      %p57 = por %p55, %p56
      %s58 = ssub.s32 %s18, %s25
      %p59 = scmp.eq.s32.totalorder %s58, 0
      %s61 = sadd.s32 %s60, 1
      %s62 = scalar_select %p59, %s60, %s61
      %p65 = pneg %p59
      %p66 = scmp.eq.s32.totalorder %s10, 3
      %p67 = por %p65, %p66
      %p68 = scmp.ne.s32.totalorder %s60, %s63
      %p69 = scmp.eq.s32.totalorder %s10, 0
      %p70 = por %p68, %p69
      %p71 = scmp.ne.s32.totalorder %s60, %s63
      %p72 = scmp.eq.s32.totalorder %s15, 3
      %p73 = por %p71, %p72
      %p74 = scmp.ne.s32.totalorder %s63, %s64
      %p75 = scmp.eq.s32.totalorder %s15, 0
      %p76 = por %p74, %p75
      %p77 = scmp.ne.s32.totalorder %s63, %s64
      %p78 = scmp.eq.s32.totalorder %s16, 3
      %p79 = por %p77, %p78
      %p81 = scmp.ne.s32.totalorder %s64, %s80
      %p82 = scmp.eq.s32.totalorder %s16, 0
      %p83 = por %p81, %p82
      %s84 = ssub.s32 %s17, %s29
      %p85 = scmp.eq.s32.totalorder %s84, 0
      %s87 = sadd.s32 %s86, 1
      %s88 = scalar_select %p85, %s86, %s87
      %p91 = pneg %p85
      %p92 = scmp.eq.s32.totalorder %s10, 3
      %p93 = por %p91, %p92
      %p94 = scmp.ne.s32.totalorder %s86, %s89
      %p95 = scmp.eq.s32.totalorder %s10, 0
      %p96 = por %p94, %p95
      %p97 = scmp.ne.s32.totalorder %s86, %s89
      %p98 = scmp.eq.s32.totalorder %s15, 3
      %p99 = por %p97, %p98
      %p100 = scmp.ne.s32.totalorder %s89, %s90
      %p101 = scmp.eq.s32.totalorder %s15, 0
      %p102 = por %p100, %p101
      %p103 = scmp.ne.s32.totalorder %s89, %s90
      %p104 = scmp.eq.s32.totalorder %s16, 3
      %p105 = por %p103, %p104
      %p107 = scmp.ne.s32.totalorder %s90, %s106
      %p108 = scmp.eq.s32.totalorder %s16, 0
      %p109 = por %p107, %p108
      %s111 = sadd.s32 %s110, 1
      %p114 = scmp.eq.s32.totalorder %s10, 3
      %p115 = scmp.ne.s32.totalorder %s110, %s112
      %p116 = scmp.eq.s32.totalorder %s10, 0
      %p117 = por %p115, %p116
      %p118 = scmp.ne.s32.totalorder %s110, %s112
      %p119 = scmp.eq.s32.totalorder %s15, 3
      %p120 = por %p118, %p119
      %p121 = scmp.ne.s32.totalorder %s112, %s113
      %p122 = scmp.eq.s32.totalorder %s15, 0
      %p123 = por %p121, %p122
      %p124 = scmp.ne.s32.totalorder %s112, %s113
      %p125 = scmp.eq.s32.totalorder %s16, 3
      %p126 = por %p124, %p125
      %p128 = scmp.ne.s32.totalorder %s113, %s127
      %p129 = scmp.eq.s32.totalorder %s16, 0
      %p130 = por %p128, %p129
      %s131 = ssub.s32 %s17, %s29
      %p132 = scmp.eq.s32.totalorder %s131, 0
      %s134 = sadd.s32 %s133, 1
      %s135 = scalar_select %p132, %s133, %s134
      %p138 = pneg %p132
      %p139 = scmp.eq.s32.totalorder %s10, 3
      %p140 = por %p138, %p139
      %p141 = scmp.ne.s32.totalorder %s133, %s136
      %p142 = scmp.eq.s32.totalorder %s10, 0
      %p143 = por %p141, %p142
      %p144 = scmp.ne.s32.totalorder %s133, %s136
      %p145 = scmp.eq.s32.totalorder %s15, 3
      %p146 = por %p144, %p145
      %p147 = scmp.ne.s32.totalorder %s136, %s137
      %p148 = scmp.eq.s32.totalorder %s15, 0
      %p149 = por %p147, %p148
      %p150 = scmp.ne.s32.totalorder %s136, %s137
      %p151 = scmp.eq.s32.totalorder %s16, 3
      %p152 = por %p150, %p151
      %p154 = scmp.ne.s32.totalorder %s137, %s153
      %p155 = scmp.eq.s32.totalorder %s16, 0
      %p156 = por %p154, %p155
      %p157 = scmp.le.s32.totalorder 1, %s10
      %p158 = scmp.lt.s32.totalorder %s10, 5
      %p159 = pnand %p157, %p158
      %p160 = pneg %p159
      // Predicated region
      $region9: #{_lambda_.5} parent=5 // pred_check
        _
      $region10: #{_lambda_.5} parent=5 // pred_check_branch
        %162 = sbr.rel (%p159) target = $region12
      $region11: #{_lambda_.5} parent=5 // pred_region
        %s163 = ssub.s32 %s10, 1
        // Predicated region
        $region13: #{_lambda_.5} parent=11 // pred_check
          %p164 = pneg %p123
        $region14: #{_lambda_.5} parent=11 // pred_check_branch
          %166 = sbr.rel (%p164) target = $region16
        $region15: #{_lambda_.5} parent=11 // pred_region
          _
        $region16: #{_lambda_.5} parent=11 // pred_fallthru
          _
      $region12: #{_lambda_.5} parent=5 // pred_fallthru
        _
      %p167 = scmp.lt.s32.totalorder %s10, 4
      // Predicated region
      $region17: #{_lambda_.5} parent=5 // pred_check
        %p168 = pneg %p167
      $region18: #{_lambda_.5} parent=5 // pred_check_branch
        %170 = sbr.rel (%p168) target = $region20
      $region19: #{_lambda_.5} parent=5 // pred_region
        // Predicated region
        $region21: #{_lambda_.5} parent=19 // pred_check
          %p171 = pneg %p44
        $region22: #{_lambda_.5} parent=19 // pred_check_branch
          %173 = sbr.rel (%p171) target = $region24
        $region23: #{_lambda_.5} parent=19 // pred_region
          %s174 = sand.u32 %s34, 1
          %s175 = sand.u32 %s34, 1
          %s176 = smul.addr %s175, 128
          %s177 = scalar_lea.vmem [#allocation3], %s176
          %s178 = smul.u32 8, %s17
          %s179 = smul.u32 2, %s18
          %s180 = smul.addr %s178, 4
          %s181 = sadd.s32 %s179, %s180
          %s182 = smul.addr %s181, 8
          %s183 = scalar_lea.vmem %s0, %s182
          // Predicated region
          $region25: #{_lambda_.5} parent=23 // pred_check
            _
          $region26: #{_lambda_.5} parent=23 // pred_check_branch
            %185 = sbr.rel (0) target = $region28
          $region27: #{_lambda_.5} parent=23 // pred_region
            // Predicated region
            $region29: #{_lambda_.5} parent=27 // pred_check
              _
            $region30: #{_lambda_.5} parent=27 // pred_check_branch
              %187 = sbr.rel (0) target = $region32
            $region31: #{_lambda_.5} parent=27 // pred_region
              loop: start=0, step=1, limit=1
              $region33: #{_lambda_.5} parent=31 // loop_pre_header
                _
              $region34: #{_lambda_.5} parent=31 // loop_header
                %s189 = sphi 0, %s193
                %p190 = scmp.ge.s32.totalorder %s189, 1
                %s194 = sphi %s183, %s183
                %s195 = sphi %s177, %s177
              $region35: #{_lambda_.5} parent=31 // loop_header_branch
                %192 = sbr.rel (%p190) target = $region39
              $region36: #{_lambda_.5} parent=31 // loop_body
                %v196 = vld [vmem:[%s194] sm:$0xff]
                %197 = vst [vmem:[%s195] sm:$0xff] %v196
                %v198 = vld [vmem:[%s194 + $0x8] sm:$0xff]
                %199 = vst [vmem:[%s195 + $0x8] sm:$0xff] %v198
                %v200 = vld [vmem:[%s194 + $0x20] sm:$0xff]
                %201 = vst [vmem:[%s195 + $0x10] sm:$0xff] %v200
                %v202 = vld [vmem:[%s194 + $0x28] sm:$0xff]
                %203 = vst [vmem:[%s195 + $0x18] sm:$0xff] %v202
                %v204 = vld [vmem:[%s194 + $0x40] sm:$0xff]
                %205 = vst [vmem:[%s195 + $0x20] sm:$0xff] %v204
                %v206 = vld [vmem:[%s194 + $0x48] sm:$0xff]
                %207 = vst [vmem:[%s195 + $0x28] sm:$0xff] %v206
                %v208 = vld [vmem:[%s194 + $0x60] sm:$0xff]
                %209 = vst [vmem:[%s195 + $0x30] sm:$0xff] %v208
                %v210 = vld [vmem:[%s194 + $0x68] sm:$0xff]
                %211 = vst [vmem:[%s195 + $0x38] sm:$0xff] %v210
                %v212 = vld [vmem:[%s194 + $0x80] sm:$0xff]
                %213 = vst [vmem:[%s195 + $0x40] sm:$0xff] %v212
                %v214 = vld [vmem:[%s194 + $0x88] sm:$0xff]
                %215 = vst [vmem:[%s195 + $0x48] sm:$0xff] %v214
                %v216 = vld [vmem:[%s194 + $0xa0] sm:$0xff]
                %217 = vst [vmem:[%s195 + $0x50] sm:$0xff] %v216
                %v218 = vld [vmem:[%s194 + $0xa8] sm:$0xff]
                %219 = vst [vmem:[%s195 + $0x58] sm:$0xff] %v218
                %v220 = vld [vmem:[%s194 + $0xc0] sm:$0xff]
                %221 = vst [vmem:[%s195 + $0x60] sm:$0xff] %v220
                %v222 = vld [vmem:[%s194 + $0xc8] sm:$0xff]
                %223 = vst [vmem:[%s195 + $0x68] sm:$0xff] %v222
                %v224 = vld [vmem:[%s194 + $0xe0] sm:$0xff]
                %225 = vst [vmem:[%s195 + $0x70] sm:$0xff] %v224
                %v226 = vld [vmem:[%s194 + $0xe8] sm:$0xff]
                %227 = vst [vmem:[%s195 + $0x78] sm:$0xff] %v226
              $region37: #{_lambda_.5} parent=31 // loop_footer
                %s193 = sadd.s32 1, %s189
              $region38: #{_lambda_.5} parent=31 // loop_footer_branch
                %188 = sbr.rel target = $region34
              $region39: #{_lambda_.5} parent=31 // loop_exit
                _
            $region32: #{_lambda_.5} parent=27 // pred_fallthru
              _
            // Predicated region
            $region40: #{_lambda_.5} parent=27 // pred_check
              _
            $region41: #{_lambda_.5} parent=27 // pred_check_branch
              %229 = sbr.rel target = $region43
            $region42: #{_lambda_.5} parent=27 // pred_region
              _
            $region43: #{_lambda_.5} parent=27 // pred_fallthru
              _
          $region28: #{_lambda_.5} parent=23 // pred_fallthru
            _
          %230 = vnop
        $region24: #{_lambda_.5} parent=19 // pred_fallthru
          _
        // Predicated region
        $region44: #{_lambda_.5} parent=19 // pred_check
          %p231 = pneg %p70
        $region45: #{_lambda_.5} parent=19 // pred_check_branch
          %233 = sbr.rel (%p231) target = $region47
        $region46: #{_lambda_.5} parent=19 // pred_region
          %s234 = smul.u32 32, %s18
          %p235 = scmp.lt.s32.totalorder %s234, 63
          %s236 = scalar_select %p235, %s234, 63
          %s237 = smul.addr %s236, 4
          %s238 = scalar_lea.vmem %s1, %s237
          %s239 = smul.u32 32, %s18
        $region47: #{_lambda_.5} parent=19 // pred_fallthru
          _
        // Predicated region
        $region48: #{_lambda_.5} parent=19 // pred_check
          %p240 = pneg %p96
        $region49: #{_lambda_.5} parent=19 // pred_check_branch
          %242 = sbr.rel (%p240) target = $region51
        $region50: #{_lambda_.5} parent=19 // pred_region
          %s243 = smul.u32 32, %s17
          %p244 = scmp.lt.s32.totalorder %s243, 63
          %s245 = scalar_select %p244, %s243, 63
          %s246 = smul.addr %s245, 8
          %s247 = scalar_lea.vmem %s2, %s246
          %s248 = smul.u32 32, %s17
        $region51: #{_lambda_.5} parent=19 // pred_fallthru
          _
      $region20: #{_lambda_.5} parent=5 // pred_fallthru
        _
      %p249 = scmp.le.s32.totalorder 1, %s10
      %p250 = scmp.lt.s32.totalorder %s10, 5
      %p251 = pnand %p249, %p250
      %p252 = pneg %p251
      // Predicated region
      $region52: #{_lambda_.5} parent=5 // pred_check
        _
      $region53: #{_lambda_.5} parent=5 // pred_check_branch
        %254 = sbr.rel (%p251) target = $region55
      $region54: #{_lambda_.5} parent=5 // pred_region
        %s255 = ssub.s32 %s10, 1
        %s256 = sand.u32 %s37, 1
        %s257 = sand.u32 %s37, 1
        %s258 = smul.addr %s257, 128
        %s259 = scalar_lea.vmem [#allocation3], %s258
        // Predicated region
        $region56: #{_lambda_.5} parent=54 // pred_check
          %p260 = pneg %p50
        $region57: #{_lambda_.5} parent=54 // pred_check_branch
          %262 = sbr.rel (%p260) target = $region59
        $region58: #{_lambda_.5} parent=54 // pred_region
          _
        $region59: #{_lambda_.5} parent=54 // pred_fallthru
          _
        %s263 = sand.u32 %s37, 1
        %s264 = sand.u32 %s37, 1
        %s265 = smul.addr %s264, 128
        %s266 = scalar_lea.vmem [#allocation3], %s265
        %p267 = pneg %p50
        %p268 = pneg %p47
        %s269 = smul.u32 32, %s20
        %p270 = scmp.lt.s32.totalorder %s269, 63
        %s271 = scalar_select %p270, %s269, 63
        %s272 = smul.addr %s271, 4
        %s273 = scalar_lea.vmem %s1, %s272
        %p274 = pneg %p76
        %p275 = pneg %p73
        %s276 = smul.u32 32, %s19
        %p277 = scmp.lt.s32.totalorder %s276, 63
        %s278 = scalar_select %p277, %s276, 63
        %s279 = smul.addr %s278, 8
        %s280 = scalar_lea.vmem %s2, %s279
        %p281 = pneg %p102
        %p282 = pneg %p99
        %p283 = pneg %p123
        %p284 = pneg %p120
        %p285 = pneg %p149
        %p286 = pneg %p146
        %s287 = smul.u32 32, %s19
        %p288 = scmp.lt.s32.totalorder %s287, 63
        %s289 = scalar_select %p288, %s287, 63
        %s290 = smul.addr %s289, 4
        %s291 = scalar_lea.vmem %s4, %s290
        %s292 = smul.u32 8, %s19
        %s293 = smul.u32 2, %s20
        %s294 = smul.u32 32, %s20
        %p295 = scmp.lt.s32.totalorder %s294, 63
        %s296 = scalar_select %p295, %s294, 63
        %s297 = smul.addr %s296, 4
        %s298 = scalar_lea.vmem %s1, %s297
        %s299 = smul.u32 32, %s20
        %s300 = smul.u32 32, %s19
        %p301 = scmp.lt.s32.totalorder %s300, 63
        %s302 = scalar_select %p301, %s300, 63
        %s303 = smul.addr %s302, 8
        %s304 = scalar_lea.vmem %s2, %s303
        %s305 = smul.u32 32, %s19
        %s306 = smul.u32 32, %s19
        %p307 = scmp.lt.s32.totalorder %s306, 63
        %s308 = scalar_select %p307, %s306, 63
        %s309 = smul.addr %s308, 4
        %s310 = scalar_lea.vmem %s4, %s309
        %s311 = smul.u32 32, %s19
        %p312 = scmp.eq.s32.totalorder %s20, 0
        // Predicated region
        $region60: #{_lambda_.5} parent=54 // pred_check
          %p313 = pneg %p312
        $region61: #{_lambda_.5} parent=54 // pred_check_branch
          %315 = sbr.rel (%p313) target = $region63
        $region62: #{_lambda_.5} parent=54 // pred_region
          %316 = vst [vmem:[#allocation2] sm:$0xff] 0.0
          %317 = vst [vmem:[#allocation2 + $0x8] sm:$0xff] 0.0
          %318 = vst [vmem:[#allocation2 + $0x10] sm:$0xff] 0.0
          %319 = vst [vmem:[#allocation2 + $0x18] sm:$0xff] 0.0
          %320 = vst [vmem:[#allocation2 + $0x20] sm:$0xff] 0.0
          %321 = vst [vmem:[#allocation2 + $0x28] sm:$0xff] 0.0
          %322 = vst [vmem:[#allocation2 + $0x30] sm:$0xff] 0.0
          %323 = vst [vmem:[#allocation2 + $0x38] sm:$0xff] 0.0
          %324 = vst [vmem:[#allocation2 + $0x40] sm:$0xff] 0.0
          %325 = vst [vmem:[#allocation2 + $0x48] sm:$0xff] 0.0
          %326 = vst [vmem:[#allocation2 + $0x50] sm:$0xff] 0.0
          %327 = vst [vmem:[#allocation2 + $0x58] sm:$0xff] 0.0
          %328 = vst [vmem:[#allocation2 + $0x60] sm:$0xff] 0.0
          %329 = vst [vmem:[#allocation2 + $0x68] sm:$0xff] 0.0
          %330 = vst [vmem:[#allocation2 + $0x70] sm:$0xff] 0.0
          %331 = vst [vmem:[#allocation2 + $0x78] sm:$0xff] 0.0
          %332 = vst [vmem:[#allocation2 + $0x80] sm:$0xff] 0.0
          %333 = vst [vmem:[#allocation2 + $0x88] sm:$0xff] 0.0
          %334 = vst [vmem:[#allocation2 + $0x90] sm:$0xff] 0.0
          %335 = vst [vmem:[#allocation2 + $0x98] sm:$0xff] 0.0
          %336 = vst [vmem:[#allocation2 + $0xa0] sm:$0xff] 0.0
          %337 = vst [vmem:[#allocation2 + $0xa8] sm:$0xff] 0.0
          %338 = vst [vmem:[#allocation2 + $0xb0] sm:$0xff] 0.0
          %339 = vst [vmem:[#allocation2 + $0xb8] sm:$0xff] 0.0
          %340 = vst [vmem:[#allocation2 + $0xc0] sm:$0xff] 0.0
          %341 = vst [vmem:[#allocation2 + $0xc8] sm:$0xff] 0.0
          %342 = vst [vmem:[#allocation2 + $0xd0] sm:$0xff] 0.0
          %343 = vst [vmem:[#allocation2 + $0xd8] sm:$0xff] 0.0
          %344 = vst [vmem:[#allocation2 + $0xe0] sm:$0xff] 0.0
          %345 = vst [vmem:[#allocation2 + $0xe8] sm:$0xff] 0.0
          %346 = vst [vmem:[#allocation2 + $0xf0] sm:$0xff] 0.0
          %347 = vst [vmem:[#allocation2 + $0xf8] sm:$0xff] 0.0
        $region63: #{_lambda_.5} parent=54 // pred_fallthru
          _
        %v348 = vld [vmem:[%s259] sm:$0xff]
        %v349 = vld [vmem:[%s259 + $0x8] sm:$0xff]
        %v350 = vld [vmem:[%s259 + $0x10] sm:$0xff]
        %v351 = vld [vmem:[%s259 + $0x18] sm:$0xff]
        %v352 = vld [vmem:[%s259 + $0x20] sm:$0xff]
        %v353 = vld [vmem:[%s259 + $0x28] sm:$0xff]
        %v354 = vld [vmem:[%s259 + $0x30] sm:$0xff]
        %v355 = vld [vmem:[%s259 + $0x38] sm:$0xff]
        %v356 = vld [vmem:[%s259 + $0x40] sm:$0xff]
        %v357 = vld [vmem:[%s259 + $0x48] sm:$0xff]
        %v358 = vld [vmem:[%s259 + $0x50] sm:$0xff]
        %v359 = vld [vmem:[%s259 + $0x58] sm:$0xff]
        %v360 = vld [vmem:[%s259 + $0x60] sm:$0xff]
        %v361 = vld [vmem:[%s259 + $0x68] sm:$0xff]
        %v362 = vld [vmem:[%s259 + $0x70] sm:$0xff]
        %v363 = vld [vmem:[%s259 + $0x78] sm:$0xff]
        %v364 = vunpack.c.0.s8 %v348
        %v365 = vunpack.c.0.s8 %v349
        %v366 = vunpack.c.1.s8 %v348
        %v367 = vunpack.c.1.s8 %v349
        %v368 = vunpack.c.2.s8 %v348
        %v369 = vunpack.c.2.s8 %v349
        %v370 = vunpack.c.3.s8 %v348
        %v371 = vunpack.c.3.s8 %v349
        %v372 = vunpack.c.0.s8 %v350
        %v373 = vunpack.c.0.s8 %v351
        %v374 = vunpack.c.1.s8 %v350
        %v375 = vunpack.c.1.s8 %v351
        %v376 = vunpack.c.2.s8 %v350
        %v377 = vunpack.c.2.s8 %v351
        %v378 = vunpack.c.3.s8 %v350
        %v379 = vunpack.c.3.s8 %v351
        %v380 = vunpack.c.0.s8 %v352
        %v381 = vunpack.c.0.s8 %v353
        %v382 = vunpack.c.1.s8 %v352
        %v383 = vunpack.c.1.s8 %v353
        %v384 = vunpack.c.2.s8 %v352
        %v385 = vunpack.c.2.s8 %v353
        %v386 = vunpack.c.3.s8 %v352
        %v387 = vunpack.c.3.s8 %v353
        %v388 = vunpack.c.0.s8 %v354
        %v389 = vunpack.c.0.s8 %v355
        %v390 = vunpack.c.1.s8 %v354
        %v391 = vunpack.c.1.s8 %v355
        %v392 = vunpack.c.2.s8 %v354
        %v393 = vunpack.c.2.s8 %v355
        %v394 = vunpack.c.3.s8 %v354
        %v395 = vunpack.c.3.s8 %v355
        %v396 = vunpack.c.0.s8 %v356
        %v397 = vunpack.c.0.s8 %v357
        %v398 = vunpack.c.1.s8 %v356
        %v399 = vunpack.c.1.s8 %v357
        %v400 = vunpack.c.2.s8 %v356
        %v401 = vunpack.c.2.s8 %v357
        %v402 = vunpack.c.3.s8 %v356
        %v403 = vunpack.c.3.s8 %v357
        %v404 = vunpack.c.0.s8 %v358
        %v405 = vunpack.c.0.s8 %v359
        %v406 = vunpack.c.1.s8 %v358
        %v407 = vunpack.c.1.s8 %v359
        %v408 = vunpack.c.2.s8 %v358
        %v409 = vunpack.c.2.s8 %v359
        %v410 = vunpack.c.3.s8 %v358
        %v411 = vunpack.c.3.s8 %v359
        %v412 = vunpack.c.0.s8 %v360
        %v413 = vunpack.c.0.s8 %v361
        %v414 = vunpack.c.1.s8 %v360
        %v415 = vunpack.c.1.s8 %v361
        %v416 = vunpack.c.2.s8 %v360
        %v417 = vunpack.c.2.s8 %v361
        %v418 = vunpack.c.3.s8 %v360
        %v419 = vunpack.c.3.s8 %v361
        %v420 = vunpack.c.0.s8 %v362
        %v421 = vunpack.c.0.s8 %v363
        %v422 = vunpack.c.1.s8 %v362
        %v423 = vunpack.c.1.s8 %v363
        %v424 = vunpack.c.2.s8 %v362
        %v425 = vunpack.c.2.s8 %v363
        %v426 = vunpack.c.3.s8 %v362
        %v427 = vunpack.c.3.s8 %v363
        %v428 = vcvt.s32.f32 %v364
        %v429 = vcvt.s32.f32 %v365
        %v430 = vcvt.s32.f32 %v366
        %v431 = vcvt.s32.f32 %v367
        %v432 = vcvt.s32.f32 %v368
        %v433 = vcvt.s32.f32 %v369
        %v434 = vcvt.s32.f32 %v370
        %v435 = vcvt.s32.f32 %v371
        %v436 = vcvt.s32.f32 %v372
        %v437 = vcvt.s32.f32 %v373
        %v438 = vcvt.s32.f32 %v374
        %v439 = vcvt.s32.f32 %v375
        %v440 = vcvt.s32.f32 %v376
        %v441 = vcvt.s32.f32 %v377
        %v442 = vcvt.s32.f32 %v378
        %v443 = vcvt.s32.f32 %v379
        %v444 = vcvt.s32.f32 %v380
        %v445 = vcvt.s32.f32 %v381
        %v446 = vcvt.s32.f32 %v382
        %v447 = vcvt.s32.f32 %v383
        %v448 = vcvt.s32.f32 %v384
        %v449 = vcvt.s32.f32 %v385
        %v450 = vcvt.s32.f32 %v386
        %v451 = vcvt.s32.f32 %v387
        %v452 = vcvt.s32.f32 %v388
        %v453 = vcvt.s32.f32 %v389
        %v454 = vcvt.s32.f32 %v390
        %v455 = vcvt.s32.f32 %v391
        %v456 = vcvt.s32.f32 %v392
        %v457 = vcvt.s32.f32 %v393
        %v458 = vcvt.s32.f32 %v394
        %v459 = vcvt.s32.f32 %v395
        %v460 = vcvt.s32.f32 %v396
        %v461 = vcvt.s32.f32 %v397
        %v462 = vcvt.s32.f32 %v398
        %v463 = vcvt.s32.f32 %v399
        %v464 = vcvt.s32.f32 %v400
        %v465 = vcvt.s32.f32 %v401
        %v466 = vcvt.s32.f32 %v402
        %v467 = vcvt.s32.f32 %v403
        %v468 = vcvt.s32.f32 %v404
        %v469 = vcvt.s32.f32 %v405
        %v470 = vcvt.s32.f32 %v406
        %v471 = vcvt.s32.f32 %v407
        %v472 = vcvt.s32.f32 %v408
        %v473 = vcvt.s32.f32 %v409
        %v474 = vcvt.s32.f32 %v410
        %v475 = vcvt.s32.f32 %v411
        %v476 = vcvt.s32.f32 %v412
        %v477 = vcvt.s32.f32 %v413
        %v478 = vcvt.s32.f32 %v414
        %v479 = vcvt.s32.f32 %v415
        %v480 = vcvt.s32.f32 %v416
        %v481 = vcvt.s32.f32 %v417
        %v482 = vcvt.s32.f32 %v418
        %v483 = vcvt.s32.f32 %v419
        %v484 = vcvt.s32.f32 %v420
        %v485 = vcvt.s32.f32 %v421
        %v486 = vcvt.s32.f32 %v422
        %v487 = vcvt.s32.f32 %v423
        %v488 = vcvt.s32.f32 %v424
        %v489 = vcvt.s32.f32 %v425
        %v490 = vcvt.s32.f32 %v426
        %v491 = vcvt.s32.f32 %v427
        %v492 = vpack.c.bf16 %v430, %v428
        %v493 = vpack.c.bf16 %v431, %v429
        %v494 = vpack.c.bf16 %v434, %v432
        %v495 = vpack.c.bf16 %v435, %v433
        %v496 = vpack.c.bf16 %v438, %v436
        %v497 = vpack.c.bf16 %v439, %v437
        %v498 = vpack.c.bf16 %v442, %v440
        %v499 = vpack.c.bf16 %v443, %v441
        %v500 = vpack.c.bf16 %v446, %v444
        %v501 = vpack.c.bf16 %v447, %v445
        %v502 = vpack.c.bf16 %v450, %v448
        %v503 = vpack.c.bf16 %v451, %v449
        %v504 = vpack.c.bf16 %v454, %v452
        %v505 = vpack.c.bf16 %v455, %v453
        %v506 = vpack.c.bf16 %v458, %v456
        %v507 = vpack.c.bf16 %v459, %v457
        %v508 = vpack.c.bf16 %v462, %v460
        %v509 = vpack.c.bf16 %v463, %v461
        %v510 = vpack.c.bf16 %v466, %v464
        %v511 = vpack.c.bf16 %v467, %v465
        %v512 = vpack.c.bf16 %v470, %v468
        %v513 = vpack.c.bf16 %v471, %v469
        %v514 = vpack.c.bf16 %v474, %v472
        %v515 = vpack.c.bf16 %v475, %v473
        %v516 = vpack.c.bf16 %v478, %v476
        %v517 = vpack.c.bf16 %v479, %v477
        %v518 = vpack.c.bf16 %v482, %v480
        %v519 = vpack.c.bf16 %v483, %v481
        %v520 = vpack.c.bf16 %v486, %v484
        %v521 = vpack.c.bf16 %v487, %v485
        %v522 = vpack.c.bf16 %v490, %v488
        %v523 = vpack.c.bf16 %v491, %v489
        %v524 = vld [vmem:[#allocation2] sm:$0xff]
        %v525 = vld [vmem:[#allocation2 + $0x8] sm:$0xff]
        %v526 = vld [vmem:[#allocation2 + $0x10] sm:$0xff]
        %v527 = vld [vmem:[#allocation2 + $0x18] sm:$0xff]
        %v528 = vld [vmem:[#allocation2 + $0x20] sm:$0xff]
        %v529 = vld [vmem:[#allocation2 + $0x28] sm:$0xff]
        %v530 = vld [vmem:[#allocation2 + $0x30] sm:$0xff]
        %v531 = vld [vmem:[#allocation2 + $0x38] sm:$0xff]
        %v532 = vld [vmem:[#allocation2 + $0x40] sm:$0xff]
        %v533 = vld [vmem:[#allocation2 + $0x48] sm:$0xff]
        %v534 = vld [vmem:[#allocation2 + $0x50] sm:$0xff]
        %v535 = vld [vmem:[#allocation2 + $0x58] sm:$0xff]
        %v536 = vld [vmem:[#allocation2 + $0x60] sm:$0xff]
        %v537 = vld [vmem:[#allocation2 + $0x68] sm:$0xff]
        %v538 = vld [vmem:[#allocation2 + $0x70] sm:$0xff]
        %v539 = vld [vmem:[#allocation2 + $0x78] sm:$0xff]
        %v540 = vld [vmem:[#allocation2 + $0x80] sm:$0xff]
        %v541 = vld [vmem:[#allocation2 + $0x88] sm:$0xff]
        %v542 = vld [vmem:[#allocation2 + $0x90] sm:$0xff]
        %v543 = vld [vmem:[#allocation2 + $0x98] sm:$0xff]
        %v544 = vld [vmem:[#allocation2 + $0xa0] sm:$0xff]
        %v545 = vld [vmem:[#allocation2 + $0xa8] sm:$0xff]
        %v546 = vld [vmem:[#allocation2 + $0xb0] sm:$0xff]
        %v547 = vld [vmem:[#allocation2 + $0xb8] sm:$0xff]
        %v548 = vld [vmem:[#allocation2 + $0xc0] sm:$0xff]
        %v549 = vld [vmem:[#allocation2 + $0xc8] sm:$0xff]
        %v550 = vld [vmem:[#allocation2 + $0xd0] sm:$0xff]
        %v551 = vld [vmem:[#allocation2 + $0xd8] sm:$0xff]
        %v552 = vld [vmem:[#allocation2 + $0xe0] sm:$0xff]
        %v553 = vld [vmem:[#allocation2 + $0xe8] sm:$0xff]
        %v554 = vld [vmem:[#allocation2 + $0xf0] sm:$0xff]
        %v555 = vld [vmem:[#allocation2 + $0xf8] sm:$0xff]
        %v556 = vld [vmem:[%s298] sm:$0xf]
        %v557 = vld [vmem:[%s298 + $0x4] sm:$0xf]
        %v558 = vld [vmem:[%s298 + $0x8] sm:$0xf]
        %v559 = vld [vmem:[%s298 + $0xc] sm:$0xf]
        %v560 = vld [vmem:[%s298 + $0x10] sm:$0xf]
        %v561 = vld [vmem:[%s298 + $0x14] sm:$0xf]
        %v562 = vld [vmem:[%s298 + $0x18] sm:$0xf]
        %v563 = vld [vmem:[%s298 + $0x1c] sm:$0xf]
        %v564 = vld [vmem:[%s298 + $0x20] sm:$0xf]
        %v565 = vld [vmem:[%s298 + $0x24] sm:$0xf]
        %v566 = vld [vmem:[%s298 + $0x28] sm:$0xf]
        %v567 = vld [vmem:[%s298 + $0x2c] sm:$0xf]
        %v568 = vld [vmem:[%s298 + $0x30] sm:$0xf]
        %v569 = vld [vmem:[%s298 + $0x34] sm:$0xf]
        %v570 = vld [vmem:[%s298 + $0x38] sm:$0xf]
        %v571 = vld [vmem:[%s298 + $0x3c] sm:$0xf]
        %v572 = vld [vmem:[%s298 + $0x40] sm:$0xf]
        %v573 = vld [vmem:[%s298 + $0x44] sm:$0xf]
        %v574 = vld [vmem:[%s298 + $0x48] sm:$0xf]
        %v575 = vld [vmem:[%s298 + $0x4c] sm:$0xf]
        %v576 = vld [vmem:[%s298 + $0x50] sm:$0xf]
        %v577 = vld [vmem:[%s298 + $0x54] sm:$0xf]
        %v578 = vld [vmem:[%s298 + $0x58] sm:$0xf]
        %v579 = vld [vmem:[%s298 + $0x5c] sm:$0xf]
        %v580 = vld [vmem:[%s298 + $0x60] sm:$0xf]
        %v581 = vld [vmem:[%s298 + $0x64] sm:$0xf]
        %v582 = vld [vmem:[%s298 + $0x68] sm:$0xf]
        %v583 = vld [vmem:[%s298 + $0x6c] sm:$0xf]
        %v584 = vld [vmem:[%s298 + $0x70] sm:$0xf]
        %v585 = vld [vmem:[%s298 + $0x74] sm:$0xf]
        %v586 = vld [vmem:[%s298 + $0x78] sm:$0xf]
        %v587 = vld [vmem:[%s298 + $0x7c] sm:$0xf]
        %v620 = vunpack.c.l.b16 %v556
        %v621 = vunpack.c.l.b16 %v557
        %v622 = vunpack.c.l.b16 %v558
        %v623 = vunpack.c.l.b16 %v559
        %v624 = vunpack.c.l.b16 %v560
        %v625 = vunpack.c.l.b16 %v561
        %v626 = vunpack.c.l.b16 %v562
        %v627 = vunpack.c.l.b16 %v563
        %v628 = vunpack.c.l.b16 %v564
        %v629 = vunpack.c.l.b16 %v565
        %v630 = vunpack.c.l.b16 %v566
        %v631 = vunpack.c.l.b16 %v567
        %v632 = vunpack.c.l.b16 %v568
        %v633 = vunpack.c.l.b16 %v569
        %v634 = vunpack.c.l.b16 %v570
        %v635 = vunpack.c.l.b16 %v571
        %v636 = vunpack.c.l.b16 %v572
        %v637 = vunpack.c.l.b16 %v573
        %v638 = vunpack.c.l.b16 %v574
        %v639 = vunpack.c.l.b16 %v575
        %v640 = vunpack.c.l.b16 %v576
        %v641 = vunpack.c.l.b16 %v577
        %v642 = vunpack.c.l.b16 %v578
        %v643 = vunpack.c.l.b16 %v579
        %v644 = vunpack.c.l.b16 %v580
        %v645 = vunpack.c.l.b16 %v581
        %v646 = vunpack.c.l.b16 %v582
        %v647 = vunpack.c.l.b16 %v583
        %v648 = vunpack.c.l.b16 %v584
        %v649 = vunpack.c.l.b16 %v585
        %v650 = vunpack.c.l.b16 %v586
        %v651 = vunpack.c.l.b16 %v587
        %v652 = vpack.c.b16 %v621, %v620
        %v653 = vpack.c.b16 %v623, %v622
        %v654 = vpack.c.b16 %v625, %v624
        %v655 = vpack.c.b16 %v627, %v626
        %v656 = vpack.c.b16 %v629, %v628
        %v657 = vpack.c.b16 %v631, %v630
        %v658 = vpack.c.b16 %v633, %v632
        %v659 = vpack.c.b16 %v635, %v634
        %v660 = vpack.c.b16 %v637, %v636
        %v661 = vpack.c.b16 %v639, %v638
        %v662 = vpack.c.b16 %v641, %v640
        %v663 = vpack.c.b16 %v643, %v642
        %v664 = vpack.c.b16 %v645, %v644
        %v665 = vpack.c.b16 %v647, %v646
        %v666 = vpack.c.b16 %v649, %v648
        %v667 = vpack.c.b16 %v651, %v650
        %684 = vmatpush.bf16.msra.mxu0 %v659
        %685 = vmatpush.bf16.msra.mxu0 %v658
        %686 = vmatpush.bf16.msra.mxu0 %v657
        %687 = vmatpush.bf16.msra.mxu0 %v656
        %688 = vmatpush.bf16.msra.mxu0 %v655
        %689 = vmatpush.bf16.msra.mxu0 %v654
        %690 = vmatpush.bf16.msra.mxu0 %v653
        %691 = vmatpush.bf16.msra.mxu0 %v652
        %692 = vmatmul.bf16.gmra.mxu0 %v492
        %v693 = vpop.f32.mrf.mxu0
        %v694 = vadd.f32 0.0, %v693
        %v695 = vpop.f32.mrf.mxu0
        %v696 = vadd.f32 0.0, %v695
        %697 = vmatmul.bf16.gmra.mxu0 %v494
        %v698 = vpop.f32.mrf.mxu0
        %v699 = vadd.f32 0.0, %v698
        %v700 = vpop.f32.mrf.mxu0
        %v701 = vadd.f32 0.0, %v700
        %702 = vmatmul.bf16.gmra.mxu0 %v496
        %v703 = vpop.f32.mrf.mxu0
        %v704 = vadd.f32 0.0, %v703
        %v705 = vpop.f32.mrf.mxu0
        %v706 = vadd.f32 0.0, %v705
        %707 = vmatmul.bf16.gmra.mxu0 %v498
        %v708 = vpop.f32.mrf.mxu0
        %v709 = vadd.f32 0.0, %v708
        %v710 = vpop.f32.mrf.mxu0
        %v711 = vadd.f32 0.0, %v710
        %712 = vmatmul.bf16.gmra.mxu0 %v500
        %v713 = vpop.f32.mrf.mxu0
        %v714 = vadd.f32 0.0, %v713
        %v715 = vpop.f32.mrf.mxu0
        %v716 = vadd.f32 0.0, %v715
        %717 = vmatmul.bf16.gmra.mxu0 %v502
        %v718 = vpop.f32.mrf.mxu0
        %v719 = vadd.f32 0.0, %v718
        %v720 = vpop.f32.mrf.mxu0
        %v721 = vadd.f32 0.0, %v720
        %722 = vmatmul.bf16.gmra.mxu0 %v504
        %v723 = vpop.f32.mrf.mxu0
        %v724 = vadd.f32 0.0, %v723
        %v725 = vpop.f32.mrf.mxu0
        %v726 = vadd.f32 0.0, %v725
        %727 = vmatmul.bf16.gmra.mxu0 %v506
        %v728 = vpop.f32.mrf.mxu0
        %v729 = vadd.f32 0.0, %v728
        %v730 = vpop.f32.mrf.mxu0
        %v731 = vadd.f32 0.0, %v730
        %732 = vmatmul.bf16.gmra.mxu0 %v508
        %v733 = vpop.f32.mrf.mxu0
        %v734 = vadd.f32 0.0, %v733
        %v735 = vpop.f32.mrf.mxu0
        %v736 = vadd.f32 0.0, %v735
        %737 = vmatmul.bf16.gmra.mxu0 %v510
        %v738 = vpop.f32.mrf.mxu0
        %v739 = vadd.f32 0.0, %v738
        %v740 = vpop.f32.mrf.mxu0
        %v741 = vadd.f32 0.0, %v740
        %742 = vmatmul.bf16.gmra.mxu0 %v512
        %v743 = vpop.f32.mrf.mxu0
        %v744 = vadd.f32 0.0, %v743
        %v745 = vpop.f32.mrf.mxu0
        %v746 = vadd.f32 0.0, %v745
        %747 = vmatmul.bf16.gmra.mxu0 %v514
        %v748 = vpop.f32.mrf.mxu0
        %v749 = vadd.f32 0.0, %v748
        %v750 = vpop.f32.mrf.mxu0
        %v751 = vadd.f32 0.0, %v750
        %752 = vmatmul.bf16.gmra.mxu0 %v516
        %v753 = vpop.f32.mrf.mxu0
        %v754 = vadd.f32 0.0, %v753
        %v755 = vpop.f32.mrf.mxu0
        %v756 = vadd.f32 0.0, %v755
        %757 = vmatmul.bf16.gmra.mxu0 %v518
        %v758 = vpop.f32.mrf.mxu0
        %v759 = vadd.f32 0.0, %v758
        %v760 = vpop.f32.mrf.mxu0
        %v761 = vadd.f32 0.0, %v760
        %762 = vmatmul.bf16.gmra.mxu0 %v520
        %v763 = vpop.f32.mrf.mxu0
        %v764 = vadd.f32 0.0, %v763
        %v765 = vpop.f32.mrf.mxu0
        %v766 = vadd.f32 0.0, %v765
        %767 = vmatmul.bf16.gmra.mxu0 %v522
        %v768 = vpop.f32.mrf.mxu0
        %v769 = vadd.f32 0.0, %v768
        %v770 = vpop.f32.mrf.mxu0
        %v771 = vadd.f32 0.0, %v770
        %772 = vdwg.mxu0
        %773 = vmatpush.bf16.msra.mxu0 %v667
        %774 = vmatpush.bf16.msra.mxu0 %v666
        %775 = vmatpush.bf16.msra.mxu0 %v665
        %776 = vmatpush.bf16.msra.mxu0 %v664
        %777 = vmatpush.bf16.msra.mxu0 %v663
        %778 = vmatpush.bf16.msra.mxu0 %v662
        %779 = vmatpush.bf16.msra.mxu0 %v661
        %780 = vmatpush.bf16.msra.mxu0 %v660
        %781 = vmatmul.bf16.gmra.mxu0 %v493
        %v782 = vpop.f32.mrf.mxu0
        %v783 = vadd.f32 %v694, %v782
        %v784 = vpop.f32.mrf.mxu0
        %v785 = vadd.f32 %v696, %v784
        %786 = vmatmul.bf16.gmra.mxu0 %v495
        %v787 = vpop.f32.mrf.mxu0
        %v788 = vadd.f32 %v699, %v787
        %v789 = vpop.f32.mrf.mxu0
        %v790 = vadd.f32 %v701, %v789
        %791 = vmatmul.bf16.gmra.mxu0 %v497
        %v792 = vpop.f32.mrf.mxu0
        %v793 = vadd.f32 %v704, %v792
        %v794 = vpop.f32.mrf.mxu0
        %v795 = vadd.f32 %v706, %v794
        %796 = vmatmul.bf16.gmra.mxu0 %v499
        %v797 = vpop.f32.mrf.mxu0
        %v798 = vadd.f32 %v709, %v797
        %v799 = vpop.f32.mrf.mxu0
        %v800 = vadd.f32 %v711, %v799
        %801 = vmatmul.bf16.gmra.mxu0 %v501
        %v802 = vpop.f32.mrf.mxu0
        %v803 = vadd.f32 %v714, %v802
        %v804 = vpop.f32.mrf.mxu0
        %v805 = vadd.f32 %v716, %v804
        %806 = vmatmul.bf16.gmra.mxu0 %v503
        %v807 = vpop.f32.mrf.mxu0
        %v808 = vadd.f32 %v719, %v807
        %v809 = vpop.f32.mrf.mxu0
        %v810 = vadd.f32 %v721, %v809
        %811 = vmatmul.bf16.gmra.mxu0 %v505
        %v812 = vpop.f32.mrf.mxu0
        %v813 = vadd.f32 %v724, %v812
        %v814 = vpop.f32.mrf.mxu0
        %v815 = vadd.f32 %v726, %v814
        %816 = vmatmul.bf16.gmra.mxu0 %v507
        %v817 = vpop.f32.mrf.mxu0
        %v818 = vadd.f32 %v729, %v817
        %v819 = vpop.f32.mrf.mxu0
        %v820 = vadd.f32 %v731, %v819
        %821 = vmatmul.bf16.gmra.mxu0 %v509
        %v822 = vpop.f32.mrf.mxu0
        %v823 = vadd.f32 %v734, %v822
        %v824 = vpop.f32.mrf.mxu0
        %v825 = vadd.f32 %v736, %v824
        %826 = vmatmul.bf16.gmra.mxu0 %v511
        %v827 = vpop.f32.mrf.mxu0
        %v828 = vadd.f32 %v739, %v827
        %v829 = vpop.f32.mrf.mxu0
        %v830 = vadd.f32 %v741, %v829
        %831 = vmatmul.bf16.gmra.mxu0 %v513
        %v832 = vpop.f32.mrf.mxu0
        %v833 = vadd.f32 %v744, %v832
        %v834 = vpop.f32.mrf.mxu0
        %v835 = vadd.f32 %v746, %v834
        %836 = vmatmul.bf16.gmra.mxu0 %v515
        %v837 = vpop.f32.mrf.mxu0
        %v838 = vadd.f32 %v749, %v837
        %v839 = vpop.f32.mrf.mxu0
        %v840 = vadd.f32 %v751, %v839
        %841 = vmatmul.bf16.gmra.mxu0 %v517
        %v842 = vpop.f32.mrf.mxu0
        %v843 = vadd.f32 %v754, %v842
        %v844 = vpop.f32.mrf.mxu0
        %v845 = vadd.f32 %v756, %v844
        %846 = vmatmul.bf16.gmra.mxu0 %v519
        %v847 = vpop.f32.mrf.mxu0
        %v848 = vadd.f32 %v759, %v847
        %v849 = vpop.f32.mrf.mxu0
        %v850 = vadd.f32 %v761, %v849
        %851 = vmatmul.bf16.gmra.mxu0 %v521
        %v852 = vpop.f32.mrf.mxu0
        %v853 = vadd.f32 %v764, %v852
        %v854 = vpop.f32.mrf.mxu0
        %v855 = vadd.f32 %v766, %v854
        %856 = vmatmul.bf16.gmra.mxu0 %v523
        %v857 = vpop.f32.mrf.mxu0
        %v858 = vadd.f32 %v769, %v857
        %v859 = vpop.f32.mrf.mxu0
        %v860 = vadd.f32 %v771, %v859
        %861 = vdwg.mxu0
        %v862 = vadd.f32 %v524, %v783
        %v863 = vadd.f32 %v525, %v785
        %v864 = vadd.f32 %v526, %v788
        %v865 = vadd.f32 %v527, %v790
        %v866 = vadd.f32 %v528, %v793
        %v867 = vadd.f32 %v529, %v795
        %v868 = vadd.f32 %v530, %v798
        %v869 = vadd.f32 %v531, %v800
        %v870 = vadd.f32 %v532, %v803
        %v871 = vadd.f32 %v533, %v805
        %v872 = vadd.f32 %v534, %v808
        %v873 = vadd.f32 %v535, %v810
        %v874 = vadd.f32 %v536, %v813
        %v875 = vadd.f32 %v537, %v815
        %v876 = vadd.f32 %v538, %v818
        %v877 = vadd.f32 %v539, %v820
        %v878 = vadd.f32 %v540, %v823
        %v879 = vadd.f32 %v541, %v825
        %v880 = vadd.f32 %v542, %v828
        %v881 = vadd.f32 %v543, %v830
        %v882 = vadd.f32 %v544, %v833
        %v883 = vadd.f32 %v545, %v835
        %v884 = vadd.f32 %v546, %v838
        %v885 = vadd.f32 %v547, %v840
        %v886 = vadd.f32 %v548, %v843
        %v887 = vadd.f32 %v549, %v845
        %v888 = vadd.f32 %v550, %v848
        %v889 = vadd.f32 %v551, %v850
        %v890 = vadd.f32 %v552, %v853
        %v891 = vadd.f32 %v553, %v855
        %v892 = vadd.f32 %v554, %v858
        %v893 = vadd.f32 %v555, %v860
        %894 = vst [vmem:[#allocation2] sm:$0xff] %v862
        %895 = vst [vmem:[#allocation2 + $0x8] sm:$0xff] %v863
        %896 = vst [vmem:[#allocation2 + $0x10] sm:$0xff] %v864
        %897 = vst [vmem:[#allocation2 + $0x18] sm:$0xff] %v865
        %898 = vst [vmem:[#allocation2 + $0x20] sm:$0xff] %v866
        %899 = vst [vmem:[#allocation2 + $0x28] sm:$0xff] %v867
        %900 = vst [vmem:[#allocation2 + $0x30] sm:$0xff] %v868
        %901 = vst [vmem:[#allocation2 + $0x38] sm:$0xff] %v869
        %902 = vst [vmem:[#allocation2 + $0x40] sm:$0xff] %v870
        %903 = vst [vmem:[#allocation2 + $0x48] sm:$0xff] %v871
        %904 = vst [vmem:[#allocation2 + $0x50] sm:$0xff] %v872
        %905 = vst [vmem:[#allocation2 + $0x58] sm:$0xff] %v873
        %906 = vst [vmem:[#allocation2 + $0x60] sm:$0xff] %v874
        %907 = vst [vmem:[#allocation2 + $0x68] sm:$0xff] %v875
        %908 = vst [vmem:[#allocation2 + $0x70] sm:$0xff] %v876
        %909 = vst [vmem:[#allocation2 + $0x78] sm:$0xff] %v877
        %910 = vst [vmem:[#allocation2 + $0x80] sm:$0xff] %v878
        %911 = vst [vmem:[#allocation2 + $0x88] sm:$0xff] %v879
        %912 = vst [vmem:[#allocation2 + $0x90] sm:$0xff] %v880
        %913 = vst [vmem:[#allocation2 + $0x98] sm:$0xff] %v881
        %914 = vst [vmem:[#allocation2 + $0xa0] sm:$0xff] %v882
        %915 = vst [vmem:[#allocation2 + $0xa8] sm:$0xff] %v883
        %916 = vst [vmem:[#allocation2 + $0xb0] sm:$0xff] %v884
        %917 = vst [vmem:[#allocation2 + $0xb8] sm:$0xff] %v885
        %918 = vst [vmem:[#allocation2 + $0xc0] sm:$0xff] %v886
        %919 = vst [vmem:[#allocation2 + $0xc8] sm:$0xff] %v887
        %920 = vst [vmem:[#allocation2 + $0xd0] sm:$0xff] %v888
        %921 = vst [vmem:[#allocation2 + $0xd8] sm:$0xff] %v889
        %922 = vst [vmem:[#allocation2 + $0xe0] sm:$0xff] %v890
        %923 = vst [vmem:[#allocation2 + $0xe8] sm:$0xff] %v891
        %924 = vst [vmem:[#allocation2 + $0xf0] sm:$0xff] %v892
        %925 = vst [vmem:[#allocation2 + $0xf8] sm:$0xff] %v893
        %p926 = scmp.eq.s32.totalorder %s20, 1
        // Predicated region
        $region64: #{_lambda_.5} parent=54 // pred_check
          %p927 = pneg %p926
        $region65: #{_lambda_.5} parent=54 // pred_check_branch
          %929 = sbr.rel (%p927) target = $region67
        $region66: #{_lambda_.5} parent=54 // pred_region
          %v930 = vld [vmem:[#allocation2] sm:$0xff]
          %v931 = vld [vmem:[#allocation2 + $0x8] sm:$0xff]
          %v932 = vld [vmem:[#allocation2 + $0x10] sm:$0xff]
          %v933 = vld [vmem:[#allocation2 + $0x18] sm:$0xff]
          %v934 = vld [vmem:[#allocation2 + $0x20] sm:$0xff]
          %v935 = vld [vmem:[#allocation2 + $0x28] sm:$0xff]
          %v936 = vld [vmem:[#allocation2 + $0x30] sm:$0xff]
          %v937 = vld [vmem:[#allocation2 + $0x38] sm:$0xff]
          %v938 = vld [vmem:[#allocation2 + $0x40] sm:$0xff]
          %v939 = vld [vmem:[#allocation2 + $0x48] sm:$0xff]
          %v940 = vld [vmem:[#allocation2 + $0x50] sm:$0xff]
          %v941 = vld [vmem:[#allocation2 + $0x58] sm:$0xff]
          %v942 = vld [vmem:[#allocation2 + $0x60] sm:$0xff]
          %v943 = vld [vmem:[#allocation2 + $0x68] sm:$0xff]
          %v944 = vld [vmem:[#allocation2 + $0x70] sm:$0xff]
          %v945 = vld [vmem:[#allocation2 + $0x78] sm:$0xff]
          %v946 = vld [vmem:[#allocation2 + $0x80] sm:$0xff]
          %v947 = vld [vmem:[#allocation2 + $0x88] sm:$0xff]
          %v948 = vld [vmem:[#allocation2 + $0x90] sm:$0xff]
          %v949 = vld [vmem:[#allocation2 + $0x98] sm:$0xff]
          %v950 = vld [vmem:[#allocation2 + $0xa0] sm:$0xff]
          %v951 = vld [vmem:[#allocation2 + $0xa8] sm:$0xff]
          %v952 = vld [vmem:[#allocation2 + $0xb0] sm:$0xff]
          %v953 = vld [vmem:[#allocation2 + $0xb8] sm:$0xff]
          %v954 = vld [vmem:[#allocation2 + $0xc0] sm:$0xff]
          %v955 = vld [vmem:[#allocation2 + $0xc8] sm:$0xff]
          %v956 = vld [vmem:[#allocation2 + $0xd0] sm:$0xff]
          %v957 = vld [vmem:[#allocation2 + $0xd8] sm:$0xff]
          %v958 = vld [vmem:[#allocation2 + $0xe0] sm:$0xff]
          %v959 = vld [vmem:[#allocation2 + $0xe8] sm:$0xff]
          %v960 = vld [vmem:[#allocation2 + $0xf0] sm:$0xff]
          %v961 = vld [vmem:[#allocation2 + $0xf8] sm:$0xff]
          %v962 = vld [vmem:[%s304] sm:$0xff]
          %v963 = vld [vmem:[%s304 + $0x8] sm:$0xff]
          %v964 = vld [vmem:[%s304 + $0x10] sm:$0xff]
          %v965 = vld [vmem:[%s304 + $0x18] sm:$0xff]
          %v966 = vld [vmem:[%s304 + $0x20] sm:$0xff]
          %v967 = vld [vmem:[%s304 + $0x28] sm:$0xff]
          %v968 = vld [vmem:[%s304 + $0x30] sm:$0xff]
          %v969 = vld [vmem:[%s304 + $0x38] sm:$0xff]
          %v970 = vld [vmem:[%s304 + $0x40] sm:$0xff]
          %v971 = vld [vmem:[%s304 + $0x48] sm:$0xff]
          %v972 = vld [vmem:[%s304 + $0x50] sm:$0xff]
          %v973 = vld [vmem:[%s304 + $0x58] sm:$0xff]
          %v974 = vld [vmem:[%s304 + $0x60] sm:$0xff]
          %v975 = vld [vmem:[%s304 + $0x68] sm:$0xff]
          %v976 = vld [vmem:[%s304 + $0x70] sm:$0xff]
          %v977 = vld [vmem:[%s304 + $0x78] sm:$0xff]
          %v978 = vld [vmem:[%s304 + $0x80] sm:$0xff]
          %v979 = vld [vmem:[%s304 + $0x88] sm:$0xff]
          %v980 = vld [vmem:[%s304 + $0x90] sm:$0xff]
          %v981 = vld [vmem:[%s304 + $0x98] sm:$0xff]
          %v982 = vld [vmem:[%s304 + $0xa0] sm:$0xff]
          %v983 = vld [vmem:[%s304 + $0xa8] sm:$0xff]
          %v984 = vld [vmem:[%s304 + $0xb0] sm:$0xff]
          %v985 = vld [vmem:[%s304 + $0xb8] sm:$0xff]
          %v986 = vld [vmem:[%s304 + $0xc0] sm:$0xff]
          %v987 = vld [vmem:[%s304 + $0xc8] sm:$0xff]
          %v988 = vld [vmem:[%s304 + $0xd0] sm:$0xff]
          %v989 = vld [vmem:[%s304 + $0xd8] sm:$0xff]
          %v990 = vld [vmem:[%s304 + $0xe0] sm:$0xff]
          %v991 = vld [vmem:[%s304 + $0xe8] sm:$0xff]
          %v992 = vld [vmem:[%s304 + $0xf0] sm:$0xff]
          %v993 = vld [vmem:[%s304 + $0xf8] sm:$0xff]
          %995 = vset.pattern.permute.xlu0 0
          %996 = vperm.xlu0 %995, %v962
          %v997 = vpop.permute.xlu0 %996
          %1000 = vset.pattern.permute.xlu0 0
          %1001 = vperm.xlu0 %1000, %v963
          %v1002 = vpop.permute.xlu0 %1001
          %1005 = vset.pattern.permute.xlu0 0
          %1006 = vperm.xlu0 %1005, %v964
          %v1007 = vpop.permute.xlu0 %1006
          %1010 = vset.pattern.permute.xlu0 0
          %1011 = vperm.xlu0 %1010, %v965
          %v1012 = vpop.permute.xlu0 %1011
          %1015 = vset.pattern.permute.xlu0 0
          %1016 = vperm.xlu0 %1015, %v966
          %v1017 = vpop.permute.xlu0 %1016
          %1020 = vset.pattern.permute.xlu0 0
          %1021 = vperm.xlu0 %1020, %v967
          %v1022 = vpop.permute.xlu0 %1021
          %1025 = vset.pattern.permute.xlu0 0
          %1026 = vperm.xlu0 %1025, %v968
          %v1027 = vpop.permute.xlu0 %1026
          %1030 = vset.pattern.permute.xlu0 0
          %1031 = vperm.xlu0 %1030, %v969
          %v1032 = vpop.permute.xlu0 %1031
          %1035 = vset.pattern.permute.xlu0 0
          %1036 = vperm.xlu0 %1035, %v970
          %v1037 = vpop.permute.xlu0 %1036
          %1040 = vset.pattern.permute.xlu0 0
          %1041 = vperm.xlu0 %1040, %v971
          %v1042 = vpop.permute.xlu0 %1041
          %1045 = vset.pattern.permute.xlu0 0
          %1046 = vperm.xlu0 %1045, %v972
          %v1047 = vpop.permute.xlu0 %1046
          %1050 = vset.pattern.permute.xlu0 0
          %1051 = vperm.xlu0 %1050, %v973
          %v1052 = vpop.permute.xlu0 %1051
          %1055 = vset.pattern.permute.xlu0 0
          %1056 = vperm.xlu0 %1055, %v974
          %v1057 = vpop.permute.xlu0 %1056
          %1060 = vset.pattern.permute.xlu0 0
          %1061 = vperm.xlu0 %1060, %v975
          %v1062 = vpop.permute.xlu0 %1061
          %1065 = vset.pattern.permute.xlu0 0
          %1066 = vperm.xlu0 %1065, %v976
          %v1067 = vpop.permute.xlu0 %1066
          %1070 = vset.pattern.permute.xlu0 0
          %1071 = vperm.xlu0 %1070, %v977
          %v1072 = vpop.permute.xlu0 %1071
          %1075 = vset.pattern.permute.xlu0 0
          %1076 = vperm.xlu0 %1075, %v978
          %v1077 = vpop.permute.xlu0 %1076
          %1080 = vset.pattern.permute.xlu0 0
          %1081 = vperm.xlu0 %1080, %v979
          %v1082 = vpop.permute.xlu0 %1081
          %1085 = vset.pattern.permute.xlu0 0
          %1086 = vperm.xlu0 %1085, %v980
          %v1087 = vpop.permute.xlu0 %1086
          %1090 = vset.pattern.permute.xlu0 0
          %1091 = vperm.xlu0 %1090, %v981
          %v1092 = vpop.permute.xlu0 %1091
          %1095 = vset.pattern.permute.xlu0 0
          %1096 = vperm.xlu0 %1095, %v982
          %v1097 = vpop.permute.xlu0 %1096
          %1100 = vset.pattern.permute.xlu0 0
          %1101 = vperm.xlu0 %1100, %v983
          %v1102 = vpop.permute.xlu0 %1101
          %1105 = vset.pattern.permute.xlu0 0
          %1106 = vperm.xlu0 %1105, %v984
          %v1107 = vpop.permute.xlu0 %1106
          %1110 = vset.pattern.permute.xlu0 0
          %1111 = vperm.xlu0 %1110, %v985
          %v1112 = vpop.permute.xlu0 %1111
          %1115 = vset.pattern.permute.xlu0 0
          %1116 = vperm.xlu0 %1115, %v986
          %v1117 = vpop.permute.xlu0 %1116
          %1120 = vset.pattern.permute.xlu0 0
          %1121 = vperm.xlu0 %1120, %v987
          %v1122 = vpop.permute.xlu0 %1121
          %1125 = vset.pattern.permute.xlu0 0
          %1126 = vperm.xlu0 %1125, %v988
          %v1127 = vpop.permute.xlu0 %1126
          %1130 = vset.pattern.permute.xlu0 0
          %1131 = vperm.xlu0 %1130, %v989
          %v1132 = vpop.permute.xlu0 %1131
          %1135 = vset.pattern.permute.xlu0 0
          %1136 = vperm.xlu0 %1135, %v990
          %v1137 = vpop.permute.xlu0 %1136
          %1140 = vset.pattern.permute.xlu0 0
          %1141 = vperm.xlu0 %1140, %v991
          %v1142 = vpop.permute.xlu0 %1141
          %1145 = vset.pattern.permute.xlu0 0
          %1146 = vperm.xlu0 %1145, %v992
          %v1147 = vpop.permute.xlu0 %1146
          %1150 = vset.pattern.permute.xlu0 0
          %1151 = vperm.xlu0 %1150, %v993
          %v1152 = vpop.permute.xlu0 %1151
          %v1154 = vmul.f32 %v930, %v997
          %v1155 = vmul.f32 %v931, %v1002
          %v1156 = vmul.f32 %v932, %v1007
          %v1157 = vmul.f32 %v933, %v1012
          %v1158 = vmul.f32 %v934, %v1017
          %v1159 = vmul.f32 %v935, %v1022
          %v1160 = vmul.f32 %v936, %v1027
          %v1161 = vmul.f32 %v937, %v1032
          %v1162 = vmul.f32 %v938, %v1037
          %v1163 = vmul.f32 %v939, %v1042
          %v1164 = vmul.f32 %v940, %v1047
          %v1165 = vmul.f32 %v941, %v1052
          %v1166 = vmul.f32 %v942, %v1057
          %v1167 = vmul.f32 %v943, %v1062
          %v1168 = vmul.f32 %v944, %v1067
          %v1169 = vmul.f32 %v945, %v1072
          %v1170 = vmul.f32 %v946, %v1077
          %v1171 = vmul.f32 %v947, %v1082
          %v1172 = vmul.f32 %v948, %v1087
          %v1173 = vmul.f32 %v949, %v1092
          %v1174 = vmul.f32 %v950, %v1097
          %v1175 = vmul.f32 %v951, %v1102
          %v1176 = vmul.f32 %v952, %v1107
          %v1177 = vmul.f32 %v953, %v1112
          %v1178 = vmul.f32 %v954, %v1117
          %v1179 = vmul.f32 %v955, %v1122
          %v1180 = vmul.f32 %v956, %v1127
          %v1181 = vmul.f32 %v957, %v1132
          %v1182 = vmul.f32 %v958, %v1137
          %v1183 = vmul.f32 %v959, %v1142
          %v1184 = vmul.f32 %v960, %v1147
          %v1185 = vmul.f32 %v961, %v1152
          %v1186 = vld [vmem:[%s3] sm:$0x1]
          %v1188 = vperm.slane %v1186, 0
          %v1190 = vadd.f32 %v1154, %v1188
          %v1191 = vadd.f32 %v1155, %v1188
          %v1192 = vadd.f32 %v1156, %v1188
          %v1193 = vadd.f32 %v1157, %v1188
          %v1194 = vadd.f32 %v1158, %v1188
          %v1195 = vadd.f32 %v1159, %v1188
          %v1196 = vadd.f32 %v1160, %v1188
          %v1197 = vadd.f32 %v1161, %v1188
          %v1198 = vadd.f32 %v1162, %v1188
          %v1199 = vadd.f32 %v1163, %v1188
          %v1200 = vadd.f32 %v1164, %v1188
          %v1201 = vadd.f32 %v1165, %v1188
          %v1202 = vadd.f32 %v1166, %v1188
          %v1203 = vadd.f32 %v1167, %v1188
          %v1204 = vadd.f32 %v1168, %v1188
          %v1205 = vadd.f32 %v1169, %v1188
          %v1206 = vadd.f32 %v1170, %v1188
          %v1207 = vadd.f32 %v1171, %v1188
          %v1208 = vadd.f32 %v1172, %v1188
          %v1209 = vadd.f32 %v1173, %v1188
          %v1210 = vadd.f32 %v1174, %v1188
          %v1211 = vadd.f32 %v1175, %v1188
          %v1212 = vadd.f32 %v1176, %v1188
          %v1213 = vadd.f32 %v1177, %v1188
          %v1214 = vadd.f32 %v1178, %v1188
          %v1215 = vadd.f32 %v1179, %v1188
          %v1216 = vadd.f32 %v1180, %v1188
          %v1217 = vadd.f32 %v1181, %v1188
          %v1218 = vadd.f32 %v1182, %v1188
          %v1219 = vadd.f32 %v1183, %v1188
          %v1220 = vadd.f32 %v1184, %v1188
          %v1221 = vadd.f32 %v1185, %v1188
          %v1222 = vmax.f32 %v1190, 0.0
          %v1223 = vmax.f32 %v1191, 0.0
          %v1224 = vmax.f32 %v1192, 0.0
          %v1225 = vmax.f32 %v1193, 0.0
          %v1226 = vmax.f32 %v1194, 0.0
          %v1227 = vmax.f32 %v1195, 0.0
          %v1228 = vmax.f32 %v1196, 0.0
          %v1229 = vmax.f32 %v1197, 0.0
          %v1230 = vmax.f32 %v1198, 0.0
          %v1231 = vmax.f32 %v1199, 0.0
          %v1232 = vmax.f32 %v1200, 0.0
          %v1233 = vmax.f32 %v1201, 0.0
          %v1234 = vmax.f32 %v1202, 0.0
          %v1235 = vmax.f32 %v1203, 0.0
          %v1236 = vmax.f32 %v1204, 0.0
          %v1237 = vmax.f32 %v1205, 0.0
          %v1238 = vmax.f32 %v1206, 0.0
          %v1239 = vmax.f32 %v1207, 0.0
          %v1240 = vmax.f32 %v1208, 0.0
          %v1241 = vmax.f32 %v1209, 0.0
          %v1242 = vmax.f32 %v1210, 0.0
          %v1243 = vmax.f32 %v1211, 0.0
          %v1244 = vmax.f32 %v1212, 0.0
          %v1245 = vmax.f32 %v1213, 0.0
          %v1246 = vmax.f32 %v1214, 0.0
          %v1247 = vmax.f32 %v1215, 0.0
          %v1248 = vmax.f32 %v1216, 0.0
          %v1249 = vmax.f32 %v1217, 0.0
          %v1250 = vmax.f32 %v1218, 0.0
          %v1251 = vmax.f32 %v1219, 0.0
          %v1252 = vmax.f32 %v1220, 0.0
          %v1253 = vmax.f32 %v1221, 0.0
          %v1254 = vpack.c.bf16 %v1222, %v1222
          %v1255 = vpack.c.bf16 %v1223, %v1223
          %v1256 = vpack.c.bf16 %v1224, %v1224
          %v1257 = vpack.c.bf16 %v1225, %v1225
          %v1258 = vpack.c.bf16 %v1226, %v1226
          %v1259 = vpack.c.bf16 %v1227, %v1227
          %v1260 = vpack.c.bf16 %v1228, %v1228
          %v1261 = vpack.c.bf16 %v1229, %v1229
          %v1262 = vpack.c.bf16 %v1230, %v1230
          %v1263 = vpack.c.bf16 %v1231, %v1231
          %v1264 = vpack.c.bf16 %v1232, %v1232
          %v1265 = vpack.c.bf16 %v1233, %v1233
          %v1266 = vpack.c.bf16 %v1234, %v1234
          %v1267 = vpack.c.bf16 %v1235, %v1235
          %v1268 = vpack.c.bf16 %v1236, %v1236
          %v1269 = vpack.c.bf16 %v1237, %v1237
          %v1270 = vpack.c.bf16 %v1238, %v1238
          %v1271 = vpack.c.bf16 %v1239, %v1239
          %v1272 = vpack.c.bf16 %v1240, %v1240
          %v1273 = vpack.c.bf16 %v1241, %v1241
          %v1274 = vpack.c.bf16 %v1242, %v1242
          %v1275 = vpack.c.bf16 %v1243, %v1243
          %v1276 = vpack.c.bf16 %v1244, %v1244
          %v1277 = vpack.c.bf16 %v1245, %v1245
          %v1278 = vpack.c.bf16 %v1246, %v1246
          %v1279 = vpack.c.bf16 %v1247, %v1247
          %v1280 = vpack.c.bf16 %v1248, %v1248
          %v1281 = vpack.c.bf16 %v1249, %v1249
          %v1282 = vpack.c.bf16 %v1250, %v1250
          %v1283 = vpack.c.bf16 %v1251, %v1251
          %v1284 = vpack.c.bf16 %v1252, %v1252
          %v1285 = vpack.c.bf16 %v1253, %v1253
          %1286 = vst [vmem:[%s310] sm:$0xf] %v1254
          %1287 = vst [vmem:[%s310 + $0x4] sm:$0xf] %v1255
          %1288 = vst [vmem:[%s310 + $0x8] sm:$0xf] %v1256
          %1289 = vst [vmem:[%s310 + $0xc] sm:$0xf] %v1257
          %1290 = vst [vmem:[%s310 + $0x10] sm:$0xf] %v1258
          %1291 = vst [vmem:[%s310 + $0x14] sm:$0xf] %v1259
          %1292 = vst [vmem:[%s310 + $0x18] sm:$0xf] %v1260
          %1293 = vst [vmem:[%s310 + $0x1c] sm:$0xf] %v1261
          %1294 = vst [vmem:[%s310 + $0x20] sm:$0xf] %v1262
          %1295 = vst [vmem:[%s310 + $0x24] sm:$0xf] %v1263
          %1296 = vst [vmem:[%s310 + $0x28] sm:$0xf] %v1264
          %1297 = vst [vmem:[%s310 + $0x2c] sm:$0xf] %v1265
          %1298 = vst [vmem:[%s310 + $0x30] sm:$0xf] %v1266
          %1299 = vst [vmem:[%s310 + $0x34] sm:$0xf] %v1267
          %1300 = vst [vmem:[%s310 + $0x38] sm:$0xf] %v1268
          %1301 = vst [vmem:[%s310 + $0x3c] sm:$0xf] %v1269
          %1302 = vst [vmem:[%s310 + $0x40] sm:$0xf] %v1270
          %1303 = vst [vmem:[%s310 + $0x44] sm:$0xf] %v1271
          %1304 = vst [vmem:[%s310 + $0x48] sm:$0xf] %v1272
          %1305 = vst [vmem:[%s310 + $0x4c] sm:$0xf] %v1273
          %1306 = vst [vmem:[%s310 + $0x50] sm:$0xf] %v1274
          %1307 = vst [vmem:[%s310 + $0x54] sm:$0xf] %v1275
          %1308 = vst [vmem:[%s310 + $0x58] sm:$0xf] %v1276
          %1309 = vst [vmem:[%s310 + $0x5c] sm:$0xf] %v1277
          %1310 = vst [vmem:[%s310 + $0x60] sm:$0xf] %v1278
          %1311 = vst [vmem:[%s310 + $0x64] sm:$0xf] %v1279
          %1312 = vst [vmem:[%s310 + $0x68] sm:$0xf] %v1280
          %1313 = vst [vmem:[%s310 + $0x6c] sm:$0xf] %v1281
          %1314 = vst [vmem:[%s310 + $0x70] sm:$0xf] %v1282
          %1315 = vst [vmem:[%s310 + $0x74] sm:$0xf] %v1283
          %1316 = vst [vmem:[%s310 + $0x78] sm:$0xf] %v1284
          %1317 = vst [vmem:[%s310 + $0x7c] sm:$0xf] %v1285
        $region67: #{_lambda_.5} parent=54 // pred_fallthru
          _
        %s1318 = smul.u32 32, %s19
        %p1319 = scmp.lt.s32.totalorder %s1318, 63
        %s1320 = scalar_select %p1319, %s1318, 63
        %s1321 = smul.addr %s1320, 4
        %s1322 = scalar_lea.vmem %s4, %s1321
        // Predicated region
        $region68: #{_lambda_.5} parent=54 // pred_check
          %p1323 = pneg %p146
        $region69: #{_lambda_.5} parent=54 // pred_check_branch
          %1325 = sbr.rel (%p1323) target = $region71
        $region70: #{_lambda_.5} parent=54 // pred_region
          %s1326 = smul.u32 32, %s19
        $region71: #{_lambda_.5} parent=54 // pred_fallthru
          _
      $region55: #{_lambda_.5} parent=5 // pred_fallthru
        _
      %p1327 = scmp.le.s32.totalorder 2, %s10
      // Predicated region
      $region72: #{_lambda_.5} parent=5 // pred_check
        %p1328 = pneg %p1327
      $region73: #{_lambda_.5} parent=5 // pred_check_branch
        %1330 = sbr.rel (%p1328) target = $region75
      $region74: #{_lambda_.5} parent=5 // pred_region
        %s1331 = ssub.s32 %s10, 2
        // Predicated region
        $region76: #{_lambda_.5} parent=74 // pred_check
          %p1332 = pneg %p152
        $region77: #{_lambda_.5} parent=74 // pred_check_branch
          %1334 = sbr.rel (%p1332) target = $region79
        $region78: #{_lambda_.5} parent=74 // pred_region
          %s1335 = smul.u32 32, %s21
          %p1336 = scmp.lt.s32.totalorder %s1335, 63
          %s1337 = scalar_select %p1336, %s1335, 63
          %s1338 = smul.addr %s1337, 4
          %s1339 = scalar_lea.vmem %s4, %s1338
        $region79: #{_lambda_.5} parent=74 // pred_fallthru
          _
      $region75: #{_lambda_.5} parent=5 // pred_fallthru
        _
    $region6: #{_lambda_.5} parent=1 // loop_footer
      %s14 = sadd.s32 1, %s10
    $region7: #{_lambda_.5} parent=1 // loop_footer_branch
      %9 = sbr.rel target = $region3
    $region8: #{_lambda_.5} parent=1 // loop_exit
      _

</llo_original>
